<compile_context>
chip_gen: v7x
topology: tpu7x:2x2x1
jax: 0.10.0
libtpu: 0.0.40
codegen_flags: <defaults>
</compile_context>

<pallas_src>
import functools
import math

import jax
import jax.numpy as jnp
from jax.experimental import pallas as pl
from jax.experimental.pallas import tpu as pltpu

_VMEM_LIMIT = 32 * 1024 * 1024  # safe scoped-VMEM ceiling on v5e/v6e/v7x


def _round_up(x, m):
    return (x + m - 1) // m * m


# --------------------------------------------------------------------------- #
# TDNN layer: unfold-free context matmul (+ optional fused log/InstanceNorm)
# --------------------------------------------------------------------------- #

def _tdnn_kernel(x_ref, w_ref, b_ref, shift_ref, o_ref, *,
                 context, dilation, L, preproc):
    x = x_ref[0]                                      # (T, C) f32, channels-last
    if preproc:
        # torch.no_grad() frontend: log(mel + 1e-6) then InstanceNorm1d over time
        x = jnp.log(x + 1e-6)
        mean = jnp.mean(x, axis=0, keepdims=True)
        var = jnp.mean(jnp.square(x - mean), axis=0, keepdims=True)  # biased var
        x = (x - mean) * jax.lax.rsqrt(var + 1e-5)

    # out[l, n] = sum_k sum_c x[l + k*dilation, c] * w[k, c, n]
    # bf16 operands -> native MXU; f32 accumulation via preferred_element_type.
    xb = x.astype(jnp.bfloat16)
    acc = jnp.dot(xb[0:L], w_ref[0], preferred_element_type=jnp.float32)
    for k in range(1, context):
        acc = acc + jnp.dot(xb[k * dilation:k * dilation + L], w_ref[k],
                            preferred_element_type=jnp.float32)
    # Linear -> ReLU -> (dropout: eval identity) -> eval BN (scale folded into w,b)
    o_ref[0] = jnp.maximum(acc + b_ref[...], 0.0) + shift_ref[...]


def tdnn_layer(x, w3, b, shift, *, dilation, preproc=False):
    """x: (B, T, C) f32; w3: (context, C, N) bf16 (BN scale folded); b/shift: (N,) f32."""
    B, T, C = x.shape
    context, Cw, N = w3.shape
    assert Cw == C
    L = T - (context - 1) * dilation
    return pl.pallas_call(
        functools.partial(_tdnn_kernel, context=context, dilation=dilation,
                          L=L, preproc=preproc),
        out_shape=jax.ShapeDtypeStruct((B, L, N), jnp.float32),
        grid=(B,),
        in_specs=[
            pl.BlockSpec((1, T, C), lambda b_: (b_, 0, 0)),
            pl.BlockSpec((context, C, N), lambda b_: (0, 0, 0)),
            pl.BlockSpec((1, N), lambda b_: (0, 0)),
            pl.BlockSpec((1, N), lambda b_: (0, 0)),
        ],
        out_specs=pl.BlockSpec((1, L, N), lambda b_: (b_, 0, 0)),
        compiler_params=pltpu.CompilerParams(
            dimension_semantics=("parallel",),
            vmem_limit_bytes=_VMEM_LIMIT),
    )(x, w3, b.reshape(1, N), shift.reshape(1, N))


# --------------------------------------------------------------------------- #
# Fused dense1 -> ReLU -> dense2 -> ReLU (row-tiled, weights VMEM resident)
# --------------------------------------------------------------------------- #

def _dense12_kernel(x_ref, w1_ref, b1_ref, w2_ref, b2_ref, o_ref):
    h = jnp.dot(x_ref[...].astype(jnp.bfloat16), w1_ref[...],
                preferred_element_type=jnp.float32)
    h = jnp.maximum(h + b1_ref[...], 0.0)
    y = jnp.dot(h.astype(jnp.bfloat16), w2_ref[...],
                preferred_element_type=jnp.float32)
    o_ref[...] = jnp.maximum(y + b2_ref[...], 0.0)


def dense12(x, w1, b1, w2, b2, *, tm_max=512):
    """x: (M, K) f32; w1: (K, N1) bf16; w2: (N1, N2) bf16 -> (M, N2) f32."""
    M, K = x.shape
    N1 = w1.shape[-1]
    N2 = w2.shape[-1]
    # Ragged M: no host-side pad/slice; cdiv grid + masked boundary writes.
    tm = tm_max if M > tm_max else M
    return pl.pallas_call(
        _dense12_kernel,
        out_shape=jax.ShapeDtypeStruct((M, N2), jnp.float32),
        grid=(pl.cdiv(M, tm),),
        in_specs=[
            pl.BlockSpec((tm, K), lambda i: (i, 0)),
            pl.BlockSpec((K, N1), lambda i: (0, 0)),
            pl.BlockSpec((1, N1), lambda i: (0, 0)),
            pl.BlockSpec((N1, N2), lambda i: (0, 0)),
            pl.BlockSpec((1, N2), lambda i: (0, 0)),
        ],
        out_specs=pl.BlockSpec((tm, N2), lambda i: (i, 0)),
        compiler_params=pltpu.CompilerParams(
            dimension_semantics=("parallel",),
            vmem_limit_bytes=_VMEM_LIMIT),
    )(x, w1, b1.reshape(1, N1), w2, b2.reshape(1, N2))


# --------------------------------------------------------------------------- #
# Fused attention head + SAP pooling (softmax over time, weighted sum)
# --------------------------------------------------------------------------- #

def _attn_pool_kernel(x_ref, w1_ref, b1_ref, s1_ref, w2_ref, b2_ref, o_ref):
    x = x_ref[0]                                                    # (L, D) f32
    xb = x.astype(jnp.bfloat16)
    # Conv1d(k=1) -> ReLU -> BN (scale folded into w1/b1, shift added after ReLU)
    h = jnp.dot(xb, w1_ref[...], preferred_element_type=jnp.float32) + b1_ref[...]
    h = jnp.maximum(h, 0.0) + s1_ref[...]                           # (L, H)
    a = jnp.dot(h.astype(jnp.bfloat16), w2_ref[...],
                preferred_element_type=jnp.float32) + b2_ref[...]   # (L, D)
    # softmax over the time axis (torch Softmax(dim=2) on (B, D, T)); exact divide
    m = jnp.max(a, axis=0, keepdims=True)
    e = jnp.exp(a - m)
    wgt = e / jnp.sum(e, axis=0, keepdims=True)
    o_ref[0] = jnp.sum(x * wgt, axis=0, keepdims=True)              # (1, D)


def attn_sap_pool(x, w1, b1, s1, w2, b2):
    """x: (B, L, D) f32; returns SAP-pooled embedding (B, D) f32."""
    B, L, D = x.shape
    H = w1.shape[-1]
    out = pl.pallas_call(
        _attn_pool_kernel,
        out_shape=jax.ShapeDtypeStruct((B, 1, D), jnp.float32),
        grid=(B,),
        in_specs=[
            pl.BlockSpec((1, L, D), lambda b_: (b_, 0, 0)),
            pl.BlockSpec((D, H), lambda b_: (0, 0)),
            pl.BlockSpec((1, H), lambda b_: (0, 0)),
            pl.BlockSpec((1, H), lambda b_: (0, 0)),
            pl.BlockSpec((H, D), lambda b_: (0, 0)),
            pl.BlockSpec((1, D), lambda b_: (0, 0)),
        ],
        out_specs=pl.BlockSpec((1, 1, D), lambda b_: (b_, 0, 0)),
        compiler_params=pltpu.CompilerParams(
            dimension_semantics=("parallel",),
            vmem_limit_bytes=_VMEM_LIMIT),
    )(x, w1, b1.reshape(1, H), s1.reshape(1, H), w2, b2.reshape(1, D))
    return out.reshape(B, D)


# --------------------------------------------------------------------------- #
# Fused tail: dense3 -> ReLU -> dense4 -> ReLU -> output  (M = B rows only)
# --------------------------------------------------------------------------- #

def _tail_kernel(x_ref, w3_ref, b3_ref, w4_ref, b4_ref, wo_ref, bo_ref, o_ref):
    h = jnp.dot(x_ref[...].astype(jnp.bfloat16), w3_ref[...],
                preferred_element_type=jnp.float32)
    h = jnp.maximum(h + b3_ref[...], 0.0)
    h = jnp.dot(h.astype(jnp.bfloat16), w4_ref[...],
                preferred_element_type=jnp.float32)
    h = jnp.maximum(h + b4_ref[...], 0.0)
    o_ref[...] = jnp.dot(h.astype(jnp.bfloat16), wo_ref[...],
                         preferred_element_type=jnp.float32) + bo_ref[...]


def dense_tail(x, w3, b3, w4, b4, wo, bo):
    """x: (B, D) f32 -> logits (B, nOut) f32; all three weights VMEM resident."""
    B, D = x.shape
    H1 = w3.shape[-1]
    H2 = w4.shape[-1]
    N = wo.shape[-1]
    return pl.pallas_call(
        _tail_kernel,
        out_shape=jax.ShapeDtypeStruct((B, N), jnp.float32),
        grid=(1,),
        in_specs=[
            pl.BlockSpec((B, D), lambda i: (0, 0)),
            pl.BlockSpec((D, H1), lambda i: (0, 0)),
            pl.BlockSpec((1, H1), lambda i: (0, 0)),
            pl.BlockSpec((H1, H2), lambda i: (0, 0)),
            pl.BlockSpec((1, H2), lambda i: (0, 0)),
            pl.BlockSpec((H2, N), lambda i: (0, 0)),
            pl.BlockSpec((1, N), lambda i: (0, 0)),
        ],
        out_specs=pl.BlockSpec((B, N), lambda i: (0, 0)),
        compiler_params=pltpu.CompilerParams(
            dimension_semantics=("arbitrary",),
            vmem_limit_bytes=_VMEM_LIMIT),
    )(x, w3, b3.reshape(1, H1), w4, b4.reshape(1, H2), wo, bo.reshape(1, N))


# --------------------------------------------------------------------------- #
# Parameter preparation: per-layer BN folding, lane padding, bf16 weights.
# Done ONCE; the forward pass only consumes pre-folded tensors.
# --------------------------------------------------------------------------- #

def _bn_fold(bn, eps=1e-5):
    scale = bn["gamma"] / jnp.sqrt(bn["var"] + eps)   # > 0, commutes with ReLU
    shift = bn["beta"] - scale * bn["mean"]
    return scale, shift


def prepare_params(p, *, n_mels):
    stdim = p["tdnn1_w"].shape[-1]
    out_dim = p["dense2_w"].shape[-1]
    Dp = _round_up(out_dim, 128)       # lane-align statsdim (e.g. 1500 -> 1536)
    Cp = _round_up(n_mels, 128)        # lane-align mel channels (40 -> 128)

    s1, sh1 = _bn_fold(p["tdnn1_bn"])
    s2, sh2 = _bn_fold(p["tdnn2_bn"])
    s3, sh3 = _bn_fold(p["tdnn3_bn"])
    sa, sha = _bn_fold(p["attn_bn"])

    q = {}
    # tdnn1: (5*n_mels, stdim) -> (5, Cp, stdim) with zero-padded channel rows (exact).
    w1 = (p["tdnn1_w"] * s1).reshape(5, n_mels, stdim)
    w1 = jnp.pad(w1, ((0, 0), (0, Cp - n_mels), (0, 0)))
    q["tdnn1_w"] = w1.astype(jnp.bfloat16)
    q["tdnn1_b"], q["tdnn1_shift"] = p["tdnn1_b"] * s1, sh1
    q["tdnn2_w"] = (p["tdnn2_w"] * s2).reshape(5, stdim, stdim).astype(jnp.bfloat16)
    q["tdnn2_b"], q["tdnn2_shift"] = p["tdnn2_b"] * s2, sh2
    q["tdnn3_w"] = (p["tdnn3_w"] * s3).reshape(7, stdim, stdim).astype(jnp.bfloat16)
    q["tdnn3_b"], q["tdnn3_shift"] = p["tdnn3_b"] * s3, sh3

    q["dense1_w"] = p["dense1_w"].astype(jnp.bfloat16)
    q["dense1_b"] = p["dense1_b"]
    # dense2: pad output columns to Dp (zero weight cols + zero bias -> ReLU -> exact 0).
    q["dense2_w"] = jnp.pad(p["dense2_w"], ((0, 0), (0, Dp - out_dim))).astype(jnp.bfloat16)
    q["dense2_b"] = jnp.pad(p["dense2_b"], (0, Dp - out_dim))

    # attention: BN scale folded into attn1; pad attn1 input rows / attn2 output cols.
    q["attn1_w"] = jnp.pad(p["attn1_w"] * sa, ((0, Dp - out_dim), (0, 0))).astype(jnp.bfloat16)
    q["attn1_b"], q["attn1_shift"] = p["attn1_b"] * sa, sha
    q["attn2_w"] = jnp.pad(p["attn2_w"], ((0, 0), (0, Dp - out_dim))).astype(jnp.bfloat16)
    q["attn2_b"] = jnp.pad(p["attn2_b"], (0, Dp - out_dim))

    # dense3 consumes the padded pooled vector: pad its input rows with zeros (exact).
    q["dense3_w"] = jnp.pad(p["dense3_w"], ((0, Dp - out_dim), (0, 0))).astype(jnp.bfloat16)
    q["dense3_b"] = p["dense3_b"]
    q["dense4_w"] = p["dense4_w"].astype(jnp.bfloat16)
    q["dense4_b"] = p["dense4_b"]
    q["out_w"] = p["out_w"].astype(jnp.bfloat16)
    q["out_b"] = p["out_b"]
    return q


# --------------------------------------------------------------------------- #
# Forward pass
# --------------------------------------------------------------------------- #

def x_vector_forward(q, x_mel):
    B, n_mels, T = x_mel.shape
    Cp = q["tdnn1_w"].shape[1]
    # Channels-last; zero-pad mel channels to the lane-aligned width (exact,
    # because the corresponding tdnn1 weight rows are zero).
    x = jnp.transpose(x_mel, (0, 2, 1))                             # (B, T, n_mels)
    if Cp != n_mels:
        x = jnp.pad(x, ((0, 0), (0, 0), (0, Cp - n_mels)))

    # log + InstanceNorm1d frontend fused into the tdnn1 kernel (preproc=True).
    x = tdnn_layer(x, q["tdnn1_w"], q["tdnn1_b"], q["tdnn1_shift"],
                   dilation=1, preproc=True)
    x = tdnn_layer(x, q["tdnn2_w"], q["tdnn2_b"], q["tdnn2_shift"], dilation=1)
    x = tdnn_layer(x, q["tdnn3_w"], q["tdnn3_b"], q["tdnn3_shift"], dilation=2)

    B, L, C = x.shape
    xf = dense12(x.reshape(B * L, C),
                 q["dense1_w"], q["dense1_b"],
                 q["dense2_w"], q["dense2_b"])                      # (B*L, Dp)
    Dp = xf.shape[-1]

    pooled = attn_sap_pool(xf.reshape(B, L, Dp),
                           q["attn1_w"], q["attn1_b"], q["attn1_shift"],
                           q["attn2_w"], q["attn2_b"])              # (B, Dp)

    return dense_tail(pooled,
                      q["dense3_w"], q["dense3_b"],
                      q["dense4_w"], q["dense4_b"],
                      q["out_w"], q["out_b"])                       # (B, nOut)


# --------------------------------------------------------------------------- #
# Parameter init (PyTorch-style Linear init + default eval-mode BN stats)
# --------------------------------------------------------------------------- #

def init_params(key, n_mels, stdim, statsdim, attn_hidden, n_out):
    out_dim = statsdim  # encoder_type == 'SAP'

    def lin(k, fan_in, fan_out):
        kw, kb = jax.random.split(k)
        s = 1.0 / math.sqrt(fan_in)
        w = jax.random.uniform(kw, (fan_in, fan_out), jnp.float32, -s, s)
        b = jax.random.uniform(kb, (fan_out,), jnp.float32, -s, s)
        return w, b

    def bn(dim):  # eval-mode BatchNorm1d with default running stats
        return dict(gamma=jnp.ones((dim,), jnp.float32),
                    beta=jnp.zeros((dim,), jnp.float32),
                    mean=jnp.zeros((dim,), jnp.float32),
                    var=jnp.ones((dim,), jnp.float32))

    keys = jax.random.split(key, 10)
    p = {}
    p["tdnn1_w"], p["tdnn1_b"] = lin(keys[0], n_mels * 5, stdim)
    p["tdnn2_w"], p["tdnn2_b"] = lin(keys[1], stdim * 5, stdim)
    p["tdnn3_w"], p["tdnn3_b"] = lin(keys[2], stdim * 7, stdim)
    p["dense1_w"], p["dense1_b"] = lin(keys[3], stdim, stdim)
    p["dense2_w"], p["dense2_b"] = lin(keys[4], stdim, out_dim)
    p["attn1_w"], p["attn1_b"] = lin(keys[5], out_dim, attn_hidden)
    p["attn2_w"], p["attn2_b"] = lin(keys[6], attn_hidden, out_dim)
    p["dense3_w"], p["dense3_b"] = lin(keys[7], out_dim, stdim)
    p["dense4_w"], p["dense4_b"] = lin(keys[8], stdim, stdim)
    p["out_w"], p["out_b"] = lin(keys[9], stdim, n_out)
    p["tdnn1_bn"] = bn(stdim)
    p["tdnn2_bn"] = bn(stdim)
    p["tdnn3_bn"] = bn(stdim)
    p["attn_bn"] = bn(attn_hidden)
    return p


if __name__ == "__main__":
    # Small shapes consistent with the module structure (scaled-down hidden dims).
    B, T = 2, 32
    n_mels = 40
    stdim, statsdim, attn_hidden = 64, 96, 32   # module defaults: 512, 1500, 128
    n_out = 10

    key = jax.random.PRNGKey(0)
    kx, kp = jax.random.split(key)
    # Input = mel-spectrogram power (strictly positive), as produced by self.torchfb.
    x_mel = jax.random.uniform(kx, (B, n_mels, T), jnp.float32, minval=1e-3, maxval=1.0)

    raw_params = init_params(kp, n_mels, stdim, statsdim, attn_hidden, n_out)
    params = prepare_params(raw_params, n_mels=n_mels)   # fold/pad/cast ONCE

    fwd = jax.jit(x_vector_forward)
    preds = jax.block_until_ready(fwd(params, x_mel))
    assert preds.shape == (B, n_out), preds.shape
    assert bool(jnp.all(jnp.isfinite(preds)))
    print("KERNEL_OK")
</pallas_src>

<mosaic_0001>
module attributes {stable_mosaic.version = 11 : i64} {
  func.func @_tdnn_kernel(%arg0: i32, %arg1: memref<1x28x64xf32, #tpu.memory_space<vmem>>, %arg2: memref<5x64x64xbf16, #tpu.memory_space<vmem>>, %arg3: memref<1x64xf32, #tpu.memory_space<vmem>>, %arg4: memref<1x64xf32, #tpu.memory_space<vmem>>, %arg5: memref<1x24x64xf32, #tpu.memory_space<vmem>>) attributes {dimension_semantics = [#tpu.dimension_semantics<parallel>], iteration_bounds = array<i64: 2>, scalar_prefetch = 0 : i64, scratch_operands = 0 : i64, tpu.core_type = #tpu.core_type<tc>, window_params = [{transform_indices = @transform_0, window_bounds = array<i64: 1, 28, 64>}, {pipeline_mode = #tpu.pipeline_mode<synchronous>, transform_indices = @transform_1, window_bounds = array<i64: 5, 64, 64>}, {pipeline_mode = #tpu.pipeline_mode<synchronous>, transform_indices = @transform_2, window_bounds = array<i64: 1, 64>}, {pipeline_mode = #tpu.pipeline_mode<synchronous>, transform_indices = @transform_3, window_bounds = array<i64: 1, 64>}, {transform_indices = @transform_4, window_bounds = array<i64: 1, 24, 64>}]} {
    %c0 = arith.constant 0 : index
    %c0_0 = arith.constant 0 : index
    %c0_1 = arith.constant 0 : index
    %0 = vector.load %arg1[%c0, %c0_0, %c0_1] : memref<1x28x64xf32, #tpu.memory_space<vmem>>, vector<1x28x64xf32>
    %1 = vector.shape_cast %0 : vector<1x28x64xf32> to vector<28x64xf32>
    %2 = arith.truncf %1 : vector<28x64xf32> to vector<28x64xbf16>
    %3 = vector.extract_strided_slice %2 {offsets = [0, 0], sizes = [24, 64], strides = [1, 1]} : vector<28x64xbf16> to vector<24x64xbf16>
    %c0_2 = arith.constant 0 : index
    %c0_3 = arith.constant 0 : index
    %c0_4 = arith.constant 0 : index
    %4 = vector.load %arg2[%c0_2, %c0_3, %c0_4] : memref<5x64x64xbf16, #tpu.memory_space<vmem>>, vector<1x64x64xbf16>
    %5 = vector.shape_cast %4 : vector<1x64x64xbf16> to vector<64x64xbf16>
    %cst = arith.constant dense<0.000000e+00> : vector<24x64xf32>
    %6 = tpu.matmul %3, %5, %cst {dimension_numbers = #tpu.dot_dimension_numbers<[1], [0], [0], [1], [0, 0, 1, 1], [], []>} : vector<24x64xbf16>, vector<64x64xbf16>, vector<24x64xf32> -> vector<24x64xf32>
    %7 = vector.extract_strided_slice %2 {offsets = [1, 0], sizes = [24, 64], strides = [1, 1]} : vector<28x64xbf16> to vector<24x64xbf16>
    %c1 = arith.constant 1 : index
    %c0_5 = arith.constant 0 : index
    %c0_6 = arith.constant 0 : index
    %8 = vector.load %arg2[%c1, %c0_5, %c0_6] : memref<5x64x64xbf16, #tpu.memory_space<vmem>>, vector<1x64x64xbf16>
    %9 = vector.shape_cast %8 : vector<1x64x64xbf16> to vector<64x64xbf16>
    %cst_7 = arith.constant dense<0.000000e+00> : vector<24x64xf32>
    %10 = tpu.matmul %7, %9, %cst_7 {dimension_numbers = #tpu.dot_dimension_numbers<[1], [0], [0], [1], [0, 0, 1, 1], [], []>} : vector<24x64xbf16>, vector<64x64xbf16>, vector<24x64xf32> -> vector<24x64xf32>
    %11 = arith.addf %6, %10 : vector<24x64xf32>
    %12 = vector.extract_strided_slice %2 {offsets = [2, 0], sizes = [24, 64], strides = [1, 1]} : vector<28x64xbf16> to vector<24x64xbf16>
    %c2 = arith.constant 2 : index
    %c0_8 = arith.constant 0 : index
    %c0_9 = arith.constant 0 : index
    %13 = vector.load %arg2[%c2, %c0_8, %c0_9] : memref<5x64x64xbf16, #tpu.memory_space<vmem>>, vector<1x64x64xbf16>
    %14 = vector.shape_cast %13 : vector<1x64x64xbf16> to vector<64x64xbf16>
    %cst_10 = arith.constant dense<0.000000e+00> : vector<24x64xf32>
    %15 = tpu.matmul %12, %14, %cst_10 {dimension_numbers = #tpu.dot_dimension_numbers<[1], [0], [0], [1], [0, 0, 1, 1], [], []>} : vector<24x64xbf16>, vector<64x64xbf16>, vector<24x64xf32> -> vector<24x64xf32>
    %16 = arith.addf %11, %15 : vector<24x64xf32>
    %17 = vector.extract_strided_slice %2 {offsets = [3, 0], sizes = [24, 64], strides = [1, 1]} : vector<28x64xbf16> to vector<24x64xbf16>
    %c3 = arith.constant 3 : index
    %c0_11 = arith.constant 0 : index
    %c0_12 = arith.constant 0 : index
    %18 = vector.load %arg2[%c3, %c0_11, %c0_12] : memref<5x64x64xbf16, #tpu.memory_space<vmem>>, vector<1x64x64xbf16>
    %19 = vector.shape_cast %18 : vector<1x64x64xbf16> to vector<64x64xbf16>
    %cst_13 = arith.constant dense<0.000000e+00> : vector<24x64xf32>
    %20 = tpu.matmul %17, %19, %cst_13 {dimension_numbers = #tpu.dot_dimension_numbers<[1], [0], [0], [1], [0, 0, 1, 1], [], []>} : vector<24x64xbf16>, vector<64x64xbf16>, vector<24x64xf32> -> vector<24x64xf32>
    %21 = arith.addf %16, %20 : vector<24x64xf32>
    %22 = vector.extract_strided_slice %2 {offsets = [4, 0], sizes = [24, 64], strides = [1, 1]} : vector<28x64xbf16> to vector<24x64xbf16>
    %c4 = arith.constant 4 : index
    %c0_14 = arith.constant 0 : index
    %c0_15 = arith.constant 0 : index
    %23 = vector.load %arg2[%c4, %c0_14, %c0_15] : memref<5x64x64xbf16, #tpu.memory_space<vmem>>, vector<1x64x64xbf16>
    %24 = vector.shape_cast %23 : vector<1x64x64xbf16> to vector<64x64xbf16>
    %cst_16 = arith.constant dense<0.000000e+00> : vector<24x64xf32>
    %25 = tpu.matmul %22, %24, %cst_16 {dimension_numbers = #tpu.dot_dimension_numbers<[1], [0], [0], [1], [0, 0, 1, 1], [], []>} : vector<24x64xbf16>, vector<64x64xbf16>, vector<24x64xf32> -> vector<24x64xf32>
    %26 = arith.addf %21, %25 : vector<24x64xf32>
    %c0_17 = arith.constant 0 : index
    %c0_18 = arith.constant 0 : index
    %27 = vector.load %arg3[%c0_17, %c0_18] : memref<1x64xf32, #tpu.memory_space<vmem>>, vector<1x64xf32>
    %28 = vector.broadcast %27 : vector<1x64xf32> to vector<24x64xf32>
    %29 = arith.addf %26, %28 : vector<24x64xf32>
    %cst_19 = arith.constant 0.000000e+00 : f32
    %30 = vector.broadcast %cst_19 : f32 to vector<24x64xf32>
    %31 = arith.maximumf %29, %30 : vector<24x64xf32>
    %c0_20 = arith.constant 0 : index
    %c0_21 = arith.constant 0 : index
    %32 = vector.load %arg4[%c0_20, %c0_21] : memref<1x64xf32, #tpu.memory_space<vmem>>, vector<1x64xf32>
    %33 = vector.broadcast %32 : vector<1x64xf32> to vector<24x64xf32>
    %34 = arith.addf %31, %33 : vector<24x64xf32>
    %c0_22 = arith.constant 0 : index
    %c0_23 = arith.constant 0 : index
    %c0_24 = arith.constant 0 : index
    %35 = vector.load %arg5[%c0_22, %c0_23, %c0_24] : memref<1x24x64xf32, #tpu.memory_space<vmem>>, vector<1x24x64xf32>
    %36 = vector.shape_cast %35 : vector<1x24x64xf32> to vector<24x64xf32>
    %37 = vector.shape_cast %34 : vector<24x64xf32> to vector<1x24x64xf32>
    tpu.vector_store %arg5[%c0_22, %c0_23, %c0_24], %37 {strides = array<i32>} : memref<1x24x64xf32, #tpu.memory_space<vmem>>, vector<1x24x64xf32>,
    return
  }
  func.func @transform_0(%arg0: i32) -> (i32, i32, i32) {
    %c0_i32 = arith.constant 0 : i32
    %c0_i32_0 = arith.constant 0 : i32
    %c0_i32_1 = arith.constant 0 : i32
    return %arg0, %c0_i32, %c0_i32_0 : i32, i32, i32
  }
  func.func @transform_1(%arg0: i32) -> (i32, i32, i32) {
    %c0_i32 = arith.constant 0 : i32
    %c0_i32_0 = arith.constant 0 : i32
    %c0_i32_1 = arith.constant 0 : i32
    %c0_i32_2 = arith.constant 0 : i32
    return %c0_i32, %c0_i32_0, %c0_i32_1 : i32, i32, i32
  }
  func.func @transform_2(%arg0: i32) -> (i32, i32) {
    %c0_i32 = arith.constant 0 : i32
    %c0_i32_0 = arith.constant 0 : i32
    %c0_i32_1 = arith.constant 0 : i32
    return %c0_i32, %c0_i32_0 : i32, i32
  }
  func.func @transform_3(%arg0: i32) -> (i32, i32) {
    %c0_i32 = arith.constant 0 : i32
    %c0_i32_0 = arith.constant 0 : i32
    %c0_i32_1 = arith.constant 0 : i32
    return %c0_i32, %c0_i32_0 : i32, i32
  }
  func.func @transform_4(%arg0: i32) -> (i32, i32, i32) {
    %c0_i32 = arith.constant 0 : i32
    %c0_i32_0 = arith.constant 0 : i32
    %c0_i32_1 = arith.constant 0 : i32
    return %arg0, %c0_i32, %c0_i32_0 : i32, i32, i32
  }
}

module attributes {stable_mosaic.version = 11 : i64} {
  func.func @_tdnn_kernel(%arg0: i32, %arg1: memref<1x32x128xf32, #tpu.memory_space<vmem>>, %arg2: memref<5x128x64xbf16, #tpu.memory_space<vmem>>, %arg3: memref<1x64xf32, #tpu.memory_space<vmem>>, %arg4: memref<1x64xf32, #tpu.memory_space<vmem>>, %arg5: memref<1x28x64xf32, #tpu.memory_space<vmem>>) attributes {dimension_semantics = [#tpu.dimension_semantics<parallel>], iteration_bounds = array<i64: 2>, scalar_prefetch = 0 : i64, scratch_operands = 0 : i64, tpu.core_type = #tpu.core_type<tc>, window_params = [{transform_indices = @transform_0, window_bounds = array<i64: 1, 32, 128>}, {pipeline_mode = #tpu.pipeline_mode<synchronous>, transform_indices = @transform_1, window_bounds = array<i64: 5, 128, 64>}, {pipeline_mode = #tpu.pipeline_mode<synchronous>, transform_indices = @transform_2, window_bounds = array<i64: 1, 64>}, {pipeline_mode = #tpu.pipeline_mode<synchronous>, transform_indices = @transform_3, window_bounds = array<i64: 1, 64>}, {transform_indices = @transform_4, window_bounds = array<i64: 1, 28, 64>}]} {
    %c0 = arith.constant 0 : index
    %c0_0 = arith.constant 0 : index
    %c0_1 = arith.constant 0 : index
    %0 = vector.load %arg1[%c0, %c0_0, %c0_1] : memref<1x32x128xf32, #tpu.memory_space<vmem>>, vector<1x32x128xf32>
    %1 = vector.shape_cast %0 : vector<1x32x128xf32> to vector<32x128xf32>
    %cst = arith.constant 9.99999997E-7 : f32
    %2 = vector.broadcast %cst : f32 to vector<32x128xf32>
    %3 = arith.addf %1, %2 : vector<32x128xf32>
    %4 = math.log %3 : vector<32x128xf32>
    %cst_2 = arith.constant dense<0.000000e+00> : vector<128xf32>
    %5 = vector.multi_reduction <add>, %4, %cst_2 [0] : vector<32x128xf32> to vector<128xf32>
    %6 = vector.shape_cast %5 : vector<128xf32> to vector<1x128xf32>
    %cst_3 = arith.constant 3.200000e+01 : f32
    %7 = vector.broadcast %cst_3 : f32 to vector<1x128xf32>
    %8 = arith.divf %6, %7 : vector<1x128xf32>
    %9 = vector.broadcast %8 : vector<1x128xf32> to vector<32x128xf32>
    %10 = arith.subf %4, %9 : vector<32x128xf32>
    %11 = arith.mulf %10, %10 : vector<32x128xf32>
    %cst_4 = arith.constant dense<0.000000e+00> : vector<128xf32>
    %12 = vector.multi_reduction <add>, %11, %cst_4 [0] : vector<32x128xf32> to vector<128xf32>
    %13 = vector.shape_cast %12 : vector<128xf32> to vector<1x128xf32>
    %cst_5 = arith.constant 3.200000e+01 : f32
    %14 = vector.broadcast %cst_5 : f32 to vector<1x128xf32>
    %15 = arith.divf %13, %14 : vector<1x128xf32>
    %16 = vector.broadcast %8 : vector<1x128xf32> to vector<32x128xf32>
    %17 = arith.subf %4, %16 : vector<32x128xf32>
    %cst_6 = arith.constant 9.99999974E-6 : f32
    %18 = vector.broadcast %cst_6 : f32 to vector<1x128xf32>
    %19 = arith.addf %15, %18 : vector<1x128xf32>
    %20 = math.rsqrt %19 : vector<1x128xf32>
    %21 = vector.broadcast %20 : vector<1x128xf32> to vector<32x128xf32>
    %22 = arith.mulf %17, %21 : vector<32x128xf32>
    %23 = arith.truncf %22 : vector<32x128xf32> to vector<32x128xbf16>
    %24 = vector.extract_strided_slice %23 {offsets = [0, 0], sizes = [28, 128], strides = [1, 1]} : vector<32x128xbf16> to vector<28x128xbf16>
    %c0_7 = arith.constant 0 : index
    %c0_8 = arith.constant 0 : index
    %c0_9 = arith.constant 0 : index
    %25 = vector.load %arg2[%c0_7, %c0_8, %c0_9] : memref<5x128x64xbf16, #tpu.memory_space<vmem>>, vector<1x128x64xbf16>
    %26 = vector.shape_cast %25 : vector<1x128x64xbf16> to vector<128x64xbf16>
    %cst_10 = arith.constant dense<0.000000e+00> : vector<28x64xf32>
    %27 = tpu.matmul %24, %26, %cst_10 {dimension_numbers = #tpu.dot_dimension_numbers<[1], [0], [0], [1], [0, 0, 1, 1], [], []>} : vector<28x128xbf16>, vector<128x64xbf16>, vector<28x64xf32> -> vector<28x64xf32>
    %28 = vector.extract_strided_slice %23 {offsets = [1, 0], sizes = [28, 128], strides = [1, 1]} : vector<32x128xbf16> to vector<28x128xbf16>
    %c1 = arith.constant 1 : index
    %c0_11 = arith.constant 0 : index
    %c0_12 = arith.constant 0 : index
    %29 = vector.load %arg2[%c1, %c0_11, %c0_12] : memref<5x128x64xbf16, #tpu.memory_space<vmem>>, vector<1x128x64xbf16>
    %30 = vector.shape_cast %29 : vector<1x128x64xbf16> to vector<128x64xbf16>
    %cst_13 = arith.constant dense<0.000000e+00> : vector<28x64xf32>
    %31 = tpu.matmul %28, %30, %cst_13 {dimension_numbers = #tpu.dot_dimension_numbers<[1], [0], [0], [1], [0, 0, 1, 1], [], []>} : vector<28x128xbf16>, vector<128x64xbf16>, vector<28x64xf32> -> vector<28x64xf32>
    %32 = arith.addf %27, %31 : vector<28x64xf32>
    %33 = vector.extract_strided_slice %23 {offsets = [2, 0], sizes = [28, 128], strides = [1, 1]} : vector<32x128xbf16> to vector<28x128xbf16>
    %c2 = arith.constant 2 : index
    %c0_14 = arith.constant 0 : index
    %c0_15 = arith.constant 0 : index
    %34 = vector.load %arg2[%c2, %c0_14, %c0_15] : memref<5x128x64xbf16, #tpu.memory_space<vmem>>, vector<1x128x64xbf16>
    %35 = vector.shape_cast %34 : vector<1x128x64xbf16> to vector<128x64xbf16>
    %cst_16 = arith.constant dense<0.000000e+00> : vector<28x64xf32>
    %36 = tpu.matmul %33, %35, %cst_16 {dimension_numbers = #tpu.dot_dimension_numbers<[1], [0], [0], [1], [0, 0, 1, 1], [], []>} : vector<28x128xbf16>, vector<128x64xbf16>, vector<28x64xf32> -> vector<28x64xf32>
    %37 = arith.addf %32, %36 : vector<28x64xf32>
    %38 = vector.extract_strided_slice %23 {offsets = [3, 0], sizes = [28, 128], strides = [1, 1]} : vector<32x128xbf16> to vector<28x128xbf16>
    %c3 = arith.constant 3 : index
    %c0_17 = arith.constant 0 : index
    %c0_18 = arith.constant 0 : index
    %39 = vector.load %arg2[%c3, %c0_17, %c0_18] : memref<5x128x64xbf16, #tpu.memory_space<vmem>>, vector<1x128x64xbf16>
    %40 = vector.shape_cast %39 : vector<1x128x64xbf16> to vector<128x64xbf16>
    %cst_19 = arith.constant dense<0.000000e+00> : vector<28x64xf32>
    %41 = tpu.matmul %38, %40, %cst_19 {dimension_numbers = #tpu.dot_dimension_numbers<[1], [0], [0], [1], [0, 0, 1, 1], [], []>} : vector<28x128xbf16>, vector<128x64xbf16>, vector<28x64xf32> -> vector<28x64xf32>
    %42 = arith.addf %37, %41 : vector<28x64xf32>
    %43 = vector.extract_strided_slice %23 {offsets = [4, 0], sizes = [28, 128], strides = [1, 1]} : vector<32x128xbf16> to vector<28x128xbf16>
    %c4 = arith.constant 4 : index
    %c0_20 = arith.constant 0 : index
    %c0_21 = arith.constant 0 : index
    %44 = vector.load %arg2[%c4, %c0_20, %c0_21] : memref<5x128x64xbf16, #tpu.memory_space<vmem>>, vector<1x128x64xbf16>
    %45 = vector.shape_cast %44 : vector<1x128x64xbf16> to vector<128x64xbf16>
    %cst_22 = arith.constant dense<0.000000e+00> : vector<28x64xf32>
    %46 = tpu.matmul %43, %45, %cst_22 {dimension_numbers = #tpu.dot_dimension_numbers<[1], [0], [0], [1], [0, 0, 1, 1], [], []>} : vector<28x128xbf16>, vector<128x64xbf16>, vector<28x64xf32> -> vector<28x64xf32>
    %47 = arith.addf %42, %46 : vector<28x64xf32>
    %c0_23 = arith.constant 0 : index
    %c0_24 = arith.constant 0 : index
    %48 = vector.load %arg3[%c0_23, %c0_24] : memref<1x64xf32, #tpu.memory_space<vmem>>, vector<1x64xf32>
    %49 = vector.broadcast %48 : vector<1x64xf32> to vector<28x64xf32>
    %50 = arith.addf %47, %49 : vector<28x64xf32>
    %cst_25 = arith.constant 0.000000e+00 : f32
    %51 = vector.broadcast %cst_25 : f32 to vector<28x64xf32>
    %52 = arith.maximumf %50, %51 : vector<28x64xf32>
    %c0_26 = arith.constant 0 : index
    %c0_27 = arith.constant 0 : index
    %53 = vector.load %arg4[%c0_26, %c0_27] : memref<1x64xf32, #tpu.memory_space<vmem>>, vector<1x64xf32>
    %54 = vector.broadcast %53 : vector<1x64xf32> to vector<28x64xf32>
    %55 = arith.addf %52, %54 : vector<28x64xf32>
    %c0_28 = arith.constant 0 : index
    %c0_29 = arith.constant 0 : index
    %c0_30 = arith.constant 0 : index
    %56 = vector.load %arg5[%c0_28, %c0_29, %c0_30] : memref<1x28x64xf32, #tpu.memory_space<vmem>>, vector<1x28x64xf32>
    %57 = vector.shape_cast %56 : vector<1x28x64xf32> to vector<28x64xf32>
    %58 = vector.shape_cast %55 : vector<28x64xf32> to vector<1x28x64xf32>
    tpu.vector_store %arg5[%c0_28, %c0_29, %c0_30], %58 {strides = array<i32>} : memref<1x28x64xf32, #tpu.memory_space<vmem>>, vector<1x28x64xf32>,
    return
  }
  func.func @transform_0(%arg0: i32) -> (i32, i32, i32) {
    %c0_i32 = arith.constant 0 : i32
    %c0_i32_0 = arith.constant 0 : i32
    %c0_i32_1 = arith.constant 0 : i32
    return %arg0, %c0_i32, %c0_i32_0 : i32, i32, i32
  }
  func.func @transform_1(%arg0: i32) -> (i32, i32, i32) {
    %c0_i32 = arith.constant 0 : i32
    %c0_i32_0 = arith.constant 0 : i32
    %c0_i32_1 = arith.constant 0 : i32
    %c0_i32_2 = arith.constant 0 : i32
    return %c0_i32, %c0_i32_0, %c0_i32_1 : i32, i32, i32
  }
  func.func @transform_2(%arg0: i32) -> (i32, i32) {
    %c0_i32 = arith.constant 0 : i32
    %c0_i32_0 = arith.constant 0 : i32
    %c0_i32_1 = arith.constant 0 : i32
    return %c0_i32, %c0_i32_0 : i32, i32
  }
  func.func @transform_3(%arg0: i32) -> (i32, i32) {
    %c0_i32 = arith.constant 0 : i32
    %c0_i32_0 = arith.constant 0 : i32
    %c0_i32_1 = arith.constant 0 : i32
    return %c0_i32, %c0_i32_0 : i32, i32
  }
  func.func @transform_4(%arg0: i32) -> (i32, i32, i32) {
    %c0_i32 = arith.constant 0 : i32
    %c0_i32_0 = arith.constant 0 : i32
    %c0_i32_1 = arith.constant 0 : i32
    return %arg0, %c0_i32, %c0_i32_0 : i32, i32, i32
  }
}

module attributes {stable_mosaic.version = 11 : i64} {
  func.func @_tdnn_kernel(%arg0: i32, %arg1: memref<1x24x64xf32, #tpu.memory_space<vmem>>, %arg2: memref<7x64x64xbf16, #tpu.memory_space<vmem>>, %arg3: memref<1x64xf32, #tpu.memory_space<vmem>>, %arg4: memref<1x64xf32, #tpu.memory_space<vmem>>, %arg5: memref<1x12x64xf32, #tpu.memory_space<vmem>>) attributes {dimension_semantics = [#tpu.dimension_semantics<parallel>], iteration_bounds = array<i64: 2>, scalar_prefetch = 0 : i64, scratch_operands = 0 : i64, tpu.core_type = #tpu.core_type<tc>, window_params = [{transform_indices = @transform_0, window_bounds = array<i64: 1, 24, 64>}, {pipeline_mode = #tpu.pipeline_mode<synchronous>, transform_indices = @transform_1, window_bounds = array<i64: 7, 64, 64>}, {pipeline_mode = #tpu.pipeline_mode<synchronous>, transform_indices = @transform_2, window_bounds = array<i64: 1, 64>}, {pipeline_mode = #tpu.pipeline_mode<synchronous>, transform_indices = @transform_3, window_bounds = array<i64: 1, 64>}, {transform_indices = @transform_4, window_bounds = array<i64: 1, 12, 64>}]} {
    %c0 = arith.constant 0 : index
    %c0_0 = arith.constant 0 : index
    %c0_1 = arith.constant 0 : index
    %0 = vector.load %arg1[%c0, %c0_0, %c0_1] : memref<1x24x64xf32, #tpu.memory_space<vmem>>, vector<1x24x64xf32>
    %1 = vector.shape_cast %0 : vector<1x24x64xf32> to vector<24x64xf32>
    %2 = arith.truncf %1 : vector<24x64xf32> to vector<24x64xbf16>
    %3 = vector.extract_strided_slice %2 {offsets = [0, 0], sizes = [12, 64], strides = [1, 1]} : vector<24x64xbf16> to vector<12x64xbf16>
    %c0_2 = arith.constant 0 : index
    %c0_3 = arith.constant 0 : index
    %c0_4 = arith.constant 0 : index
    %4 = vector.load %arg2[%c0_2, %c0_3, %c0_4] : memref<7x64x64xbf16, #tpu.memory_space<vmem>>, vector<1x64x64xbf16>
    %5 = vector.shape_cast %4 : vector<1x64x64xbf16> to vector<64x64xbf16>
    %cst = arith.constant dense<0.000000e+00> : vector<12x64xf32>
    %6 = tpu.matmul %3, %5, %cst {dimension_numbers = #tpu.dot_dimension_numbers<[1], [0], [0], [1], [0, 0, 1, 1], [], []>} : vector<12x64xbf16>, vector<64x64xbf16>, vector<12x64xf32> -> vector<12x64xf32>
    %7 = vector.extract_strided_slice %2 {offsets = [2, 0], sizes = [12, 64], strides = [1, 1]} : vector<24x64xbf16> to vector<12x64xbf16>
    %c1 = arith.constant 1 : index
    %c0_5 = arith.constant 0 : index
    %c0_6 = arith.constant 0 : index
    %8 = vector.load %arg2[%c1, %c0_5, %c0_6] : memref<7x64x64xbf16, #tpu.memory_space<vmem>>, vector<1x64x64xbf16>
    %9 = vector.shape_cast %8 : vector<1x64x64xbf16> to vector<64x64xbf16>
    %cst_7 = arith.constant dense<0.000000e+00> : vector<12x64xf32>
    %10 = tpu.matmul %7, %9, %cst_7 {dimension_numbers = #tpu.dot_dimension_numbers<[1], [0], [0], [1], [0, 0, 1, 1], [], []>} : vector<12x64xbf16>, vector<64x64xbf16>, vector<12x64xf32> -> vector<12x64xf32>
    %11 = arith.addf %6, %10 : vector<12x64xf32>
    %12 = vector.extract_strided_slice %2 {offsets = [4, 0], sizes = [12, 64], strides = [1, 1]} : vector<24x64xbf16> to vector<12x64xbf16>
    %c2 = arith.constant 2 : index
    %c0_8 = arith.constant 0 : index
    %c0_9 = arith.constant 0 : index
    %13 = vector.load %arg2[%c2, %c0_8, %c0_9] : memref<7x64x64xbf16, #tpu.memory_space<vmem>>, vector<1x64x64xbf16>
    %14 = vector.shape_cast %13 : vector<1x64x64xbf16> to vector<64x64xbf16>
    %cst_10 = arith.constant dense<0.000000e+00> : vector<12x64xf32>
    %15 = tpu.matmul %12, %14, %cst_10 {dimension_numbers = #tpu.dot_dimension_numbers<[1], [0], [0], [1], [0, 0, 1, 1], [], []>} : vector<12x64xbf16>, vector<64x64xbf16>, vector<12x64xf32> -> vector<12x64xf32>
    %16 = arith.addf %11, %15 : vector<12x64xf32>
    %17 = vector.extract_strided_slice %2 {offsets = [6, 0], sizes = [12, 64], strides = [1, 1]} : vector<24x64xbf16> to vector<12x64xbf16>
    %c3 = arith.constant 3 : index
    %c0_11 = arith.constant 0 : index
    %c0_12 = arith.constant 0 : index
    %18 = vector.load %arg2[%c3, %c0_11, %c0_12] : memref<7x64x64xbf16, #tpu.memory_space<vmem>>, vector<1x64x64xbf16>
    %19 = vector.shape_cast %18 : vector<1x64x64xbf16> to vector<64x64xbf16>
    %cst_13 = arith.constant dense<0.000000e+00> : vector<12x64xf32>
    %20 = tpu.matmul %17, %19, %cst_13 {dimension_numbers = #tpu.dot_dimension_numbers<[1], [0], [0], [1], [0, 0, 1, 1], [], []>} : vector<12x64xbf16>, vector<64x64xbf16>, vector<12x64xf32> -> vector<12x64xf32>
    %21 = arith.addf %16, %20 : vector<12x64xf32>
    %22 = vector.extract_strided_slice %2 {offsets = [8, 0], sizes = [12, 64], strides = [1, 1]} : vector<24x64xbf16> to vector<12x64xbf16>
    %c4 = arith.constant 4 : index
    %c0_14 = arith.constant 0 : index
    %c0_15 = arith.constant 0 : index
    %23 = vector.load %arg2[%c4, %c0_14, %c0_15] : memref<7x64x64xbf16, #tpu.memory_space<vmem>>, vector<1x64x64xbf16>
    %24 = vector.shape_cast %23 : vector<1x64x64xbf16> to vector<64x64xbf16>
    %cst_16 = arith.constant dense<0.000000e+00> : vector<12x64xf32>
    %25 = tpu.matmul %22, %24, %cst_16 {dimension_numbers = #tpu.dot_dimension_numbers<[1], [0], [0], [1], [0, 0, 1, 1], [], []>} : vector<12x64xbf16>, vector<64x64xbf16>, vector<12x64xf32> -> vector<12x64xf32>
    %26 = arith.addf %21, %25 : vector<12x64xf32>
    %27 = vector.extract_strided_slice %2 {offsets = [10, 0], sizes = [12, 64], strides = [1, 1]} : vector<24x64xbf16> to vector<12x64xbf16>
    %c5 = arith.constant 5 : index
    %c0_17 = arith.constant 0 : index
    %c0_18 = arith.constant 0 : index
    %28 = vector.load %arg2[%c5, %c0_17, %c0_18] : memref<7x64x64xbf16, #tpu.memory_space<vmem>>, vector<1x64x64xbf16>
    %29 = vector.shape_cast %28 : vector<1x64x64xbf16> to vector<64x64xbf16>
    %cst_19 = arith.constant dense<0.000000e+00> : vector<12x64xf32>
    %30 = tpu.matmul %27, %29, %cst_19 {dimension_numbers = #tpu.dot_dimension_numbers<[1], [0], [0], [1], [0, 0, 1, 1], [], []>} : vector<12x64xbf16>, vector<64x64xbf16>, vector<12x64xf32> -> vector<12x64xf32>
    %31 = arith.addf %26, %30 : vector<12x64xf32>
    %32 = vector.extract_strided_slice %2 {offsets = [12, 0], sizes = [12, 64], strides = [1, 1]} : vector<24x64xbf16> to vector<12x64xbf16>
    %c6 = arith.constant 6 : index
    %c0_20 = arith.constant 0 : index
    %c0_21 = arith.constant 0 : index
    %33 = vector.load %arg2[%c6, %c0_20, %c0_21] : memref<7x64x64xbf16, #tpu.memory_space<vmem>>, vector<1x64x64xbf16>
    %34 = vector.shape_cast %33 : vector<1x64x64xbf16> to vector<64x64xbf16>
    %cst_22 = arith.constant dense<0.000000e+00> : vector<12x64xf32>
    %35 = tpu.matmul %32, %34, %cst_22 {dimension_numbers = #tpu.dot_dimension_numbers<[1], [0], [0], [1], [0, 0, 1, 1], [], []>} : vector<12x64xbf16>, vector<64x64xbf16>, vector<12x64xf32> -> vector<12x64xf32>
    %36 = arith.addf %31, %35 : vector<12x64xf32>
    %c0_23 = arith.constant 0 : index
    %c0_24 = arith.constant 0 : index
    %37 = vector.load %arg3[%c0_23, %c0_24] : memref<1x64xf32, #tpu.memory_space<vmem>>, vector<1x64xf32>
    %38 = vector.broadcast %37 : vector<1x64xf32> to vector<12x64xf32>
    %39 = arith.addf %36, %38 : vector<12x64xf32>
    %cst_25 = arith.constant 0.000000e+00 : f32
    %40 = vector.broadcast %cst_25 : f32 to vector<12x64xf32>
    %41 = arith.maximumf %39, %40 : vector<12x64xf32>
    %c0_26 = arith.constant 0 : index
    %c0_27 = arith.constant 0 : index
    %42 = vector.load %arg4[%c0_26, %c0_27] : memref<1x64xf32, #tpu.memory_space<vmem>>, vector<1x64xf32>
    %43 = vector.broadcast %42 : vector<1x64xf32> to vector<12x64xf32>
    %44 = arith.addf %41, %43 : vector<12x64xf32>
    %c0_28 = arith.constant 0 : index
    %c0_29 = arith.constant 0 : index
    %c0_30 = arith.constant 0 : index
    %45 = vector.load %arg5[%c0_28, %c0_29, %c0_30] : memref<1x12x64xf32, #tpu.memory_space<vmem>>, vector<1x12x64xf32>
    %46 = vector.shape_cast %45 : vector<1x12x64xf32> to vector<12x64xf32>
    %47 = vector.shape_cast %44 : vector<12x64xf32> to vector<1x12x64xf32>
    tpu.vector_store %arg5[%c0_28, %c0_29, %c0_30], %47 {strides = array<i32>} : memref<1x12x64xf32, #tpu.memory_space<vmem>>, vector<1x12x64xf32>,
    return
  }
  func.func @transform_0(%arg0: i32) -> (i32, i32, i32) {
    %c0_i32 = arith.constant 0 : i32
    %c0_i32_0 = arith.constant 0 : i32
    %c0_i32_1 = arith.constant 0 : i32
    return %arg0, %c0_i32, %c0_i32_0 : i32, i32, i32
  }
  func.func @transform_1(%arg0: i32) -> (i32, i32, i32) {
    %c0_i32 = arith.constant 0 : i32
    %c0_i32_0 = arith.constant 0 : i32
    %c0_i32_1 = arith.constant 0 : i32
    %c0_i32_2 = arith.constant 0 : i32
    return %c0_i32, %c0_i32_0, %c0_i32_1 : i32, i32, i32
  }
  func.func @transform_2(%arg0: i32) -> (i32, i32) {
    %c0_i32 = arith.constant 0 : i32
    %c0_i32_0 = arith.constant 0 : i32
    %c0_i32_1 = arith.constant 0 : i32
    return %c0_i32, %c0_i32_0 : i32, i32
  }
  func.func @transform_3(%arg0: i32) -> (i32, i32) {
    %c0_i32 = arith.constant 0 : i32
    %c0_i32_0 = arith.constant 0 : i32
    %c0_i32_1 = arith.constant 0 : i32
    return %c0_i32, %c0_i32_0 : i32, i32
  }
  func.func @transform_4(%arg0: i32) -> (i32, i32, i32) {
    %c0_i32 = arith.constant 0 : i32
    %c0_i32_0 = arith.constant 0 : i32
    %c0_i32_1 = arith.constant 0 : i32
    return %arg0, %c0_i32, %c0_i32_0 : i32, i32, i32
  }
}

module attributes {stable_mosaic.version = 11 : i64} {
  func.func @_dense12_kernel(%arg0: i32, %arg1: memref<24x64xf32, #tpu.memory_space<vmem>>, %arg2: memref<64x64xbf16, #tpu.memory_space<vmem>>, %arg3: memref<1x64xf32, #tpu.memory_space<vmem>>, %arg4: memref<64x128xbf16, #tpu.memory_space<vmem>>, %arg5: memref<1x128xf32, #tpu.memory_space<vmem>>, %arg6: memref<24x128xf32, #tpu.memory_space<vmem>>) attributes {dimension_semantics = [#tpu.dimension_semantics<parallel>], iteration_bounds = array<i64: 1>, scalar_prefetch = 0 : i64, scratch_operands = 0 : i64, tpu.core_type = #tpu.core_type<tc>, window_params = [{transform_indices = @transform_0, window_bounds = array<i64: 24, 64>}, {pipeline_mode = #tpu.pipeline_mode<synchronous>, transform_indices = @transform_1, window_bounds = array<i64: 64, 64>}, {pipeline_mode = #tpu.pipeline_mode<synchronous>, transform_indices = @transform_2, window_bounds = array<i64: 1, 64>}, {pipeline_mode = #tpu.pipeline_mode<synchronous>, transform_indices = @transform_3, window_bounds = array<i64: 64, 128>}, {pipeline_mode = #tpu.pipeline_mode<synchronous>, transform_indices = @transform_4, window_bounds = array<i64: 1, 128>}, {transform_indices = @transform_5, window_bounds = array<i64: 24, 128>}]} {
    %c0 = arith.constant 0 : index
    %c0_0 = arith.constant 0 : index
    %0 = vector.load %arg1[%c0, %c0_0] : memref<24x64xf32, #tpu.memory_space<vmem>>, vector<24x64xf32>
    %1 = arith.truncf %0 : vector<24x64xf32> to vector<24x64xbf16>
    %c0_1 = arith.constant 0 : index
    %c0_2 = arith.constant 0 : index
    %2 = vector.load %arg2[%c0_1, %c0_2] : memref<64x64xbf16, #tpu.memory_space<vmem>>, vector<64x64xbf16>
    %cst = arith.constant dense<0.000000e+00> : vector<24x64xf32>
    %3 = tpu.matmul %1, %2, %cst {dimension_numbers = #tpu.dot_dimension_numbers<[1], [0], [0], [1], [0, 0, 1, 1], [], []>} : vector<24x64xbf16>, vector<64x64xbf16>, vector<24x64xf32> -> vector<24x64xf32>
    %c0_3 = arith.constant 0 : index
    %c0_4 = arith.constant 0 : index
    %4 = vector.load %arg3[%c0_3, %c0_4] : memref<1x64xf32, #tpu.memory_space<vmem>>, vector<1x64xf32>
    %5 = vector.broadcast %4 : vector<1x64xf32> to vector<24x64xf32>
    %6 = arith.addf %3, %5 : vector<24x64xf32>
    %cst_5 = arith.constant 0.000000e+00 : f32
    %7 = vector.broadcast %cst_5 : f32 to vector<24x64xf32>
    %8 = arith.maximumf %6, %7 : vector<24x64xf32>
    %9 = arith.truncf %8 : vector<24x64xf32> to vector<24x64xbf16>
    %c0_6 = arith.constant 0 : index
    %c0_7 = arith.constant 0 : index
    %10 = vector.load %arg4[%c0_6, %c0_7] : memref<64x128xbf16, #tpu.memory_space<vmem>>, vector<64x128xbf16>
    %cst_8 = arith.constant dense<0.000000e+00> : vector<24x128xf32>
    %11 = tpu.matmul %9, %10, %cst_8 {dimension_numbers = #tpu.dot_dimension_numbers<[1], [0], [0], [1], [0, 0, 1, 1], [], []>} : vector<24x64xbf16>, vector<64x128xbf16>, vector<24x128xf32> -> vector<24x128xf32>
    %c0_9 = arith.constant 0 : index
    %c0_10 = arith.constant 0 : index
    %12 = vector.load %arg5[%c0_9, %c0_10] : memref<1x128xf32, #tpu.memory_space<vmem>>, vector<1x128xf32>
    %13 = vector.broadcast %12 : vector<1x128xf32> to vector<24x128xf32>
    %14 = arith.addf %11, %13 : vector<24x128xf32>
    %cst_11 = arith.constant 0.000000e+00 : f32
    %15 = vector.broadcast %cst_11 : f32 to vector<24x128xf32>
    %16 = arith.maximumf %14, %15 : vector<24x128xf32>
    %c0_12 = arith.constant 0 : index
    %c0_13 = arith.constant 0 : index
    %17 = vector.load %arg6[%c0_12, %c0_13] : memref<24x128xf32, #tpu.memory_space<vmem>>, vector<24x128xf32>
    tpu.vector_store %arg6[%c0_12, %c0_13], %16 {strides = array<i32>} : memref<24x128xf32, #tpu.memory_space<vmem>>, vector<24x128xf32>,
    return
  }
  func.func @transform_0(%arg0: i32) -> (i32, i32) {
    %c0_i32 = arith.constant 0 : i32
    %c0_i32_0 = arith.constant 0 : i32
    return %arg0, %c0_i32 : i32, i32
  }
  func.func @transform_1(%arg0: i32) -> (i32, i32) {
    %c0_i32 = arith.constant 0 : i32
    %c0_i32_0 = arith.constant 0 : i32
    %c0_i32_1 = arith.constant 0 : i32
    return %c0_i32, %c0_i32_0 : i32, i32
  }
  func.func @transform_2(%arg0: i32) -> (i32, i32) {
    %c0_i32 = arith.constant 0 : i32
    %c0_i32_0 = arith.constant 0 : i32
    %c0_i32_1 = arith.constant 0 : i32
    return %c0_i32, %c0_i32_0 : i32, i32
  }
  func.func @transform_3(%arg0: i32) -> (i32, i32) {
    %c0_i32 = arith.constant 0 : i32
    %c0_i32_0 = arith.constant 0 : i32
    %c0_i32_1 = arith.constant 0 : i32
    return %c0_i32, %c0_i32_0 : i32, i32
  }
  func.func @transform_4(%arg0: i32) -> (i32, i32) {
    %c0_i32 = arith.constant 0 : i32
    %c0_i32_0 = arith.constant 0 : i32
    %c0_i32_1 = arith.constant 0 : i32
    return %c0_i32, %c0_i32_0 : i32, i32
  }
  func.func @transform_5(%arg0: i32) -> (i32, i32) {
    %c0_i32 = arith.constant 0 : i32
    %c0_i32_0 = arith.constant 0 : i32
    return %arg0, %c0_i32 : i32, i32
  }
}

module attributes {stable_mosaic.version = 11 : i64} {
  func.func @_attn_pool_kernel(%arg0: i32, %arg1: memref<1x12x128xf32, #tpu.memory_space<vmem>>, %arg2: memref<128x32xbf16, #tpu.memory_space<vmem>>, %arg3: memref<1x32xf32, #tpu.memory_space<vmem>>, %arg4: memref<1x32xf32, #tpu.memory_space<vmem>>, %arg5: memref<32x128xbf16, #tpu.memory_space<vmem>>, %arg6: memref<1x128xf32, #tpu.memory_space<vmem>>, %arg7: memref<1x1x128xf32, #tpu.memory_space<vmem>>) attributes {dimension_semantics = [#tpu.dimension_semantics<parallel>], iteration_bounds = array<i64: 2>, scalar_prefetch = 0 : i64, scratch_operands = 0 : i64, tpu.core_type = #tpu.core_type<tc>, window_params = [{transform_indices = @transform_0, window_bounds = array<i64: 1, 12, 128>}, {pipeline_mode = #tpu.pipeline_mode<synchronous>, transform_indices = @transform_1, window_bounds = array<i64: 128, 32>}, {pipeline_mode = #tpu.pipeline_mode<synchronous>, transform_indices = @transform_2, window_bounds = array<i64: 1, 32>}, {pipeline_mode = #tpu.pipeline_mode<synchronous>, transform_indices = @transform_3, window_bounds = array<i64: 1, 32>}, {pipeline_mode = #tpu.pipeline_mode<synchronous>, transform_indices = @transform_4, window_bounds = array<i64: 32, 128>}, {pipeline_mode = #tpu.pipeline_mode<synchronous>, transform_indices = @transform_5, window_bounds = array<i64: 1, 128>}, {transform_indices = @transform_6, window_bounds = array<i64: 1, 1, 128>}]} {
    %c0 = arith.constant 0 : index
    %c0_0 = arith.constant 0 : index
    %c0_1 = arith.constant 0 : index
    %0 = vector.load %arg1[%c0, %c0_0, %c0_1] : memref<1x12x128xf32, #tpu.memory_space<vmem>>, vector<1x12x128xf32>
    %1 = vector.shape_cast %0 : vector<1x12x128xf32> to vector<12x128xf32>
    %2 = arith.truncf %1 : vector<12x128xf32> to vector<12x128xbf16>
    %c0_2 = arith.constant 0 : index
    %c0_3 = arith.constant 0 : index
    %3 = vector.load %arg2[%c0_2, %c0_3] : memref<128x32xbf16, #tpu.memory_space<vmem>>, vector<128x32xbf16>
    %cst = arith.constant dense<0.000000e+00> : vector<12x32xf32>
    %4 = tpu.matmul %2, %3, %cst {dimension_numbers = #tpu.dot_dimension_numbers<[1], [0], [0], [1], [0, 0, 1, 1], [], []>} : vector<12x128xbf16>, vector<128x32xbf16>, vector<12x32xf32> -> vector<12x32xf32>
    %c0_4 = arith.constant 0 : index
    %c0_5 = arith.constant 0 : index
    %5 = vector.load %arg3[%c0_4, %c0_5] : memref<1x32xf32, #tpu.memory_space<vmem>>, vector<1x32xf32>
    %6 = vector.broadcast %5 : vector<1x32xf32> to vector<12x32xf32>
    %7 = arith.addf %4, %6 : vector<12x32xf32>
    %cst_6 = arith.constant 0.000000e+00 : f32
    %8 = vector.broadcast %cst_6 : f32 to vector<12x32xf32>
    %9 = arith.maximumf %7, %8 : vector<12x32xf32>
    %c0_7 = arith.constant 0 : index
    %c0_8 = arith.constant 0 : index
    %10 = vector.load %arg4[%c0_7, %c0_8] : memref<1x32xf32, #tpu.memory_space<vmem>>, vector<1x32xf32>
    %11 = vector.broadcast %10 : vector<1x32xf32> to vector<12x32xf32>
    %12 = arith.addf %9, %11 : vector<12x32xf32>
    %13 = arith.truncf %12 : vector<12x32xf32> to vector<12x32xbf16>
    %c0_9 = arith.constant 0 : index
    %c0_10 = arith.constant 0 : index
    %14 = vector.load %arg5[%c0_9, %c0_10] : memref<32x128xbf16, #tpu.memory_space<vmem>>, vector<32x128xbf16>
    %cst_11 = arith.constant dense<0.000000e+00> : vector<12x128xf32>
    %15 = tpu.matmul %13, %14, %cst_11 {dimension_numbers = #tpu.dot_dimension_numbers<[1], [0], [0], [1], [0, 0, 1, 1], [], []>} : vector<12x32xbf16>, vector<32x128xbf16>, vector<12x128xf32> -> vector<12x128xf32>
    %c0_12 = arith.constant 0 : index
    %c0_13 = arith.constant 0 : index
    %16 = vector.load %arg6[%c0_12, %c0_13] : memref<1x128xf32, #tpu.memory_space<vmem>>, vector<1x128xf32>
    %17 = vector.broadcast %16 : vector<1x128xf32> to vector<12x128xf32>
    %18 = arith.addf %15, %17 : vector<12x128xf32>
    %cst_14 = arith.constant dense<0xFF800000> : vector<128xf32>
    %19 = vector.multi_reduction <maximumf>, %18, %cst_14 [0] : vector<12x128xf32> to vector<128xf32>
    %20 = vector.shape_cast %19 : vector<128xf32> to vector<1x128xf32>
    %21 = vector.broadcast %20 : vector<1x128xf32> to vector<12x128xf32>
    %22 = arith.subf %18, %21 : vector<12x128xf32>
    %23 = math.exp %22 : vector<12x128xf32>
    %cst_15 = arith.constant dense<0.000000e+00> : vector<128xf32>
    %24 = vector.multi_reduction <add>, %23, %cst_15 [0] : vector<12x128xf32> to vector<128xf32>
    %25 = vector.shape_cast %24 : vector<128xf32> to vector<1x128xf32>
    %26 = vector.broadcast %25 : vector<1x128xf32> to vector<12x128xf32>
    %27 = arith.divf %23, %26 : vector<12x128xf32>
    %28 = arith.mulf %1, %27 : vector<12x128xf32>
    %cst_16 = arith.constant dense<0.000000e+00> : vector<128xf32>
    %29 = vector.multi_reduction <add>, %28, %cst_16 [0] : vector<12x128xf32> to vector<128xf32>
    %30 = vector.shape_cast %29 : vector<128xf32> to vector<1x128xf32>
    %c0_17 = arith.constant 0 : index
    %c0_18 = arith.constant 0 : index
    %c0_19 = arith.constant 0 : index
    %31 = vector.load %arg7[%c0_17, %c0_18, %c0_19] : memref<1x1x128xf32, #tpu.memory_space<vmem>>, vector<1x1x128xf32>
    %32 = vector.shape_cast %31 : vector<1x1x128xf32> to vector<1x128xf32>
    %33 = vector.shape_cast %30 : vector<1x128xf32> to vector<1x1x128xf32>
    tpu.vector_store %arg7[%c0_17, %c0_18, %c0_19], %33 {strides = array<i32>} : memref<1x1x128xf32, #tpu.memory_space<vmem>>, vector<1x1x128xf32>,
    return
  }
  func.func @transform_0(%arg0: i32) -> (i32, i32, i32) {
    %c0_i32 = arith.constant 0 : i32
    %c0_i32_0 = arith.constant 0 : i32
    %c0_i32_1 = arith.constant 0 : i32
    return %arg0, %c0_i32, %c0_i32_0 : i32, i32, i32
  }
  func.func @transform_1(%arg0: i32) -> (i32, i32) {
    %c0_i32 = arith.constant 0 : i32
    %c0_i32_0 = arith.constant 0 : i32
    %c0_i32_1 = arith.constant 0 : i32
    return %c0_i32, %c0_i32_0 : i32, i32
  }
  func.func @transform_2(%arg0: i32) -> (i32, i32) {
    %c0_i32 = arith.constant 0 : i32
    %c0_i32_0 = arith.constant 0 : i32
    %c0_i32_1 = arith.constant 0 : i32
    return %c0_i32, %c0_i32_0 : i32, i32
  }
  func.func @transform_3(%arg0: i32) -> (i32, i32) {
    %c0_i32 = arith.constant 0 : i32
    %c0_i32_0 = arith.constant 0 : i32
    %c0_i32_1 = arith.constant 0 : i32
    return %c0_i32, %c0_i32_0 : i32, i32
  }
  func.func @transform_4(%arg0: i32) -> (i32, i32) {
    %c0_i32 = arith.constant 0 : i32
    %c0_i32_0 = arith.constant 0 : i32
    %c0_i32_1 = arith.constant 0 : i32
    return %c0_i32, %c0_i32_0 : i32, i32
  }
  func.func @transform_5(%arg0: i32) -> (i32, i32) {
    %c0_i32 = arith.constant 0 : i32
    %c0_i32_0 = arith.constant 0 : i32
    %c0_i32_1 = arith.constant 0 : i32
    return %c0_i32, %c0_i32_0 : i32, i32
  }
  func.func @transform_6(%arg0: i32) -> (i32, i32, i32) {
    %c0_i32 = arith.constant 0 : i32
    %c0_i32_0 = arith.constant 0 : i32
    %c0_i32_1 = arith.constant 0 : i32
    return %arg0, %c0_i32, %c0_i32_0 : i32, i32, i32
  }
}

module attributes {stable_mosaic.version = 11 : i64} {
  func.func @_tail_kernel(%arg0: i32, %arg1: memref<2x128xf32, #tpu.memory_space<vmem>>, %arg2: memref<128x64xbf16, #tpu.memory_space<vmem>>, %arg3: memref<1x64xf32, #tpu.memory_space<vmem>>, %arg4: memref<64x64xbf16, #tpu.memory_space<vmem>>, %arg5: memref<1x64xf32, #tpu.memory_space<vmem>>, %arg6: memref<64x10xbf16, #tpu.memory_space<vmem>>, %arg7: memref<1x10xf32, #tpu.memory_space<vmem>>, %arg8: memref<2x10xf32, #tpu.memory_space<vmem>>) attributes {dimension_semantics = [#tpu.dimension_semantics<arbitrary>], iteration_bounds = array<i64: 1>, scalar_prefetch = 0 : i64, scratch_operands = 0 : i64, tpu.core_type = #tpu.core_type<tc>, window_params = [{pipeline_mode = #tpu.pipeline_mode<synchronous>, transform_indices = @transform_0, window_bounds = array<i64: 2, 128>}, {pipeline_mode = #tpu.pipeline_mode<synchronous>, transform_indices = @transform_1, window_bounds = array<i64: 128, 64>}, {pipeline_mode = #tpu.pipeline_mode<synchronous>, transform_indices = @transform_2, window_bounds = array<i64: 1, 64>}, {pipeline_mode = #tpu.pipeline_mode<synchronous>, transform_indices = @transform_3, window_bounds = array<i64: 64, 64>}, {pipeline_mode = #tpu.pipeline_mode<synchronous>, transform_indices = @transform_4, window_bounds = array<i64: 1, 64>}, {pipeline_mode = #tpu.pipeline_mode<synchronous>, transform_indices = @transform_5, window_bounds = array<i64: 64, 10>}, {pipeline_mode = #tpu.pipeline_mode<synchronous>, transform_indices = @transform_6, window_bounds = array<i64: 1, 10>}, {pipeline_mode = #tpu.pipeline_mode<synchronous>, transform_indices = @transform_7, window_bounds = array<i64: 2, 10>}]} {
    %c0 = arith.constant 0 : index
    %c0_0 = arith.constant 0 : index
    %0 = vector.load %arg1[%c0, %c0_0] : memref<2x128xf32, #tpu.memory_space<vmem>>, vector<2x128xf32>
    %1 = arith.truncf %0 : vector<2x128xf32> to vector<2x128xbf16>
    %c0_1 = arith.constant 0 : index
    %c0_2 = arith.constant 0 : index
    %2 = vector.load %arg2[%c0_1, %c0_2] : memref<128x64xbf16, #tpu.memory_space<vmem>>, vector<128x64xbf16>
    %cst = arith.constant dense<0.000000e+00> : vector<2x64xf32>
    %3 = tpu.matmul %1, %2, %cst {dimension_numbers = #tpu.dot_dimension_numbers<[1], [0], [0], [1], [0, 0, 1, 1], [], []>} : vector<2x128xbf16>, vector<128x64xbf16>, vector<2x64xf32> -> vector<2x64xf32>
    %c0_3 = arith.constant 0 : index
    %c0_4 = arith.constant 0 : index
    %4 = vector.load %arg3[%c0_3, %c0_4] : memref<1x64xf32, #tpu.memory_space<vmem>>, vector<1x64xf32>
    %5 = vector.broadcast %4 : vector<1x64xf32> to vector<2x64xf32>
    %6 = arith.addf %3, %5 : vector<2x64xf32>
    %cst_5 = arith.constant 0.000000e+00 : f32
    %7 = vector.broadcast %cst_5 : f32 to vector<2x64xf32>
    %8 = arith.maximumf %6, %7 : vector<2x64xf32>
    %9 = arith.truncf %8 : vector<2x64xf32> to vector<2x64xbf16>
    %c0_6 = arith.constant 0 : index
    %c0_7 = arith.constant 0 : index
    %10 = vector.load %arg4[%c0_6, %c0_7] : memref<64x64xbf16, #tpu.memory_space<vmem>>, vector<64x64xbf16>
    %cst_8 = arith.constant dense<0.000000e+00> : vector<2x64xf32>
    %11 = tpu.matmul %9, %10, %cst_8 {dimension_numbers = #tpu.dot_dimension_numbers<[1], [0], [0], [1], [0, 0, 1, 1], [], []>} : vector<2x64xbf16>, vector<64x64xbf16>, vector<2x64xf32> -> vector<2x64xf32>
    %c0_9 = arith.constant 0 : index
    %c0_10 = arith.constant 0 : index
    %12 = vector.load %arg5[%c0_9, %c0_10] : memref<1x64xf32, #tpu.memory_space<vmem>>, vector<1x64xf32>
    %13 = vector.broadcast %12 : vector<1x64xf32> to vector<2x64xf32>
    %14 = arith.addf %11, %13 : vector<2x64xf32>
    %cst_11 = arith.constant 0.000000e+00 : f32
    %15 = vector.broadcast %cst_11 : f32 to vector<2x64xf32>
    %16 = arith.maximumf %14, %15 : vector<2x64xf32>
    %17 = arith.truncf %16 : vector<2x64xf32> to vector<2x64xbf16>
    %c0_12 = arith.constant 0 : index
    %c0_13 = arith.constant 0 : index
    %18 = vector.load %arg6[%c0_12, %c0_13] : memref<64x10xbf16, #tpu.memory_space<vmem>>, vector<64x10xbf16>
    %cst_14 = arith.constant dense<0.000000e+00> : vector<2x10xf32>
    %19 = tpu.matmul %17, %18, %cst_14 {dimension_numbers = #tpu.dot_dimension_numbers<[1], [0], [0], [1], [0, 0, 1, 1], [], []>} : vector<2x64xbf16>, vector<64x10xbf16>, vector<2x10xf32> -> vector<2x10xf32>
    %c0_15 = arith.constant 0 : index
    %c0_16 = arith.constant 0 : index
    %20 = vector.load %arg7[%c0_15, %c0_16] : memref<1x10xf32, #tpu.memory_space<vmem>>, vector<1x10xf32>
    %21 = vector.broadcast %20 : vector<1x10xf32> to vector<2x10xf32>
    %22 = arith.addf %19, %21 : vector<2x10xf32>
    %c0_17 = arith.constant 0 : index
    %c0_18 = arith.constant 0 : index
    %23 = vector.load %arg8[%c0_17, %c0_18] : memref<2x10xf32, #tpu.memory_space<vmem>>, vector<2x10xf32>
    tpu.vector_store %arg8[%c0_17, %c0_18], %22 {strides = array<i32>} : memref<2x10xf32, #tpu.memory_space<vmem>>, vector<2x10xf32>,
    return
  }
  func.func @transform_0(%arg0: i32) -> (i32, i32) {
    %c0_i32 = arith.constant 0 : i32
    %c0_i32_0 = arith.constant 0 : i32
    %c0_i32_1 = arith.constant 0 : i32
    return %c0_i32, %c0_i32_0 : i32, i32
  }
  func.func @transform_1(%arg0: i32) -> (i32, i32) {
    %c0_i32 = arith.constant 0 : i32
    %c0_i32_0 = arith.constant 0 : i32
    %c0_i32_1 = arith.constant 0 : i32
    return %c0_i32, %c0_i32_0 : i32, i32
  }
  func.func @transform_2(%arg0: i32) -> (i32, i32) {
    %c0_i32 = arith.constant 0 : i32
    %c0_i32_0 = arith.constant 0 : i32
    %c0_i32_1 = arith.constant 0 : i32
    return %c0_i32, %c0_i32_0 : i32, i32
  }
  func.func @transform_3(%arg0: i32) -> (i32, i32) {
    %c0_i32 = arith.constant 0 : i32
    %c0_i32_0 = arith.constant 0 : i32
    %c0_i32_1 = arith.constant 0 : i32
    return %c0_i32, %c0_i32_0 : i32, i32
  }
  func.func @transform_4(%arg0: i32) -> (i32, i32) {
    %c0_i32 = arith.constant 0 : i32
    %c0_i32_0 = arith.constant 0 : i32
    %c0_i32_1 = arith.constant 0 : i32
    return %c0_i32, %c0_i32_0 : i32, i32
  }
  func.func @transform_5(%arg0: i32) -> (i32, i32) {
    %c0_i32 = arith.constant 0 : i32
    %c0_i32_0 = arith.constant 0 : i32
    %c0_i32_1 = arith.constant 0 : i32
    return %c0_i32, %c0_i32_0 : i32, i32
  }
  func.func @transform_6(%arg0: i32) -> (i32, i32) {
    %c0_i32 = arith.constant 0 : i32
    %c0_i32_0 = arith.constant 0 : i32
    %c0_i32_1 = arith.constant 0 : i32
    return %c0_i32, %c0_i32_0 : i32, i32
  }
  func.func @transform_7(%arg0: i32) -> (i32, i32) {
    %c0_i32 = arith.constant 0 : i32
    %c0_i32_0 = arith.constant 0 : i32
    %c0_i32_1 = arith.constant 0 : i32
    return %c0_i32, %c0_i32_0 : i32, i32
  }
}

</mosaic_0001>

<llo_original>
// kernel: x_vector_forward.7
$region0: #{x_vector_forward.7}
  #allocation0 [shape = 'u32[]', space=smem, size = 0x4, offset = 0x4, fixed_abs, tag = 'smem constant byte address 0x4 - core index']
  #allocation1 [shape = 'u32[144,128]{1,0:T(1,128)}', space=vmem, size = 0x12000, scoped, tag = 'internal scratch']
  %s0 = inlined_call_operand.vmem [shape: f32[2,28,64], index: 0, kind: input, shape index: {}]
  %s1 = inlined_call_operand.vmem [shape: bf16[5,64,64], index: 1, kind: input, shape index: {}]
  %s2 = inlined_call_operand.vmem [shape: f32[1,64], index: 2, kind: input, shape index: {}]
  %s3 = inlined_call_operand.vmem [shape: f32[1,64], index: 3, kind: input, shape index: {}]
  %s4 = inlined_call_operand.vmem [shape: f32[2,24,64], index: 4, kind: output, shape index: {}]
  %s5 = sld [smem:[#allocation0]]
  $region49: #{x_vector_forward.7} parent=0
    _
  %s7 = ssub.s32 1, %s5
  %s8 = scalar_select 0, %s7, %s5
  loop: start=0, step=1, limit=4
  $region2: #{x_vector_forward.7} parent=0 // loop_pre_header
    _
  $region3: #{x_vector_forward.7} parent=0 // loop_header
    %s10 = sphi 0, %s14
    %p11 = scmp.ge.s32.totalorder %s10, 4
    %s20 = sphi 0, %s22
    %s23 = sphi 0, %s20
    %s24 = sphi 0, %s23
    %s40 = sphi 0, %s24
    %s44 = sphi 0, %s44
    %s46 = sphi 0, %s44
    %s47 = sphi 0, %s46
    %s61 = sphi 0, %s47
    %s65 = sphi 0, %s65
    %s67 = sphi 0, %s65
    %s68 = sphi 0, %s67
    %s82 = sphi 0, %s68
    %s86 = sphi 0, %s86
    %s88 = sphi 0, %s86
    %s89 = sphi 0, %s88
    %s103 = sphi 0, %s89
    %s109 = sphi 0, %s111
    %s112 = sphi 0, %s109
    %s113 = sphi 0, %s112
    %s129 = sphi 0, %s113
  $region4: #{x_vector_forward.7} parent=0 // loop_header_branch
    %13 = sbr.rel (%p11) target = $region8
  $region5: #{x_vector_forward.7} parent=0 // loop_body
    %s15 = ssub.s32 %s10, 1
    %s16 = ssub.s32 %s10, 2
    %s17 = sadd.s32 %s10, 1
    %s18 = ssub.s32 %s10, %s17
    %p19 = scmp.eq.s32.totalorder %s18, 0
    %s21 = sadd.s32 %s20, 1
    %s22 = scalar_select %p19, %s20, %s21
    %p25 = pneg %p19
    %p26 = scmp.eq.s32.totalorder %s10, 1
    %p27 = por %p25, %p26
    %p28 = scmp.ne.s32.totalorder %s20, %s23
    %p29 = scmp.eq.s32.totalorder %s10, 0
    %p30 = por %p28, %p29
    %p31 = scmp.ne.s32.totalorder %s20, %s23
    %p32 = scmp.eq.s32.totalorder %s15, 1
    %p33 = por %p31, %p32
    %p34 = scmp.ne.s32.totalorder %s23, %s24
    %p35 = scmp.eq.s32.totalorder %s15, 0
    %p36 = por %p34, %p35
    %p37 = scmp.ne.s32.totalorder %s23, %s24
    %p38 = scmp.eq.s32.totalorder %s16, 1
    %p39 = por %p37, %p38
    %p41 = scmp.ne.s32.totalorder %s24, %s40
    %p42 = scmp.eq.s32.totalorder %s16, 0
    %p43 = por %p41, %p42
    %s45 = sadd.s32 %s44, 1
    %p48 = scmp.eq.s32.totalorder %s10, 1
    %p49 = scmp.ne.s32.totalorder %s44, %s46
    %p50 = scmp.eq.s32.totalorder %s10, 0
    %p51 = por %p49, %p50
    %p52 = scmp.ne.s32.totalorder %s44, %s46
    %p53 = scmp.eq.s32.totalorder %s15, 1
    %p54 = por %p52, %p53
    %p55 = scmp.ne.s32.totalorder %s46, %s47
    %p56 = scmp.eq.s32.totalorder %s15, 0
    %p57 = por %p55, %p56
    %p58 = scmp.ne.s32.totalorder %s46, %s47
    %p59 = scmp.eq.s32.totalorder %s16, 1
    %p60 = por %p58, %p59
    %p62 = scmp.ne.s32.totalorder %s47, %s61
    %p63 = scmp.eq.s32.totalorder %s16, 0
    %p64 = por %p62, %p63
    %s66 = sadd.s32 %s65, 1
    %p69 = scmp.eq.s32.totalorder %s10, 1
    %p70 = scmp.ne.s32.totalorder %s65, %s67
    %p71 = scmp.eq.s32.totalorder %s10, 0
    %p72 = por %p70, %p71
    %p73 = scmp.ne.s32.totalorder %s65, %s67
    %p74 = scmp.eq.s32.totalorder %s15, 1
    %p75 = por %p73, %p74
    %p76 = scmp.ne.s32.totalorder %s67, %s68
    %p77 = scmp.eq.s32.totalorder %s15, 0
    %p78 = por %p76, %p77
    %p79 = scmp.ne.s32.totalorder %s67, %s68
    %p80 = scmp.eq.s32.totalorder %s16, 1
    %p81 = por %p79, %p80
    %p83 = scmp.ne.s32.totalorder %s68, %s82
    %p84 = scmp.eq.s32.totalorder %s16, 0
    %p85 = por %p83, %p84
    %s87 = sadd.s32 %s86, 1
    %p90 = scmp.eq.s32.totalorder %s10, 1
    %p91 = scmp.ne.s32.totalorder %s86, %s88
    %p92 = scmp.eq.s32.totalorder %s10, 0
    %p93 = por %p91, %p92
    %p94 = scmp.ne.s32.totalorder %s86, %s88
    %p95 = scmp.eq.s32.totalorder %s15, 1
    %p96 = por %p94, %p95
    %p97 = scmp.ne.s32.totalorder %s88, %s89
    %p98 = scmp.eq.s32.totalorder %s15, 0
    %p99 = por %p97, %p98
    %p100 = scmp.ne.s32.totalorder %s88, %s89
    %p101 = scmp.eq.s32.totalorder %s16, 1
    %p102 = por %p100, %p101
    %p104 = scmp.ne.s32.totalorder %s89, %s103
    %p105 = scmp.eq.s32.totalorder %s16, 0
    %p106 = por %p104, %p105
    %s107 = ssub.s32 %s10, %s17
    %p108 = scmp.eq.s32.totalorder %s107, 0
    %s110 = sadd.s32 %s109, 1
    %s111 = scalar_select %p108, %s109, %s110
    %p114 = pneg %p108
    %p115 = scmp.eq.s32.totalorder %s10, 1
    %p116 = por %p114, %p115
    %p117 = scmp.ne.s32.totalorder %s109, %s112
    %p118 = scmp.eq.s32.totalorder %s10, 0
    %p119 = por %p117, %p118
    %p120 = scmp.ne.s32.totalorder %s109, %s112
    %p121 = scmp.eq.s32.totalorder %s15, 1
    %p122 = por %p120, %p121
    %p123 = scmp.ne.s32.totalorder %s112, %s113
    %p124 = scmp.eq.s32.totalorder %s15, 0
    %p125 = por %p123, %p124
    %p126 = scmp.ne.s32.totalorder %s112, %s113
    %p127 = scmp.eq.s32.totalorder %s16, 1
    %p128 = por %p126, %p127
    %p130 = scmp.ne.s32.totalorder %s113, %s129
    %p131 = scmp.eq.s32.totalorder %s16, 0
    %p132 = por %p130, %p131
    %p133 = scmp.le.s32.totalorder 1, %s10
    %p134 = scmp.lt.s32.totalorder %s10, 3
    %p135 = pnand %p133, %p134
    %p136 = pneg %p135
    // Predicated region
    $region9: #{x_vector_forward.7} parent=5 // pred_check
      _
    $region10: #{x_vector_forward.7} parent=5 // pred_check_branch
      %138 = sbr.rel (%p135) target = $region12
    $region11: #{x_vector_forward.7} parent=5 // pred_region
      %s139 = ssub.s32 %s10, 1
      // Predicated region
      $region13: #{x_vector_forward.7} parent=11 // pred_check
        %p140 = pneg %p57
      $region14: #{x_vector_forward.7} parent=11 // pred_check_branch
        %142 = sbr.rel (%p140) target = $region16
      $region15: #{x_vector_forward.7} parent=11 // pred_region
        _
      $region16: #{x_vector_forward.7} parent=11 // pred_fallthru
        _
      // Predicated region
      $region17: #{x_vector_forward.7} parent=11 // pred_check
        %p143 = pneg %p78
      $region18: #{x_vector_forward.7} parent=11 // pred_check_branch
        %145 = sbr.rel (%p143) target = $region20
      $region19: #{x_vector_forward.7} parent=11 // pred_region
        _
      $region20: #{x_vector_forward.7} parent=11 // pred_fallthru
        _
      // Predicated region
      $region21: #{x_vector_forward.7} parent=11 // pred_check
        %p146 = pneg %p99
      $region22: #{x_vector_forward.7} parent=11 // pred_check_branch
        %148 = sbr.rel (%p146) target = $region24
      $region23: #{x_vector_forward.7} parent=11 // pred_region
        _
      $region24: #{x_vector_forward.7} parent=11 // pred_fallthru
        _
    $region12: #{x_vector_forward.7} parent=5 // pred_fallthru
      _
    %p149 = scmp.lt.s32.totalorder %s10, 2
    // Predicated region
    $region25: #{x_vector_forward.7} parent=5 // pred_check
      %p150 = pneg %p149
    $region26: #{x_vector_forward.7} parent=5 // pred_check_branch
      %152 = sbr.rel (%p150) target = $region28
    $region27: #{x_vector_forward.7} parent=5 // pred_region
      // Predicated region
      $region29: #{x_vector_forward.7} parent=27 // pred_check
        %p153 = pneg %p30
      $region30: #{x_vector_forward.7} parent=27 // pred_check_branch
        %155 = sbr.rel (%p153) target = $region32
      $region31: #{x_vector_forward.7} parent=27 // pred_region
        %p156 = scmp.lt.s32.totalorder %s10, 1
        %s157 = scalar_select %p156, %s10, 1
        %s158 = smul.addr %s157, 4
        %s159 = smul.addr %s158, 8
        %s160 = scalar_lea.vmem %s0, %s159
      $region32: #{x_vector_forward.7} parent=27 // pred_fallthru
        _
    $region28: #{x_vector_forward.7} parent=5 // pred_fallthru
      _
    %p161 = scmp.le.s32.totalorder 1, %s10
    %p162 = scmp.lt.s32.totalorder %s10, 3
    %p163 = pnand %p161, %p162
    %p164 = pneg %p163
    // Predicated region
    $region33: #{x_vector_forward.7} parent=5 // pred_check
      _
    $region34: #{x_vector_forward.7} parent=5 // pred_check_branch
      %166 = sbr.rel (%p163) target = $region36
    $region35: #{x_vector_forward.7} parent=5 // pred_region
      %s167 = ssub.s32 %s10, 1
      %p168 = scmp.lt.s32.totalorder %s15, 1
      %s169 = scalar_select %p168, %s15, 1
      %s170 = smul.addr %s169, 4
      %s171 = smul.addr %s170, 8
      %s172 = scalar_lea.vmem %s0, %s171
      %p173 = pneg %p36
      %p174 = pneg %p33
      %p175 = pneg %p57
      %p176 = pneg %p54
      %p177 = pneg %p78
      %p178 = pneg %p75
      %p179 = pneg %p99
      %p180 = pneg %p96
      %p181 = pneg %p125
      %p182 = pneg %p122
      %p183 = scmp.lt.s32.totalorder %s15, 1
      %s184 = scalar_select %p183, %s15, 1
      %s185 = smul.addr %s184, 3
      %s186 = smul.addr %s185, 8
      %s187 = scalar_lea.vmem %s4, %s186
      %p188 = scmp.lt.s32.totalorder %s15, 1
      %s189 = scalar_select %p188, %s15, 1
      %s190 = smul.addr %s189, 4
      %s191 = smul.addr %s190, 8
      %s192 = scalar_lea.vmem %s0, %s191
      %p193 = scmp.lt.s32.totalorder %s15, 1
      %s194 = scalar_select %p193, %s15, 1
      %s195 = smul.addr %s194, 3
      %s196 = smul.addr %s195, 8
      %s197 = scalar_lea.vmem %s4, %s196
      %v199 = vld [vmem:[%s192] sm:$0xff]
      %v200 = vld [vmem:[%s192 + $0x8] sm:$0xff]
      %v201 = vld [vmem:[%s192 + $0x10] sm:$0xff]
      %v202 = vld [vmem:[%s192 + $0x18] sm:$0xf]
      %v203 = vpack.c.bf16 %v200, %v199
      %v204 = vpack.c.bf16 %v202, %v201
      %v205 = vld [vmem:[%s1] sm:$0xf]
      %v206 = vld [vmem:[%s1 + $0x4] sm:$0xf]
      %v207 = vld [vmem:[%s1 + $0x8] sm:$0xf]
      %v208 = vld [vmem:[%s1 + $0xc] sm:$0xf]
      %v209 = vld [vmem:[%s1 + $0x10] sm:$0xf]
      %v210 = vld [vmem:[%s1 + $0x14] sm:$0xf]
      %v211 = vld [vmem:[%s1 + $0x18] sm:$0xf]
      %v212 = vld [vmem:[%s1 + $0x1c] sm:$0xf]
      %s213 = scalar_lea.vmem %s1, 32
      %v214 = vld [vmem:[%s213] sm:$0xf]
      %v215 = vld [vmem:[%s213 + $0x4] sm:$0xf]
      %v216 = vld [vmem:[%s213 + $0x8] sm:$0xf]
      %v217 = vld [vmem:[%s213 + $0xc] sm:$0xf]
      %v218 = vld [vmem:[%s213 + $0x10] sm:$0xf]
      %v219 = vld [vmem:[%s213 + $0x14] sm:$0xf]
      %v220 = vld [vmem:[%s213 + $0x18] sm:$0xf]
      %v221 = vld [vmem:[%s213 + $0x1c] sm:$0xf]
      %vm222 = vsmask.f32 7424
      %v224 = vshrl.u32 %v203, 16
      %v226 = vshll.u32 %v203, 16
      %v228 = vrot.slane %v226, 1
      %v229 = vor.u32 %v224, %v228
      %v231 = vshll.u32 %v204, 16
      %v233 = vrot.slane %v231, 1
      %v234 = vsel %vm222, %v229, %v233
      %v235 = vshrl.u32 %v204, 16
      %v237 = vor.u32 %v235, %v233
      %v246 = vunpack.c.l.b16 %v214
      %v247 = vunpack.c.l.b16 %v215
      %v248 = vunpack.c.l.b16 %v216
      %v249 = vunpack.c.l.b16 %v217
      %v250 = vunpack.c.l.b16 %v218
      %v251 = vunpack.c.l.b16 %v219
      %v252 = vunpack.c.l.b16 %v220
      %v253 = vunpack.c.l.b16 %v221
      %v254 = vpack.c.b16 %v247, %v246
      %v255 = vpack.c.b16 %v249, %v248
      %v256 = vpack.c.b16 %v251, %v250
      %v257 = vpack.c.b16 %v253, %v252
      %vm262 = vcmask 523264
      %v264 = vsel %vm262, %v234, 0
      %v267 = vsel %vm262, %v237, 0
      %269 = vmatprep.subr.bf16.mxu0 0
      %270 = vmatpush1.bf16.msra.mxu0 %v254
      %271 = vmatprep.subr.bf16.mxu0 0
      %272 = vmatpush1.bf16.msra.mxu0 %v255
      %273 = vmatprep.subr.bf16.mxu0 0
      %274 = vmatpush1.bf16.msra.mxu0 %v256
      %275 = vmatprep.subr.bf16.mxu0 0
      %276 = vmatpush1.bf16.msra.mxu0 %v257
      %277 = vmatprep.subr.bf16.mxu0 0
      %278 = vmatpush1.bf16.msra.mxu0 0
      %279 = vmatprep.subr.bf16.mxu0 0
      %280 = vmatpush1.bf16.msra.mxu0 0
      %281 = vmatprep.subr.bf16.mxu0 0
      %282 = vmatpush1.bf16.msra.mxu0 0
      %283 = vmatprep.subr.bf16.mxu0 0
      %284 = vmatpush1.bf16.msra.mxu0 0
      %285 = vmatprep.subr.bf16.mxu0 0
      %286 = vmatpush1.bf16.msra.mxu0 0
      %287 = vmatprep.subr.bf16.mxu0 0
      %288 = vmatpush1.bf16.msra.mxu0 0
      %289 = vmatprep.subr.bf16.mxu0 0
      %290 = vmatpush1.bf16.msra.mxu0 0
      %291 = vmatprep.subr.bf16.mxu0 0
      %292 = vmatpush1.bf16.msra.mxu0 0
      %293 = vmatprep.subr.bf16.mxu0 0
      %294 = vmatpush1.bf16.msra.mxu0 0
      %295 = vmatprep.subr.bf16.mxu0 0
      %296 = vmatpush1.bf16.msra.mxu0 0
      %297 = vmatprep.subr.bf16.mxu0 0
      %298 = vmatpush1.bf16.msra.mxu0 0
      %299 = vmatprep.subr.bf16.mxu0 0
      %300 = vmatpush1.bf16.msra.mxu0 0
      %301 = vmatprep.mubr.bf16.mxu0 0
      %302 = vmatmul.mubr.bf16.gmra.mrb[0].mxu0 %v264
      %v303 = vpop.f32.mrb[0].mxu0
      %v304 = vadd.f32 0.0, %v303
      %v305 = vpop.f32.mrb[0].mxu0
      %v306 = vpop.f32.mrb[0].mxu0
      %v307 = vadd.f32 0.0, %v306
      %v308 = vpop.f32.mrb[0].mxu0
      %309 = vmatprep.mubr.bf16.mxu0 0
      %310 = vmatmul.mubr.bf16.gmra.mrb[0].mxu0 %v267
      %v311 = vpop.f32.mrb[0].mxu0
      %v312 = vadd.f32 0.0, %v311
      %v313 = vpop.f32.mrb[0].mxu0
      %v314 = vpop.f32.mrb[0].mxu0
      %v315 = vpop.f32.mrb[0].mxu0
      %316 = vdwg.mxu0
      %v325 = vunpack.c.l.b16 %v205
      %v326 = vunpack.c.l.b16 %v206
      %v327 = vunpack.c.l.b16 %v207
      %v328 = vunpack.c.l.b16 %v208
      %v329 = vunpack.c.l.b16 %v209
      %v330 = vunpack.c.l.b16 %v210
      %v331 = vunpack.c.l.b16 %v211
      %v332 = vunpack.c.l.b16 %v212
      %v333 = vpack.c.b16 %v326, %v325
      %v334 = vpack.c.b16 %v328, %v327
      %v335 = vpack.c.b16 %v330, %v329
      %v336 = vpack.c.b16 %v332, %v331
      %v341 = vsel %vm262, %v203, 0
      %v343 = vsel %vm262, %v204, 0
      %345 = vmatprep.subr.bf16.mxu0 0
      %346 = vmatpush1.bf16.msra.mxu0 %v333
      %347 = vmatprep.subr.bf16.mxu0 0
      %348 = vmatpush1.bf16.msra.mxu0 %v334
      %349 = vmatprep.subr.bf16.mxu0 0
      %350 = vmatpush1.bf16.msra.mxu0 %v335
      %351 = vmatprep.subr.bf16.mxu0 0
      %352 = vmatpush1.bf16.msra.mxu0 %v336
      %353 = vmatprep.subr.bf16.mxu0 0
      %354 = vmatpush1.bf16.msra.mxu0 0
      %355 = vmatprep.subr.bf16.mxu0 0
      %356 = vmatpush1.bf16.msra.mxu0 0
      %357 = vmatprep.subr.bf16.mxu0 0
      %358 = vmatpush1.bf16.msra.mxu0 0
      %359 = vmatprep.subr.bf16.mxu0 0
      %360 = vmatpush1.bf16.msra.mxu0 0
      %361 = vmatprep.subr.bf16.mxu0 0
      %362 = vmatpush1.bf16.msra.mxu0 0
      %363 = vmatprep.subr.bf16.mxu0 0
      %364 = vmatpush1.bf16.msra.mxu0 0
      %365 = vmatprep.subr.bf16.mxu0 0
      %366 = vmatpush1.bf16.msra.mxu0 0
      %367 = vmatprep.subr.bf16.mxu0 0
      %368 = vmatpush1.bf16.msra.mxu0 0
      %369 = vmatprep.subr.bf16.mxu0 0
      %370 = vmatpush1.bf16.msra.mxu0 0
      %371 = vmatprep.subr.bf16.mxu0 0
      %372 = vmatpush1.bf16.msra.mxu0 0
      %373 = vmatprep.subr.bf16.mxu0 0
      %374 = vmatpush1.bf16.msra.mxu0 0
      %375 = vmatprep.subr.bf16.mxu0 0
      %376 = vmatpush1.bf16.msra.mxu0 0
      %377 = vmatprep.mubr.bf16.mxu0 0
      %378 = vmatmul.mubr.bf16.gmra.mrb[0].mxu0 %v341
      %v379 = vpop.f32.mrb[0].mxu0
      %v380 = vadd.f32 %v304, %v379
      %v381 = vpop.f32.mrb[0].mxu0
      %v382 = vpop.f32.mrb[0].mxu0
      %v383 = vadd.f32 %v307, %v382
      %v384 = vpop.f32.mrb[0].mxu0
      %385 = vmatprep.mubr.bf16.mxu0 0
      %386 = vmatmul.mubr.bf16.gmra.mrb[0].mxu0 %v343
      %v387 = vpop.f32.mrb[0].mxu0
      %v388 = vadd.f32 %v312, %v387
      %v389 = vpop.f32.mrb[0].mxu0
      %v390 = vpop.f32.mrb[0].mxu0
      %v391 = vpop.f32.mrb[0].mxu0
      %392 = vdwg.mxu0
      %s393 = scalar_lea.vmem %s1, 64
      %v394 = vld [vmem:[%s393] sm:$0xf]
      %v395 = vld [vmem:[%s393 + $0x4] sm:$0xf]
      %v396 = vld [vmem:[%s393 + $0x8] sm:$0xf]
      %v397 = vld [vmem:[%s393 + $0xc] sm:$0xf]
      %v398 = vld [vmem:[%s393 + $0x10] sm:$0xf]
      %v399 = vld [vmem:[%s393 + $0x14] sm:$0xf]
      %v400 = vld [vmem:[%s393 + $0x18] sm:$0xf]
      %v401 = vld [vmem:[%s393 + $0x1c] sm:$0xf]
      %vm404 = vcmask 1046528
      %v405 = vrot.slane %v203, 1
      %v406 = vrot.slane %v204, 1
      %v407 = vsel %vm404, %v405, %v406
      %v416 = vunpack.c.l.b16 %v394
      %v417 = vunpack.c.l.b16 %v395
      %v418 = vunpack.c.l.b16 %v396
      %v419 = vunpack.c.l.b16 %v397
      %v420 = vunpack.c.l.b16 %v398
      %v421 = vunpack.c.l.b16 %v399
      %v422 = vunpack.c.l.b16 %v400
      %v423 = vunpack.c.l.b16 %v401
      %v424 = vpack.c.b16 %v417, %v416
      %v425 = vpack.c.b16 %v419, %v418
      %v426 = vpack.c.b16 %v421, %v420
      %v427 = vpack.c.b16 %v423, %v422
      %v433 = vsel %vm262, %v407, 0
      %v436 = vsel %vm262, %v406, 0
      %438 = vmatprep.subr.bf16.mxu0 0
      %439 = vmatpush1.bf16.msra.mxu0 %v424
      %440 = vmatprep.subr.bf16.mxu0 0
      %441 = vmatpush1.bf16.msra.mxu0 %v425
      %442 = vmatprep.subr.bf16.mxu0 0
      %443 = vmatpush1.bf16.msra.mxu0 %v426
      %444 = vmatprep.subr.bf16.mxu0 0
      %445 = vmatpush1.bf16.msra.mxu0 %v427
      %446 = vmatprep.subr.bf16.mxu0 0
      %447 = vmatpush1.bf16.msra.mxu0 0
      %448 = vmatprep.subr.bf16.mxu0 0
      %449 = vmatpush1.bf16.msra.mxu0 0
      %450 = vmatprep.subr.bf16.mxu0 0
      %451 = vmatpush1.bf16.msra.mxu0 0
      %452 = vmatprep.subr.bf16.mxu0 0
      %453 = vmatpush1.bf16.msra.mxu0 0
      %454 = vmatprep.subr.bf16.mxu0 0
      %455 = vmatpush1.bf16.msra.mxu0 0
      %456 = vmatprep.subr.bf16.mxu0 0
      %457 = vmatpush1.bf16.msra.mxu0 0
      %458 = vmatprep.subr.bf16.mxu0 0
      %459 = vmatpush1.bf16.msra.mxu0 0
      %460 = vmatprep.subr.bf16.mxu0 0
      %461 = vmatpush1.bf16.msra.mxu0 0
      %462 = vmatprep.subr.bf16.mxu0 0
      %463 = vmatpush1.bf16.msra.mxu0 0
      %464 = vmatprep.subr.bf16.mxu0 0
      %465 = vmatpush1.bf16.msra.mxu0 0
      %466 = vmatprep.subr.bf16.mxu0 0
      %467 = vmatpush1.bf16.msra.mxu0 0
      %468 = vmatprep.subr.bf16.mxu0 0
      %469 = vmatpush1.bf16.msra.mxu0 0
      %470 = vmatprep.mubr.bf16.mxu0 0
      %471 = vmatmul.mubr.bf16.gmra.mrb[0].mxu0 %v433
      %v472 = vpop.f32.mrb[0].mxu0
      %v473 = vadd.f32 0.0, %v472
      %v474 = vpop.f32.mrb[0].mxu0
      %v475 = vpop.f32.mrb[0].mxu0
      %v476 = vadd.f32 0.0, %v475
      %v477 = vpop.f32.mrb[0].mxu0
      %478 = vmatprep.mubr.bf16.mxu0 0
      %479 = vmatmul.mubr.bf16.gmra.mrb[0].mxu0 %v436
      %v480 = vpop.f32.mrb[0].mxu0
      %v481 = vadd.f32 0.0, %v480
      %v482 = vpop.f32.mrb[0].mxu0
      %v483 = vpop.f32.mrb[0].mxu0
      %v484 = vpop.f32.mrb[0].mxu0
      %485 = vdwg.mxu0
      %v486 = vadd.f32 %v380, %v473
      %v487 = vadd.f32 %v383, %v476
      %v488 = vadd.f32 %v388, %v481
      %s489 = scalar_lea.vmem %s1, 96
      %v490 = vld [vmem:[%s489] sm:$0xf]
      %v491 = vld [vmem:[%s489 + $0x4] sm:$0xf]
      %v492 = vld [vmem:[%s489 + $0x8] sm:$0xf]
      %v493 = vld [vmem:[%s489 + $0xc] sm:$0xf]
      %v494 = vld [vmem:[%s489 + $0x10] sm:$0xf]
      %v495 = vld [vmem:[%s489 + $0x14] sm:$0xf]
      %v496 = vld [vmem:[%s489 + $0x18] sm:$0xf]
      %v497 = vld [vmem:[%s489 + $0x1c] sm:$0xf]
      %vm498 = vsmask.f32 6400
      %v499 = vrot.slane %v224, 1
      %v500 = vrot.slane %v226, 2
      %v501 = vor.u32 %v499, %v500
      %v502 = vrot.slane %v235, 1
      %v503 = vrot.slane %v231, 2
      %v504 = vor.u32 %v502, %v503
      %v505 = vsel %vm498, %v501, %v504
      %v514 = vunpack.c.l.b16 %v490
      %v515 = vunpack.c.l.b16 %v491
      %v516 = vunpack.c.l.b16 %v492
      %v517 = vunpack.c.l.b16 %v493
      %v518 = vunpack.c.l.b16 %v494
      %v519 = vunpack.c.l.b16 %v495
      %v520 = vunpack.c.l.b16 %v496
      %v521 = vunpack.c.l.b16 %v497
      %v522 = vpack.c.b16 %v515, %v514
      %v523 = vpack.c.b16 %v517, %v516
      %v524 = vpack.c.b16 %v519, %v518
      %v525 = vpack.c.b16 %v521, %v520
      %v531 = vsel %vm262, %v505, 0
      %v534 = vsel %vm262, %v504, 0
      %536 = vmatprep.subr.bf16.mxu0 0
      %537 = vmatpush1.bf16.msra.mxu0 %v522
      %538 = vmatprep.subr.bf16.mxu0 0
      %539 = vmatpush1.bf16.msra.mxu0 %v523
      %540 = vmatprep.subr.bf16.mxu0 0
      %541 = vmatpush1.bf16.msra.mxu0 %v524
      %542 = vmatprep.subr.bf16.mxu0 0
      %543 = vmatpush1.bf16.msra.mxu0 %v525
      %544 = vmatprep.subr.bf16.mxu0 0
      %545 = vmatpush1.bf16.msra.mxu0 0
      %546 = vmatprep.subr.bf16.mxu0 0
      %547 = vmatpush1.bf16.msra.mxu0 0
      %548 = vmatprep.subr.bf16.mxu0 0
      %549 = vmatpush1.bf16.msra.mxu0 0
      %550 = vmatprep.subr.bf16.mxu0 0
      %551 = vmatpush1.bf16.msra.mxu0 0
      %552 = vmatprep.subr.bf16.mxu0 0
      %553 = vmatpush1.bf16.msra.mxu0 0
      %554 = vmatprep.subr.bf16.mxu0 0
      %555 = vmatpush1.bf16.msra.mxu0 0
      %556 = vmatprep.subr.bf16.mxu0 0
      %557 = vmatpush1.bf16.msra.mxu0 0
      %558 = vmatprep.subr.bf16.mxu0 0
      %559 = vmatpush1.bf16.msra.mxu0 0
      %560 = vmatprep.subr.bf16.mxu0 0
      %561 = vmatpush1.bf16.msra.mxu0 0
      %562 = vmatprep.subr.bf16.mxu0 0
      %563 = vmatpush1.bf16.msra.mxu0 0
      %564 = vmatprep.subr.bf16.mxu0 0
      %565 = vmatpush1.bf16.msra.mxu0 0
      %566 = vmatprep.subr.bf16.mxu0 0
      %567 = vmatpush1.bf16.msra.mxu0 0
      %568 = vmatprep.mubr.bf16.mxu0 0
      %569 = vmatmul.mubr.bf16.gmra.mrb[0].mxu0 %v531
      %v570 = vpop.f32.mrb[0].mxu0
      %v571 = vadd.f32 0.0, %v570
      %v572 = vpop.f32.mrb[0].mxu0
      %v573 = vpop.f32.mrb[0].mxu0
      %v574 = vadd.f32 0.0, %v573
      %v575 = vpop.f32.mrb[0].mxu0
      %576 = vmatprep.mubr.bf16.mxu0 0
      %577 = vmatmul.mubr.bf16.gmra.mrb[0].mxu0 %v534
      %v578 = vpop.f32.mrb[0].mxu0
      %v579 = vadd.f32 0.0, %v578
      %v580 = vpop.f32.mrb[0].mxu0
      %v581 = vpop.f32.mrb[0].mxu0
      %v582 = vpop.f32.mrb[0].mxu0
      %583 = vdwg.mxu0
      %v584 = vadd.f32 %v486, %v571
      %v585 = vadd.f32 %v487, %v574
      %v586 = vadd.f32 %v488, %v579
      %s587 = scalar_lea.vmem %s1, 128
      %v588 = vld [vmem:[%s587] sm:$0xf]
      %v589 = vld [vmem:[%s587 + $0x4] sm:$0xf]
      %v590 = vld [vmem:[%s587 + $0x8] sm:$0xf]
      %v591 = vld [vmem:[%s587 + $0xc] sm:$0xf]
      %v592 = vld [vmem:[%s587 + $0x10] sm:$0xf]
      %v593 = vld [vmem:[%s587 + $0x14] sm:$0xf]
      %v594 = vld [vmem:[%s587 + $0x18] sm:$0xf]
      %v595 = vld [vmem:[%s587 + $0x1c] sm:$0xf]
      %vm596 = vcmask 1045504
      %v597 = vrot.slane %v203, 2
      %v598 = vrot.slane %v204, 2
      %v599 = vsel %vm596, %v597, %v598
      %v608 = vunpack.c.l.b16 %v588
      %v609 = vunpack.c.l.b16 %v589
      %v610 = vunpack.c.l.b16 %v590
      %v611 = vunpack.c.l.b16 %v591
      %v612 = vunpack.c.l.b16 %v592
      %v613 = vunpack.c.l.b16 %v593
      %v614 = vunpack.c.l.b16 %v594
      %v615 = vunpack.c.l.b16 %v595
      %v616 = vpack.c.b16 %v609, %v608
      %v617 = vpack.c.b16 %v611, %v610
      %v618 = vpack.c.b16 %v613, %v612
      %v619 = vpack.c.b16 %v615, %v614
      %v625 = vsel %vm262, %v599, 0
      %v628 = vsel %vm262, %v598, 0
      %630 = vmatprep.subr.bf16.mxu0 0
      %631 = vmatpush1.bf16.msra.mxu0 %v616
      %632 = vmatprep.subr.bf16.mxu0 0
      %633 = vmatpush1.bf16.msra.mxu0 %v617
      %634 = vmatprep.subr.bf16.mxu0 0
      %635 = vmatpush1.bf16.msra.mxu0 %v618
      %636 = vmatprep.subr.bf16.mxu0 0
      %637 = vmatpush1.bf16.msra.mxu0 %v619
      %638 = vmatprep.subr.bf16.mxu0 0
      %639 = vmatpush1.bf16.msra.mxu0 0
      %640 = vmatprep.subr.bf16.mxu0 0
      %641 = vmatpush1.bf16.msra.mxu0 0
      %642 = vmatprep.subr.bf16.mxu0 0
      %643 = vmatpush1.bf16.msra.mxu0 0
      %644 = vmatprep.subr.bf16.mxu0 0
      %645 = vmatpush1.bf16.msra.mxu0 0
      %646 = vmatprep.subr.bf16.mxu0 0
      %647 = vmatpush1.bf16.msra.mxu0 0
      %648 = vmatprep.subr.bf16.mxu0 0
      %649 = vmatpush1.bf16.msra.mxu0 0
      %650 = vmatprep.subr.bf16.mxu0 0
      %651 = vmatpush1.bf16.msra.mxu0 0
      %652 = vmatprep.subr.bf16.mxu0 0
      %653 = vmatpush1.bf16.msra.mxu0 0
      %654 = vmatprep.subr.bf16.mxu0 0
      %655 = vmatpush1.bf16.msra.mxu0 0
      %656 = vmatprep.subr.bf16.mxu0 0
      %657 = vmatpush1.bf16.msra.mxu0 0
      %658 = vmatprep.subr.bf16.mxu0 0
      %659 = vmatpush1.bf16.msra.mxu0 0
      %660 = vmatprep.subr.bf16.mxu0 0
      %661 = vmatpush1.bf16.msra.mxu0 0
      %662 = vmatprep.mubr.bf16.mxu0 0
      %663 = vmatmul.mubr.bf16.gmra.mrb[0].mxu0 %v625
      %v664 = vpop.f32.mrb[0].mxu0
      %v665 = vadd.f32 0.0, %v664
      %v666 = vpop.f32.mrb[0].mxu0
      %v667 = vpop.f32.mrb[0].mxu0
      %v668 = vadd.f32 0.0, %v667
      %v669 = vpop.f32.mrb[0].mxu0
      %670 = vmatprep.mubr.bf16.mxu0 0
      %671 = vmatmul.mubr.bf16.gmra.mrb[0].mxu0 %v628
      %v672 = vpop.f32.mrb[0].mxu0
      %v673 = vadd.f32 0.0, %v672
      %v674 = vpop.f32.mrb[0].mxu0
      %v675 = vpop.f32.mrb[0].mxu0
      %v676 = vpop.f32.mrb[0].mxu0
      %677 = vdwg.mxu0
      %v678 = vadd.f32 %v584, %v665
      %v679 = vadd.f32 %v585, %v668
      %v680 = vadd.f32 %v586, %v673
      %v681 = vld [vmem:[%s2] sm:$0x1]
      %v683 = vlaneseq
      %v684 = vshrl.u32 %v683, 7
      %v685 = vsub.s32 0, %v684
      %v686 = vrot.slane %v681, %v685
      %v688 = vadd.f32 %v678, %v686
      %v689 = vadd.f32 %v679, %v686
      %v690 = vadd.f32 %v680, %v686
      %v691 = vmax.f32 %v688, 0.0
      %v692 = vmax.f32 %v689, 0.0
      %v693 = vmax.f32 %v690, 0.0
      %v694 = vld [vmem:[%s3] sm:$0x1]
      %v696 = vlaneseq
      %v697 = vshrl.u32 %v696, 7
      %v698 = vsub.s32 0, %v697
      %v699 = vrot.slane %v694, %v698
      %v701 = vadd.f32 %v691, %v699
      %v702 = vadd.f32 %v692, %v699
      %v703 = vadd.f32 %v693, %v699
      %704 = vst.msk [vmem:[%s197] sm:$0xff] %vm262, %v701
      %705 = vst.msk [vmem:[%s197 + $0x8] sm:$0xff] %vm262, %v702
      %706 = vst.msk [vmem:[%s197 + $0x10] sm:$0xff] %vm262, %v703
      %p707 = scmp.lt.s32.totalorder %s15, 1
      %s708 = scalar_select %p707, %s15, 1
      %s709 = smul.addr %s708, 3
      %s710 = smul.addr %s709, 8
      %s711 = scalar_lea.vmem %s4, %s710
      // Predicated region
      $region37: #{x_vector_forward.7} parent=35 // pred_check
        %p712 = pneg %p122
      $region38: #{x_vector_forward.7} parent=35 // pred_check_branch
        %714 = sbr.rel (%p712) target = $region40
      $region39: #{x_vector_forward.7} parent=35 // pred_region
        _
      $region40: #{x_vector_forward.7} parent=35 // pred_fallthru
        _
    $region36: #{x_vector_forward.7} parent=5 // pred_fallthru
      _
    %p715 = scmp.le.s32.totalorder 2, %s10
    // Predicated region
    $region41: #{x_vector_forward.7} parent=5 // pred_check
      %p716 = pneg %p715
    $region42: #{x_vector_forward.7} parent=5 // pred_check_branch
      %718 = sbr.rel (%p716) target = $region44
    $region43: #{x_vector_forward.7} parent=5 // pred_region
      %s719 = ssub.s32 %s10, 2
      // Predicated region
      $region45: #{x_vector_forward.7} parent=43 // pred_check
        %p720 = pneg %p128
      $region46: #{x_vector_forward.7} parent=43 // pred_check_branch
        %722 = sbr.rel (%p720) target = $region48
      $region47: #{x_vector_forward.7} parent=43 // pred_region
        %p723 = scmp.lt.s32.totalorder %s16, 1
        %s724 = scalar_select %p723, %s16, 1
        %s725 = smul.addr %s724, 3
        %s726 = smul.addr %s725, 8
        %s727 = scalar_lea.vmem %s4, %s726
      $region48: #{x_vector_forward.7} parent=43 // pred_fallthru
        _
    $region44: #{x_vector_forward.7} parent=5 // pred_fallthru
      _
  $region6: #{x_vector_forward.7} parent=0 // loop_footer
    %s14 = sadd.s32 1, %s10
  $region7: #{x_vector_forward.7} parent=0 // loop_footer_branch
    %9 = sbr.rel target = $region3
  $region8: #{x_vector_forward.7} parent=0 // loop_exit
    _

// kernel: x_vector_forward.6
$region0: #{x_vector_forward.6}
  #allocation0 [shape = 'u32[]', space=smem, size = 0x4, offset = 0x4, fixed_abs, tag = 'smem constant byte address 0x4 - core index']
  #allocation1 [shape = 'u32[144,128]{1,0:T(1,128)}', space=vmem, size = 0x12000, scoped, tag = 'internal scratch']
  %s0 = inlined_call_operand.vmem [shape: f32[2,32,128], index: 0, kind: input, shape index: {}]
  %s1 = inlined_call_operand.vmem [shape: bf16[5,128,64], index: 1, kind: input, shape index: {}]
  %s2 = inlined_call_operand.vmem [shape: f32[1,64], index: 2, kind: input, shape index: {}]
  %s3 = inlined_call_operand.vmem [shape: f32[1,64], index: 3, kind: input, shape index: {}]
  %s4 = inlined_call_operand.vmem [shape: f32[2,28,64], index: 4, kind: output, shape index: {}]
  %s5 = sld [smem:[#allocation0]]
  $region49: #{x_vector_forward.6} parent=0
    _
  %s7 = ssub.s32 1, %s5
  %s8 = scalar_select 0, %s7, %s5
  loop: start=0, step=1, limit=4
  $region2: #{x_vector_forward.6} parent=0 // loop_pre_header
    _
  $region3: #{x_vector_forward.6} parent=0 // loop_header
    %s10 = sphi 0, %s14
    %p11 = scmp.ge.s32.totalorder %s10, 4
    %s20 = sphi 0, %s22
    %s23 = sphi 0, %s20
    %s24 = sphi 0, %s23
    %s40 = sphi 0, %s24
    %s44 = sphi 0, %s44
    %s46 = sphi 0, %s44
    %s47 = sphi 0, %s46
    %s61 = sphi 0, %s47
    %s65 = sphi 0, %s65
    %s67 = sphi 0, %s65
    %s68 = sphi 0, %s67
    %s82 = sphi 0, %s68
    %s86 = sphi 0, %s86
    %s88 = sphi 0, %s86
    %s89 = sphi 0, %s88
    %s103 = sphi 0, %s89
    %s109 = sphi 0, %s111
    %s112 = sphi 0, %s109
    %s113 = sphi 0, %s112
    %s129 = sphi 0, %s113
  $region4: #{x_vector_forward.6} parent=0 // loop_header_branch
    %13 = sbr.rel (%p11) target = $region8
  $region5: #{x_vector_forward.6} parent=0 // loop_body
    %s15 = ssub.s32 %s10, 1
    %s16 = ssub.s32 %s10, 2
    %s17 = sadd.s32 %s10, 1
    %s18 = ssub.s32 %s10, %s17
    %p19 = scmp.eq.s32.totalorder %s18, 0
    %s21 = sadd.s32 %s20, 1
    %s22 = scalar_select %p19, %s20, %s21
    %p25 = pneg %p19
    %p26 = scmp.eq.s32.totalorder %s10, 1
    %p27 = por %p25, %p26
    %p28 = scmp.ne.s32.totalorder %s20, %s23
    %p29 = scmp.eq.s32.totalorder %s10, 0
    %p30 = por %p28, %p29
    %p31 = scmp.ne.s32.totalorder %s20, %s23
    %p32 = scmp.eq.s32.totalorder %s15, 1
    %p33 = por %p31, %p32
    %p34 = scmp.ne.s32.totalorder %s23, %s24
    %p35 = scmp.eq.s32.totalorder %s15, 0
    %p36 = por %p34, %p35
    %p37 = scmp.ne.s32.totalorder %s23, %s24
    %p38 = scmp.eq.s32.totalorder %s16, 1
    %p39 = por %p37, %p38
    %p41 = scmp.ne.s32.totalorder %s24, %s40
    %p42 = scmp.eq.s32.totalorder %s16, 0
    %p43 = por %p41, %p42
    %s45 = sadd.s32 %s44, 1
    %p48 = scmp.eq.s32.totalorder %s10, 1
    %p49 = scmp.ne.s32.totalorder %s44, %s46
    %p50 = scmp.eq.s32.totalorder %s10, 0
    %p51 = por %p49, %p50
    %p52 = scmp.ne.s32.totalorder %s44, %s46
    %p53 = scmp.eq.s32.totalorder %s15, 1
    %p54 = por %p52, %p53
    %p55 = scmp.ne.s32.totalorder %s46, %s47
    %p56 = scmp.eq.s32.totalorder %s15, 0
    %p57 = por %p55, %p56
    %p58 = scmp.ne.s32.totalorder %s46, %s47
    %p59 = scmp.eq.s32.totalorder %s16, 1
    %p60 = por %p58, %p59
    %p62 = scmp.ne.s32.totalorder %s47, %s61
    %p63 = scmp.eq.s32.totalorder %s16, 0
    %p64 = por %p62, %p63
    %s66 = sadd.s32 %s65, 1
    %p69 = scmp.eq.s32.totalorder %s10, 1
    %p70 = scmp.ne.s32.totalorder %s65, %s67
    %p71 = scmp.eq.s32.totalorder %s10, 0
    %p72 = por %p70, %p71
    %p73 = scmp.ne.s32.totalorder %s65, %s67
    %p74 = scmp.eq.s32.totalorder %s15, 1
    %p75 = por %p73, %p74
    %p76 = scmp.ne.s32.totalorder %s67, %s68
    %p77 = scmp.eq.s32.totalorder %s15, 0
    %p78 = por %p76, %p77
    %p79 = scmp.ne.s32.totalorder %s67, %s68
    %p80 = scmp.eq.s32.totalorder %s16, 1
    %p81 = por %p79, %p80
    %p83 = scmp.ne.s32.totalorder %s68, %s82
    %p84 = scmp.eq.s32.totalorder %s16, 0
    %p85 = por %p83, %p84
    %s87 = sadd.s32 %s86, 1
    %p90 = scmp.eq.s32.totalorder %s10, 1
    %p91 = scmp.ne.s32.totalorder %s86, %s88
    %p92 = scmp.eq.s32.totalorder %s10, 0
    %p93 = por %p91, %p92
    %p94 = scmp.ne.s32.totalorder %s86, %s88
    %p95 = scmp.eq.s32.totalorder %s15, 1
    %p96 = por %p94, %p95
    %p97 = scmp.ne.s32.totalorder %s88, %s89
    %p98 = scmp.eq.s32.totalorder %s15, 0
    %p99 = por %p97, %p98
    %p100 = scmp.ne.s32.totalorder %s88, %s89
    %p101 = scmp.eq.s32.totalorder %s16, 1
    %p102 = por %p100, %p101
    %p104 = scmp.ne.s32.totalorder %s89, %s103
    %p105 = scmp.eq.s32.totalorder %s16, 0
    %p106 = por %p104, %p105
    %s107 = ssub.s32 %s10, %s17
    %p108 = scmp.eq.s32.totalorder %s107, 0
    %s110 = sadd.s32 %s109, 1
    %s111 = scalar_select %p108, %s109, %s110
    %p114 = pneg %p108
    %p115 = scmp.eq.s32.totalorder %s10, 1
    %p116 = por %p114, %p115
    %p117 = scmp.ne.s32.totalorder %s109, %s112
    %p118 = scmp.eq.s32.totalorder %s10, 0
    %p119 = por %p117, %p118
    %p120 = scmp.ne.s32.totalorder %s109, %s112
    %p121 = scmp.eq.s32.totalorder %s15, 1
    %p122 = por %p120, %p121
    %p123 = scmp.ne.s32.totalorder %s112, %s113
    %p124 = scmp.eq.s32.totalorder %s15, 0
    %p125 = por %p123, %p124
    %p126 = scmp.ne.s32.totalorder %s112, %s113
    %p127 = scmp.eq.s32.totalorder %s16, 1
    %p128 = por %p126, %p127
    %p130 = scmp.ne.s32.totalorder %s113, %s129
    %p131 = scmp.eq.s32.totalorder %s16, 0
    %p132 = por %p130, %p131
    %p133 = scmp.le.s32.totalorder 1, %s10
    %p134 = scmp.lt.s32.totalorder %s10, 3
    %p135 = pnand %p133, %p134
    %p136 = pneg %p135
    // Predicated region
    $region9: #{x_vector_forward.6} parent=5 // pred_check
      _
    $region10: #{x_vector_forward.6} parent=5 // pred_check_branch
      %138 = sbr.rel (%p135) target = $region12
    $region11: #{x_vector_forward.6} parent=5 // pred_region
      %s139 = ssub.s32 %s10, 1
      // Predicated region
      $region13: #{x_vector_forward.6} parent=11 // pred_check
        %p140 = pneg %p57
      $region14: #{x_vector_forward.6} parent=11 // pred_check_branch
        %142 = sbr.rel (%p140) target = $region16
      $region15: #{x_vector_forward.6} parent=11 // pred_region
        _
      $region16: #{x_vector_forward.6} parent=11 // pred_fallthru
        _
      // Predicated region
      $region17: #{x_vector_forward.6} parent=11 // pred_check
        %p143 = pneg %p78
      $region18: #{x_vector_forward.6} parent=11 // pred_check_branch
        %145 = sbr.rel (%p143) target = $region20
      $region19: #{x_vector_forward.6} parent=11 // pred_region
        _
      $region20: #{x_vector_forward.6} parent=11 // pred_fallthru
        _
      // Predicated region
      $region21: #{x_vector_forward.6} parent=11 // pred_check
        %p146 = pneg %p99
      $region22: #{x_vector_forward.6} parent=11 // pred_check_branch
        %148 = sbr.rel (%p146) target = $region24
      $region23: #{x_vector_forward.6} parent=11 // pred_region
        _
      $region24: #{x_vector_forward.6} parent=11 // pred_fallthru
        _
    $region12: #{x_vector_forward.6} parent=5 // pred_fallthru
      _
    %p149 = scmp.lt.s32.totalorder %s10, 2
    // Predicated region
    $region25: #{x_vector_forward.6} parent=5 // pred_check
      %p150 = pneg %p149
    $region26: #{x_vector_forward.6} parent=5 // pred_check_branch
      %152 = sbr.rel (%p150) target = $region28
    $region27: #{x_vector_forward.6} parent=5 // pred_region
      // Predicated region
      $region29: #{x_vector_forward.6} parent=27 // pred_check
        %p153 = pneg %p30
      $region30: #{x_vector_forward.6} parent=27 // pred_check_branch
        %155 = sbr.rel (%p153) target = $region32
      $region31: #{x_vector_forward.6} parent=27 // pred_region
        %p156 = scmp.lt.s32.totalorder %s10, 1
        %s157 = scalar_select %p156, %s10, 1
        %s158 = smul.addr %s157, 4
        %s159 = smul.addr %s158, 8
        %s160 = scalar_lea.vmem %s0, %s159
      $region32: #{x_vector_forward.6} parent=27 // pred_fallthru
        _
    $region28: #{x_vector_forward.6} parent=5 // pred_fallthru
      _
    %p161 = scmp.le.s32.totalorder 1, %s10
    %p162 = scmp.lt.s32.totalorder %s10, 3
    %p163 = pnand %p161, %p162
    %p164 = pneg %p163
    // Predicated region
    $region33: #{x_vector_forward.6} parent=5 // pred_check
      _
    $region34: #{x_vector_forward.6} parent=5 // pred_check_branch
      %166 = sbr.rel (%p163) target = $region36
    $region35: #{x_vector_forward.6} parent=5 // pred_region
      %s167 = ssub.s32 %s10, 1
      %p168 = scmp.lt.s32.totalorder %s15, 1
      %s169 = scalar_select %p168, %s15, 1
      %s170 = smul.addr %s169, 4
      %s171 = smul.addr %s170, 8
      %s172 = scalar_lea.vmem %s0, %s171
      %p173 = pneg %p36
      %p174 = pneg %p33
      %p175 = pneg %p57
      %p176 = pneg %p54
      %p177 = pneg %p78
      %p178 = pneg %p75
      %p179 = pneg %p99
      %p180 = pneg %p96
      %p181 = pneg %p125
      %p182 = pneg %p122
      %p183 = scmp.lt.s32.totalorder %s15, 1
      %s184 = scalar_select %p183, %s15, 1
      %s185 = smul.addr %s184, 4
      %s186 = smul.addr %s185, 8
      %s187 = scalar_lea.vmem %s4, %s186
      %p188 = scmp.lt.s32.totalorder %s15, 1
      %s189 = scalar_select %p188, %s15, 1
      %s190 = smul.addr %s189, 4
      %s191 = smul.addr %s190, 8
      %s192 = scalar_lea.vmem %s0, %s191
      %p193 = scmp.lt.s32.totalorder %s15, 1
      %s194 = scalar_select %p193, %s15, 1
      %s195 = smul.addr %s194, 4
      %s196 = smul.addr %s195, 8
      %s197 = scalar_lea.vmem %s4, %s196
      %v199 = vld [vmem:[%s192] sm:$0xff]
      %v200 = vld [vmem:[%s192 + $0x8] sm:$0xff]
      %v201 = vld [vmem:[%s192 + $0x10] sm:$0xff]
      %v202 = vld [vmem:[%s192 + $0x18] sm:$0xff]
      %v203 = vadd.f32 %v199, 1e-06
      %v204 = vadd.f32 %v200, 1e-06
      %v205 = vadd.f32 %v201, 1e-06
      %v206 = vadd.f32 %v202, 1e-06
      %v207 = vlog2.pop %v203
      %v208 = vmul.f32 %v207, 0.6931472
      %v209 = vlog2.pop %v204
      %v210 = vmul.f32 %v209, 0.6931472
      %v211 = vlog2.pop %v205
      %v212 = vmul.f32 %v211, 0.6931472
      %v213 = vlog2.pop %v206
      %v214 = vmul.f32 %v213, 0.6931472
      %v215 = vadd.f32 %v208, %v210
      %v216 = vadd.f32 %v215, %v212
      %v217 = vadd.f32 %v216, %v214
      %v218 = vrot.slane %v217, 4
      %v219 = vadd.f32 %v217, %v218
      %v220 = vrot.slane %v219, 2
      %v221 = vadd.f32 %v219, %v220
      %v222 = vrot.slane %v221, 1
      %v223 = vadd.f32 %v221, %v222
      %v224 = vrcp.pop 32.0
      %v225 = vmul.f32 %v223, %v224
      %v226 = vsub.f32 %v208, %v225
      %v227 = vsub.f32 %v210, %v225
      %v228 = vsub.f32 %v212, %v225
      %v229 = vsub.f32 %v214, %v225
      %v230 = vmul.f32 %v226, %v226
      %v231 = vmul.f32 %v227, %v227
      %v232 = vmul.f32 %v228, %v228
      %v233 = vmul.f32 %v229, %v229
      %v234 = vadd.f32 %v230, %v231
      %v235 = vadd.f32 %v234, %v232
      %v236 = vadd.f32 %v235, %v233
      %v237 = vrot.slane %v236, 4
      %v238 = vadd.f32 %v236, %v237
      %v239 = vrot.slane %v238, 2
      %v240 = vadd.f32 %v238, %v239
      %v241 = vrot.slane %v240, 1
      %v242 = vadd.f32 %v240, %v241
      %v243 = vmul.f32 %v242, %v224
      %v244 = vadd.f32 %v243, 1e-05
      %v245 = vrsqrt.pop %v244
      %v246 = vmul.f32 %v226, %v245
      %v247 = vmul.f32 %v227, %v245
      %v248 = vmul.f32 %v228, %v245
      %v249 = vmul.f32 %v229, %v245
      %v250 = vpack.c.bf16 %v247, %v246
      %v251 = vpack.c.bf16 %v249, %v248
      %v252 = vld [vmem:[%s1] sm:$0xf]
      %v253 = vld [vmem:[%s1 + $0x4] sm:$0xf]
      %v254 = vld [vmem:[%s1 + $0x8] sm:$0xf]
      %v255 = vld [vmem:[%s1 + $0xc] sm:$0xf]
      %v256 = vld [vmem:[%s1 + $0x10] sm:$0xf]
      %v257 = vld [vmem:[%s1 + $0x14] sm:$0xf]
      %v258 = vld [vmem:[%s1 + $0x18] sm:$0xf]
      %v259 = vld [vmem:[%s1 + $0x1c] sm:$0xf]
      %v260 = vld [vmem:[%s1 + $0x20] sm:$0xf]
      %v261 = vld [vmem:[%s1 + $0x24] sm:$0xf]
      %v262 = vld [vmem:[%s1 + $0x28] sm:$0xf]
      %v263 = vld [vmem:[%s1 + $0x2c] sm:$0xf]
      %v264 = vld [vmem:[%s1 + $0x30] sm:$0xf]
      %v265 = vld [vmem:[%s1 + $0x34] sm:$0xf]
      %v266 = vld [vmem:[%s1 + $0x38] sm:$0xf]
      %v267 = vld [vmem:[%s1 + $0x3c] sm:$0xf]
      %s268 = scalar_lea.vmem %s1, 64
      %v269 = vld [vmem:[%s268] sm:$0xf]
      %v270 = vld [vmem:[%s268 + $0x4] sm:$0xf]
      %v271 = vld [vmem:[%s268 + $0x8] sm:$0xf]
      %v272 = vld [vmem:[%s268 + $0xc] sm:$0xf]
      %v273 = vld [vmem:[%s268 + $0x10] sm:$0xf]
      %v274 = vld [vmem:[%s268 + $0x14] sm:$0xf]
      %v275 = vld [vmem:[%s268 + $0x18] sm:$0xf]
      %v276 = vld [vmem:[%s268 + $0x1c] sm:$0xf]
      %v277 = vld [vmem:[%s268 + $0x20] sm:$0xf]
      %v278 = vld [vmem:[%s268 + $0x24] sm:$0xf]
      %v279 = vld [vmem:[%s268 + $0x28] sm:$0xf]
      %v280 = vld [vmem:[%s268 + $0x2c] sm:$0xf]
      %v281 = vld [vmem:[%s268 + $0x30] sm:$0xf]
      %v282 = vld [vmem:[%s268 + $0x34] sm:$0xf]
      %v283 = vld [vmem:[%s268 + $0x38] sm:$0xf]
      %v284 = vld [vmem:[%s268 + $0x3c] sm:$0xf]
      %vm285 = vsmask.f32 7424
      %v287 = vshrl.u32 %v250, 16
      %v289 = vshll.u32 %v250, 16
      %v291 = vrot.slane %v289, 1
      %v292 = vor.u32 %v287, %v291
      %v294 = vshll.u32 %v251, 16
      %v296 = vrot.slane %v294, 1
      %v297 = vsel %vm285, %v292, %v296
      %v298 = vshrl.u32 %v251, 16
      %v300 = vor.u32 %v298, %v296
      %v319 = vunpack.c.l.b16 %v269
      %v320 = vunpack.c.l.b16 %v270
      %v321 = vunpack.c.l.b16 %v271
      %v322 = vunpack.c.l.b16 %v272
      %v323 = vunpack.c.l.b16 %v273
      %v324 = vunpack.c.l.b16 %v274
      %v325 = vunpack.c.l.b16 %v275
      %v326 = vunpack.c.l.b16 %v276
      %v327 = vunpack.c.l.b16 %v277
      %v328 = vunpack.c.l.b16 %v278
      %v329 = vunpack.c.l.b16 %v279
      %v330 = vunpack.c.l.b16 %v280
      %v331 = vunpack.c.l.b16 %v281
      %v332 = vunpack.c.l.b16 %v282
      %v333 = vunpack.c.l.b16 %v283
      %v334 = vunpack.c.l.b16 %v284
      %v335 = vpack.c.b16 %v320, %v319
      %v336 = vpack.c.b16 %v322, %v321
      %v337 = vpack.c.b16 %v324, %v323
      %v338 = vpack.c.b16 %v326, %v325
      %v339 = vpack.c.b16 %v328, %v327
      %v340 = vpack.c.b16 %v330, %v329
      %v341 = vpack.c.b16 %v332, %v331
      %v342 = vpack.c.b16 %v334, %v333
      %351 = vmatprep.subr.bf16.mxu0 0
      %352 = vmatpush1.bf16.msra.mxu0 %v335
      %353 = vmatprep.subr.bf16.mxu0 0
      %354 = vmatpush1.bf16.msra.mxu0 %v336
      %355 = vmatprep.subr.bf16.mxu0 0
      %356 = vmatpush1.bf16.msra.mxu0 %v337
      %357 = vmatprep.subr.bf16.mxu0 0
      %358 = vmatpush1.bf16.msra.mxu0 %v338
      %359 = vmatprep.subr.bf16.mxu0 0
      %360 = vmatpush1.bf16.msra.mxu0 %v339
      %361 = vmatprep.subr.bf16.mxu0 0
      %362 = vmatpush1.bf16.msra.mxu0 %v340
      %363 = vmatprep.subr.bf16.mxu0 0
      %364 = vmatpush1.bf16.msra.mxu0 %v341
      %365 = vmatprep.subr.bf16.mxu0 0
      %366 = vmatpush1.bf16.msra.mxu0 %v342
      %367 = vmatprep.subr.bf16.mxu0 0
      %368 = vmatpush1.bf16.msra.mxu0 0
      %369 = vmatprep.subr.bf16.mxu0 0
      %370 = vmatpush1.bf16.msra.mxu0 0
      %371 = vmatprep.subr.bf16.mxu0 0
      %372 = vmatpush1.bf16.msra.mxu0 0
      %373 = vmatprep.subr.bf16.mxu0 0
      %374 = vmatpush1.bf16.msra.mxu0 0
      %375 = vmatprep.subr.bf16.mxu0 0
      %376 = vmatpush1.bf16.msra.mxu0 0
      %377 = vmatprep.subr.bf16.mxu0 0
      %378 = vmatpush1.bf16.msra.mxu0 0
      %379 = vmatprep.subr.bf16.mxu0 0
      %380 = vmatpush1.bf16.msra.mxu0 0
      %381 = vmatprep.subr.bf16.mxu0 0
      %382 = vmatpush1.bf16.msra.mxu0 0
      %383 = vmatprep.mubr.bf16.mxu0 0
      %384 = vmatmul.mubr.bf16.gmra.mrb[0].mxu0 %v297
      %v385 = vpop.f32.mrb[0].mxu0
      %v386 = vadd.f32 0.0, %v385
      %v387 = vpop.f32.mrb[0].mxu0
      %v388 = vpop.f32.mrb[0].mxu0
      %v389 = vadd.f32 0.0, %v388
      %v390 = vpop.f32.mrb[0].mxu0
      %391 = vmatprep.mubr.bf16.mxu0 0
      %392 = vmatmul.mubr.bf16.gmra.mrb[0].mxu0 %v300
      %v393 = vpop.f32.mrb[0].mxu0
      %v394 = vadd.f32 0.0, %v393
      %v395 = vpop.f32.mrb[0].mxu0
      %v396 = vpop.f32.mrb[0].mxu0
      %v397 = vadd.f32 0.0, %v396
      %v398 = vpop.f32.mrb[0].mxu0
      %399 = vdwg.mxu0
      %v416 = vunpack.c.l.b16 %v252
      %v417 = vunpack.c.l.b16 %v253
      %v418 = vunpack.c.l.b16 %v254
      %v419 = vunpack.c.l.b16 %v255
      %v420 = vunpack.c.l.b16 %v256
      %v421 = vunpack.c.l.b16 %v257
      %v422 = vunpack.c.l.b16 %v258
      %v423 = vunpack.c.l.b16 %v259
      %v424 = vunpack.c.l.b16 %v260
      %v425 = vunpack.c.l.b16 %v261
      %v426 = vunpack.c.l.b16 %v262
      %v427 = vunpack.c.l.b16 %v263
      %v428 = vunpack.c.l.b16 %v264
      %v429 = vunpack.c.l.b16 %v265
      %v430 = vunpack.c.l.b16 %v266
      %v431 = vunpack.c.l.b16 %v267
      %v432 = vpack.c.b16 %v417, %v416
      %v433 = vpack.c.b16 %v419, %v418
      %v434 = vpack.c.b16 %v421, %v420
      %v435 = vpack.c.b16 %v423, %v422
      %v436 = vpack.c.b16 %v425, %v424
      %v437 = vpack.c.b16 %v427, %v426
      %v438 = vpack.c.b16 %v429, %v428
      %v439 = vpack.c.b16 %v431, %v430
      %448 = vmatprep.subr.bf16.mxu0 0
      %449 = vmatpush1.bf16.msra.mxu0 %v432
      %450 = vmatprep.subr.bf16.mxu0 0
      %451 = vmatpush1.bf16.msra.mxu0 %v433
      %452 = vmatprep.subr.bf16.mxu0 0
      %453 = vmatpush1.bf16.msra.mxu0 %v434
      %454 = vmatprep.subr.bf16.mxu0 0
      %455 = vmatpush1.bf16.msra.mxu0 %v435
      %456 = vmatprep.subr.bf16.mxu0 0
      %457 = vmatpush1.bf16.msra.mxu0 %v436
      %458 = vmatprep.subr.bf16.mxu0 0
      %459 = vmatpush1.bf16.msra.mxu0 %v437
      %460 = vmatprep.subr.bf16.mxu0 0
      %461 = vmatpush1.bf16.msra.mxu0 %v438
      %462 = vmatprep.subr.bf16.mxu0 0
      %463 = vmatpush1.bf16.msra.mxu0 %v439
      %464 = vmatprep.subr.bf16.mxu0 0
      %465 = vmatpush1.bf16.msra.mxu0 0
      %466 = vmatprep.subr.bf16.mxu0 0
      %467 = vmatpush1.bf16.msra.mxu0 0
      %468 = vmatprep.subr.bf16.mxu0 0
      %469 = vmatpush1.bf16.msra.mxu0 0
      %470 = vmatprep.subr.bf16.mxu0 0
      %471 = vmatpush1.bf16.msra.mxu0 0
      %472 = vmatprep.subr.bf16.mxu0 0
      %473 = vmatpush1.bf16.msra.mxu0 0
      %474 = vmatprep.subr.bf16.mxu0 0
      %475 = vmatpush1.bf16.msra.mxu0 0
      %476 = vmatprep.subr.bf16.mxu0 0
      %477 = vmatpush1.bf16.msra.mxu0 0
      %478 = vmatprep.subr.bf16.mxu0 0
      %479 = vmatpush1.bf16.msra.mxu0 0
      %480 = vmatprep.mubr.bf16.mxu0 0
      %481 = vmatmul.mubr.bf16.gmra.mrb[0].mxu0 %v250
      %v482 = vpop.f32.mrb[0].mxu0
      %v483 = vadd.f32 %v386, %v482
      %v484 = vpop.f32.mrb[0].mxu0
      %v485 = vpop.f32.mrb[0].mxu0
      %v486 = vadd.f32 %v389, %v485
      %v487 = vpop.f32.mrb[0].mxu0
      %488 = vmatprep.mubr.bf16.mxu0 0
      %489 = vmatmul.mubr.bf16.gmra.mrb[0].mxu0 %v251
      %v490 = vpop.f32.mrb[0].mxu0
      %v491 = vadd.f32 %v394, %v490
      %v492 = vpop.f32.mrb[0].mxu0
      %v493 = vpop.f32.mrb[0].mxu0
      %v494 = vadd.f32 %v397, %v493
      %v495 = vpop.f32.mrb[0].mxu0
      %496 = vdwg.mxu0
      %s497 = scalar_lea.vmem %s1, 128
      %v498 = vld [vmem:[%s497] sm:$0xf]
      %v499 = vld [vmem:[%s497 + $0x4] sm:$0xf]
      %v500 = vld [vmem:[%s497 + $0x8] sm:$0xf]
      %v501 = vld [vmem:[%s497 + $0xc] sm:$0xf]
      %v502 = vld [vmem:[%s497 + $0x10] sm:$0xf]
      %v503 = vld [vmem:[%s497 + $0x14] sm:$0xf]
      %v504 = vld [vmem:[%s497 + $0x18] sm:$0xf]
      %v505 = vld [vmem:[%s497 + $0x1c] sm:$0xf]
      %v506 = vld [vmem:[%s497 + $0x20] sm:$0xf]
      %v507 = vld [vmem:[%s497 + $0x24] sm:$0xf]
      %v508 = vld [vmem:[%s497 + $0x28] sm:$0xf]
      %v509 = vld [vmem:[%s497 + $0x2c] sm:$0xf]
      %v510 = vld [vmem:[%s497 + $0x30] sm:$0xf]
      %v511 = vld [vmem:[%s497 + $0x34] sm:$0xf]
      %v512 = vld [vmem:[%s497 + $0x38] sm:$0xf]
      %v513 = vld [vmem:[%s497 + $0x3c] sm:$0xf]
      %vm516 = vcmask 1046528
      %v517 = vrot.slane %v250, 1
      %v518 = vrot.slane %v251, 1
      %v519 = vsel %vm516, %v517, %v518
      %v538 = vunpack.c.l.b16 %v498
      %v539 = vunpack.c.l.b16 %v499
      %v540 = vunpack.c.l.b16 %v500
      %v541 = vunpack.c.l.b16 %v501
      %v542 = vunpack.c.l.b16 %v502
      %v543 = vunpack.c.l.b16 %v503
      %v544 = vunpack.c.l.b16 %v504
      %v545 = vunpack.c.l.b16 %v505
      %v546 = vunpack.c.l.b16 %v506
      %v547 = vunpack.c.l.b16 %v507
      %v548 = vunpack.c.l.b16 %v508
      %v549 = vunpack.c.l.b16 %v509
      %v550 = vunpack.c.l.b16 %v510
      %v551 = vunpack.c.l.b16 %v511
      %v552 = vunpack.c.l.b16 %v512
      %v553 = vunpack.c.l.b16 %v513
      %v554 = vpack.c.b16 %v539, %v538
      %v555 = vpack.c.b16 %v541, %v540
      %v556 = vpack.c.b16 %v543, %v542
      %v557 = vpack.c.b16 %v545, %v544
      %v558 = vpack.c.b16 %v547, %v546
      %v559 = vpack.c.b16 %v549, %v548
      %v560 = vpack.c.b16 %v551, %v550
      %v561 = vpack.c.b16 %v553, %v552
      %570 = vmatprep.subr.bf16.mxu0 0
      %571 = vmatpush1.bf16.msra.mxu0 %v554
      %572 = vmatprep.subr.bf16.mxu0 0
      %573 = vmatpush1.bf16.msra.mxu0 %v555
      %574 = vmatprep.subr.bf16.mxu0 0
      %575 = vmatpush1.bf16.msra.mxu0 %v556
      %576 = vmatprep.subr.bf16.mxu0 0
      %577 = vmatpush1.bf16.msra.mxu0 %v557
      %578 = vmatprep.subr.bf16.mxu0 0
      %579 = vmatpush1.bf16.msra.mxu0 %v558
      %580 = vmatprep.subr.bf16.mxu0 0
      %581 = vmatpush1.bf16.msra.mxu0 %v559
      %582 = vmatprep.subr.bf16.mxu0 0
      %583 = vmatpush1.bf16.msra.mxu0 %v560
      %584 = vmatprep.subr.bf16.mxu0 0
      %585 = vmatpush1.bf16.msra.mxu0 %v561
      %586 = vmatprep.subr.bf16.mxu0 0
      %587 = vmatpush1.bf16.msra.mxu0 0
      %588 = vmatprep.subr.bf16.mxu0 0
      %589 = vmatpush1.bf16.msra.mxu0 0
      %590 = vmatprep.subr.bf16.mxu0 0
      %591 = vmatpush1.bf16.msra.mxu0 0
      %592 = vmatprep.subr.bf16.mxu0 0
      %593 = vmatpush1.bf16.msra.mxu0 0
      %594 = vmatprep.subr.bf16.mxu0 0
      %595 = vmatpush1.bf16.msra.mxu0 0
      %596 = vmatprep.subr.bf16.mxu0 0
      %597 = vmatpush1.bf16.msra.mxu0 0
      %598 = vmatprep.subr.bf16.mxu0 0
      %599 = vmatpush1.bf16.msra.mxu0 0
      %600 = vmatprep.subr.bf16.mxu0 0
      %601 = vmatpush1.bf16.msra.mxu0 0
      %602 = vmatprep.mubr.bf16.mxu0 0
      %603 = vmatmul.mubr.bf16.gmra.mrb[0].mxu0 %v519
      %v604 = vpop.f32.mrb[0].mxu0
      %v605 = vadd.f32 0.0, %v604
      %v606 = vpop.f32.mrb[0].mxu0
      %v607 = vpop.f32.mrb[0].mxu0
      %v608 = vadd.f32 0.0, %v607
      %v609 = vpop.f32.mrb[0].mxu0
      %610 = vmatprep.mubr.bf16.mxu0 0
      %611 = vmatmul.mubr.bf16.gmra.mrb[0].mxu0 %v518
      %v612 = vpop.f32.mrb[0].mxu0
      %v613 = vadd.f32 0.0, %v612
      %v614 = vpop.f32.mrb[0].mxu0
      %v615 = vpop.f32.mrb[0].mxu0
      %v616 = vadd.f32 0.0, %v615
      %v617 = vpop.f32.mrb[0].mxu0
      %618 = vdwg.mxu0
      %v619 = vadd.f32 %v483, %v605
      %v620 = vadd.f32 %v486, %v608
      %v621 = vadd.f32 %v491, %v613
      %v622 = vadd.f32 %v494, %v616
      %s623 = scalar_lea.vmem %s1, 192
      %v624 = vld [vmem:[%s623] sm:$0xf]
      %v625 = vld [vmem:[%s623 + $0x4] sm:$0xf]
      %v626 = vld [vmem:[%s623 + $0x8] sm:$0xf]
      %v627 = vld [vmem:[%s623 + $0xc] sm:$0xf]
      %v628 = vld [vmem:[%s623 + $0x10] sm:$0xf]
      %v629 = vld [vmem:[%s623 + $0x14] sm:$0xf]
      %v630 = vld [vmem:[%s623 + $0x18] sm:$0xf]
      %v631 = vld [vmem:[%s623 + $0x1c] sm:$0xf]
      %v632 = vld [vmem:[%s623 + $0x20] sm:$0xf]
      %v633 = vld [vmem:[%s623 + $0x24] sm:$0xf]
      %v634 = vld [vmem:[%s623 + $0x28] sm:$0xf]
      %v635 = vld [vmem:[%s623 + $0x2c] sm:$0xf]
      %v636 = vld [vmem:[%s623 + $0x30] sm:$0xf]
      %v637 = vld [vmem:[%s623 + $0x34] sm:$0xf]
      %v638 = vld [vmem:[%s623 + $0x38] sm:$0xf]
      %v639 = vld [vmem:[%s623 + $0x3c] sm:$0xf]
      %vm640 = vsmask.f32 6400
      %v641 = vrot.slane %v287, 1
      %v642 = vrot.slane %v289, 2
      %v643 = vor.u32 %v641, %v642
      %v644 = vrot.slane %v298, 1
      %v645 = vrot.slane %v294, 2
      %v646 = vor.u32 %v644, %v645
      %v647 = vsel %vm640, %v643, %v646
      %v666 = vunpack.c.l.b16 %v624
      %v667 = vunpack.c.l.b16 %v625
      %v668 = vunpack.c.l.b16 %v626
      %v669 = vunpack.c.l.b16 %v627
      %v670 = vunpack.c.l.b16 %v628
      %v671 = vunpack.c.l.b16 %v629
      %v672 = vunpack.c.l.b16 %v630
      %v673 = vunpack.c.l.b16 %v631
      %v674 = vunpack.c.l.b16 %v632
      %v675 = vunpack.c.l.b16 %v633
      %v676 = vunpack.c.l.b16 %v634
      %v677 = vunpack.c.l.b16 %v635
      %v678 = vunpack.c.l.b16 %v636
      %v679 = vunpack.c.l.b16 %v637
      %v680 = vunpack.c.l.b16 %v638
      %v681 = vunpack.c.l.b16 %v639
      %v682 = vpack.c.b16 %v667, %v666
      %v683 = vpack.c.b16 %v669, %v668
      %v684 = vpack.c.b16 %v671, %v670
      %v685 = vpack.c.b16 %v673, %v672
      %v686 = vpack.c.b16 %v675, %v674
      %v687 = vpack.c.b16 %v677, %v676
      %v688 = vpack.c.b16 %v679, %v678
      %v689 = vpack.c.b16 %v681, %v680
      %698 = vmatprep.subr.bf16.mxu0 0
      %699 = vmatpush1.bf16.msra.mxu0 %v682
      %700 = vmatprep.subr.bf16.mxu0 0
      %701 = vmatpush1.bf16.msra.mxu0 %v683
      %702 = vmatprep.subr.bf16.mxu0 0
      %703 = vmatpush1.bf16.msra.mxu0 %v684
      %704 = vmatprep.subr.bf16.mxu0 0
      %705 = vmatpush1.bf16.msra.mxu0 %v685
      %706 = vmatprep.subr.bf16.mxu0 0
      %707 = vmatpush1.bf16.msra.mxu0 %v686
      %708 = vmatprep.subr.bf16.mxu0 0
      %709 = vmatpush1.bf16.msra.mxu0 %v687
      %710 = vmatprep.subr.bf16.mxu0 0
      %711 = vmatpush1.bf16.msra.mxu0 %v688
      %712 = vmatprep.subr.bf16.mxu0 0
      %713 = vmatpush1.bf16.msra.mxu0 %v689
      %714 = vmatprep.subr.bf16.mxu0 0
      %715 = vmatpush1.bf16.msra.mxu0 0
      %716 = vmatprep.subr.bf16.mxu0 0
      %717 = vmatpush1.bf16.msra.mxu0 0
      %718 = vmatprep.subr.bf16.mxu0 0
      %719 = vmatpush1.bf16.msra.mxu0 0
      %720 = vmatprep.subr.bf16.mxu0 0
      %721 = vmatpush1.bf16.msra.mxu0 0
      %722 = vmatprep.subr.bf16.mxu0 0
      %723 = vmatpush1.bf16.msra.mxu0 0
      %724 = vmatprep.subr.bf16.mxu0 0
      %725 = vmatpush1.bf16.msra.mxu0 0
      %726 = vmatprep.subr.bf16.mxu0 0
      %727 = vmatpush1.bf16.msra.mxu0 0
      %728 = vmatprep.subr.bf16.mxu0 0
      %729 = vmatpush1.bf16.msra.mxu0 0
      %730 = vmatprep.mubr.bf16.mxu0 0
      %731 = vmatmul.mubr.bf16.gmra.mrb[0].mxu0 %v647
      %v732 = vpop.f32.mrb[0].mxu0
      %v733 = vadd.f32 0.0, %v732
      %v734 = vpop.f32.mrb[0].mxu0
      %v735 = vpop.f32.mrb[0].mxu0
      %v736 = vadd.f32 0.0, %v735
      %v737 = vpop.f32.mrb[0].mxu0
      %738 = vmatprep.mubr.bf16.mxu0 0
      %739 = vmatmul.mubr.bf16.gmra.mrb[0].mxu0 %v646
      %v740 = vpop.f32.mrb[0].mxu0
      %v741 = vadd.f32 0.0, %v740
      %v742 = vpop.f32.mrb[0].mxu0
      %v743 = vpop.f32.mrb[0].mxu0
      %v744 = vadd.f32 0.0, %v743
      %v745 = vpop.f32.mrb[0].mxu0
      %746 = vdwg.mxu0
      %v747 = vadd.f32 %v619, %v733
      %v748 = vadd.f32 %v620, %v736
      %v749 = vadd.f32 %v621, %v741
      %v750 = vadd.f32 %v622, %v744
      %s751 = scalar_lea.vmem %s1, 256
      %v752 = vld [vmem:[%s751] sm:$0xf]
      %v753 = vld [vmem:[%s751 + $0x4] sm:$0xf]
      %v754 = vld [vmem:[%s751 + $0x8] sm:$0xf]
      %v755 = vld [vmem:[%s751 + $0xc] sm:$0xf]
      %v756 = vld [vmem:[%s751 + $0x10] sm:$0xf]
      %v757 = vld [vmem:[%s751 + $0x14] sm:$0xf]
      %v758 = vld [vmem:[%s751 + $0x18] sm:$0xf]
      %v759 = vld [vmem:[%s751 + $0x1c] sm:$0xf]
      %v760 = vld [vmem:[%s751 + $0x20] sm:$0xf]
      %v761 = vld [vmem:[%s751 + $0x24] sm:$0xf]
      %v762 = vld [vmem:[%s751 + $0x28] sm:$0xf]
      %v763 = vld [vmem:[%s751 + $0x2c] sm:$0xf]
      %v764 = vld [vmem:[%s751 + $0x30] sm:$0xf]
      %v765 = vld [vmem:[%s751 + $0x34] sm:$0xf]
      %v766 = vld [vmem:[%s751 + $0x38] sm:$0xf]
      %v767 = vld [vmem:[%s751 + $0x3c] sm:$0xf]
      %vm768 = vcmask 1045504
      %v769 = vrot.slane %v250, 2
      %v770 = vrot.slane %v251, 2
      %v771 = vsel %vm768, %v769, %v770
      %v790 = vunpack.c.l.b16 %v752
      %v791 = vunpack.c.l.b16 %v753
      %v792 = vunpack.c.l.b16 %v754
      %v793 = vunpack.c.l.b16 %v755
      %v794 = vunpack.c.l.b16 %v756
      %v795 = vunpack.c.l.b16 %v757
      %v796 = vunpack.c.l.b16 %v758
      %v797 = vunpack.c.l.b16 %v759
      %v798 = vunpack.c.l.b16 %v760
      %v799 = vunpack.c.l.b16 %v761
      %v800 = vunpack.c.l.b16 %v762
      %v801 = vunpack.c.l.b16 %v763
      %v802 = vunpack.c.l.b16 %v764
      %v803 = vunpack.c.l.b16 %v765
      %v804 = vunpack.c.l.b16 %v766
      %v805 = vunpack.c.l.b16 %v767
      %v806 = vpack.c.b16 %v791, %v790
      %v807 = vpack.c.b16 %v793, %v792
      %v808 = vpack.c.b16 %v795, %v794
      %v809 = vpack.c.b16 %v797, %v796
      %v810 = vpack.c.b16 %v799, %v798
      %v811 = vpack.c.b16 %v801, %v800
      %v812 = vpack.c.b16 %v803, %v802
      %v813 = vpack.c.b16 %v805, %v804
      %822 = vmatprep.subr.bf16.mxu0 0
      %823 = vmatpush1.bf16.msra.mxu0 %v806
      %824 = vmatprep.subr.bf16.mxu0 0
      %825 = vmatpush1.bf16.msra.mxu0 %v807
      %826 = vmatprep.subr.bf16.mxu0 0
      %827 = vmatpush1.bf16.msra.mxu0 %v808
      %828 = vmatprep.subr.bf16.mxu0 0
      %829 = vmatpush1.bf16.msra.mxu0 %v809
      %830 = vmatprep.subr.bf16.mxu0 0
      %831 = vmatpush1.bf16.msra.mxu0 %v810
      %832 = vmatprep.subr.bf16.mxu0 0
      %833 = vmatpush1.bf16.msra.mxu0 %v811
      %834 = vmatprep.subr.bf16.mxu0 0
      %835 = vmatpush1.bf16.msra.mxu0 %v812
      %836 = vmatprep.subr.bf16.mxu0 0
      %837 = vmatpush1.bf16.msra.mxu0 %v813
      %838 = vmatprep.subr.bf16.mxu0 0
      %839 = vmatpush1.bf16.msra.mxu0 0
      %840 = vmatprep.subr.bf16.mxu0 0
      %841 = vmatpush1.bf16.msra.mxu0 0
      %842 = vmatprep.subr.bf16.mxu0 0
      %843 = vmatpush1.bf16.msra.mxu0 0
      %844 = vmatprep.subr.bf16.mxu0 0
      %845 = vmatpush1.bf16.msra.mxu0 0
      %846 = vmatprep.subr.bf16.mxu0 0
      %847 = vmatpush1.bf16.msra.mxu0 0
      %848 = vmatprep.subr.bf16.mxu0 0
      %849 = vmatpush1.bf16.msra.mxu0 0
      %850 = vmatprep.subr.bf16.mxu0 0
      %851 = vmatpush1.bf16.msra.mxu0 0
      %852 = vmatprep.subr.bf16.mxu0 0
      %853 = vmatpush1.bf16.msra.mxu0 0
      %854 = vmatprep.mubr.bf16.mxu0 0
      %855 = vmatmul.mubr.bf16.gmra.mrb[0].mxu0 %v771
      %v856 = vpop.f32.mrb[0].mxu0
      %v857 = vadd.f32 0.0, %v856
      %v858 = vpop.f32.mrb[0].mxu0
      %v859 = vpop.f32.mrb[0].mxu0
      %v860 = vadd.f32 0.0, %v859
      %v861 = vpop.f32.mrb[0].mxu0
      %862 = vmatprep.mubr.bf16.mxu0 0
      %863 = vmatmul.mubr.bf16.gmra.mrb[0].mxu0 %v770
      %v864 = vpop.f32.mrb[0].mxu0
      %v865 = vadd.f32 0.0, %v864
      %v866 = vpop.f32.mrb[0].mxu0
      %v867 = vpop.f32.mrb[0].mxu0
      %v868 = vadd.f32 0.0, %v867
      %v869 = vpop.f32.mrb[0].mxu0
      %870 = vdwg.mxu0
      %v871 = vadd.f32 %v747, %v857
      %v872 = vadd.f32 %v748, %v860
      %v873 = vadd.f32 %v749, %v865
      %v874 = vadd.f32 %v750, %v868
      %v875 = vld [vmem:[%s2] sm:$0x1]
      %v877 = vlaneseq
      %v878 = vshrl.u32 %v877, 7
      %v879 = vsub.s32 0, %v878
      %v880 = vrot.slane %v875, %v879
      %v882 = vadd.f32 %v871, %v880
      %v883 = vadd.f32 %v872, %v880
      %v884 = vadd.f32 %v873, %v880
      %v885 = vadd.f32 %v874, %v880
      %v886 = vmax.f32 %v882, 0.0
      %v887 = vmax.f32 %v883, 0.0
      %v888 = vmax.f32 %v884, 0.0
      %v889 = vmax.f32 %v885, 0.0
      %v890 = vld [vmem:[%s3] sm:$0x1]
      %v892 = vlaneseq
      %v893 = vshrl.u32 %v892, 7
      %v894 = vsub.s32 0, %v893
      %v895 = vrot.slane %v890, %v894
      %v897 = vadd.f32 %v886, %v895
      %v898 = vadd.f32 %v887, %v895
      %v899 = vadd.f32 %v888, %v895
      %v900 = vadd.f32 %v889, %v895
      %vm901 = vcmask 523264
      %902 = vst.msk [vmem:[%s197] sm:$0xff] %vm901, %v897
      %903 = vst.msk [vmem:[%s197 + $0x8] sm:$0xff] %vm901, %v898
      %904 = vst.msk [vmem:[%s197 + $0x10] sm:$0xff] %vm901, %v899
      %vm905 = vcmask 519168
      %906 = vst.msk [vmem:[%s197 + $0x18] sm:$0xf] %vm905, %v900
      %p907 = scmp.lt.s32.totalorder %s15, 1
      %s908 = scalar_select %p907, %s15, 1
      %s909 = smul.addr %s908, 4
      %s910 = smul.addr %s909, 8
      %s911 = scalar_lea.vmem %s4, %s910
      // Predicated region
      $region37: #{x_vector_forward.6} parent=35 // pred_check
        %p912 = pneg %p122
      $region38: #{x_vector_forward.6} parent=35 // pred_check_branch
        %914 = sbr.rel (%p912) target = $region40
      $region39: #{x_vector_forward.6} parent=35 // pred_region
        _
      $region40: #{x_vector_forward.6} parent=35 // pred_fallthru
        _
    $region36: #{x_vector_forward.6} parent=5 // pred_fallthru
      _
    %p915 = scmp.le.s32.totalorder 2, %s10
    // Predicated region
    $region41: #{x_vector_forward.6} parent=5 // pred_check
      %p916 = pneg %p915
    $region42: #{x_vector_forward.6} parent=5 // pred_check_branch
      %918 = sbr.rel (%p916) target = $region44
    $region43: #{x_vector_forward.6} parent=5 // pred_region
      %s919 = ssub.s32 %s10, 2
      // Predicated region
      $region45: #{x_vector_forward.6} parent=43 // pred_check
        %p920 = pneg %p128
      $region46: #{x_vector_forward.6} parent=43 // pred_check_branch
        %922 = sbr.rel (%p920) target = $region48
      $region47: #{x_vector_forward.6} parent=43 // pred_region
        %p923 = scmp.lt.s32.totalorder %s16, 1
        %s924 = scalar_select %p923, %s16, 1
        %s925 = smul.addr %s924, 4
        %s926 = smul.addr %s925, 8
        %s927 = scalar_lea.vmem %s4, %s926
      $region48: #{x_vector_forward.6} parent=43 // pred_fallthru
        _
    $region44: #{x_vector_forward.6} parent=5 // pred_fallthru
      _
  $region6: #{x_vector_forward.6} parent=0 // loop_footer
    %s14 = sadd.s32 1, %s10
  $region7: #{x_vector_forward.6} parent=0 // loop_footer_branch
    %9 = sbr.rel target = $region3
  $region8: #{x_vector_forward.6} parent=0 // loop_exit
    _

// kernel: x_vector_forward.9
$region0: #{x_vector_forward.9}
  #allocation0 [shape = 'u32[]', space=smem, size = 0x4, offset = 0x4, fixed_abs, tag = 'smem constant byte address 0x4 - core index']
  #allocation1 [shape = 'u32[144,128]{1,0:T(1,128)}', space=vmem, size = 0x12000, scoped, tag = 'internal scratch']
  %s0 = inlined_call_operand.vmem [shape: f32[24,64], index: 0, kind: input, shape index: {}]
  %s1 = inlined_call_operand.vmem [shape: bf16[64,64], index: 1, kind: input, shape index: {}]
  %s2 = inlined_call_operand.vmem [shape: f32[1,64], index: 2, kind: input, shape index: {}]
  %s3 = inlined_call_operand.vmem [shape: bf16[64,128], index: 3, kind: input, shape index: {}]
  %s4 = inlined_call_operand.vmem [shape: f32[1,128], index: 4, kind: input, shape index: {}]
  %s5 = inlined_call_operand.vmem [shape: f32[24,128], index: 5, kind: output, shape index: {}]
  %s6 = sld [smem:[#allocation0]]
  $region30: #{x_vector_forward.9} parent=0
    _
  %s8 = ssub.s32 1, %s6
  %s9 = scalar_select 0, %s8, %s6
  // Predicated region
  $region2: #{x_vector_forward.9} parent=0 // pred_check
    _
  $region3: #{x_vector_forward.9} parent=0 // pred_check_branch
    %11 = sbr.rel (0) target = $region5
  $region4: #{x_vector_forward.9} parent=0 // pred_region
    _
  $region5: #{x_vector_forward.9} parent=0 // pred_fallthru
    _
  // Predicated region
  $region6: #{x_vector_forward.9} parent=0 // pred_check
    _
  $region7: #{x_vector_forward.9} parent=0 // pred_check_branch
    %13 = sbr.rel (0) target = $region9
  $region8: #{x_vector_forward.9} parent=0 // pred_region
    _
  $region9: #{x_vector_forward.9} parent=0 // pred_fallthru
    _
  // Predicated region
  $region10: #{x_vector_forward.9} parent=0 // pred_check
    _
  $region11: #{x_vector_forward.9} parent=0 // pred_check_branch
    %15 = sbr.rel (0) target = $region13
  $region12: #{x_vector_forward.9} parent=0 // pred_region
    _
  $region13: #{x_vector_forward.9} parent=0 // pred_fallthru
    _
  // Predicated region
  $region14: #{x_vector_forward.9} parent=0 // pred_check
    _
  $region15: #{x_vector_forward.9} parent=0 // pred_check_branch
    %17 = sbr.rel (0) target = $region17
  $region16: #{x_vector_forward.9} parent=0 // pred_region
    _
  $region17: #{x_vector_forward.9} parent=0 // pred_fallthru
    _
  // Predicated region
  $region18: #{x_vector_forward.9} parent=0 // pred_check
    _
  $region19: #{x_vector_forward.9} parent=0 // pred_check_branch
    %19 = sbr.rel (0) target = $region21
  $region20: #{x_vector_forward.9} parent=0 // pred_region
    _
  $region21: #{x_vector_forward.9} parent=0 // pred_fallthru
    _
  %v21 = vld [vmem:[%s0] sm:$0xff]
  %v22 = vld [vmem:[%s0 + $0x8] sm:$0xff]
  %v23 = vld [vmem:[%s0 + $0x10] sm:$0xff]
  %v24 = vpack.c.bf16 %v22, %v21
  %v25 = vpack.c.bf16 %v23, %v23
  %v26 = vld [vmem:[%s1] sm:$0xf]
  %v27 = vld [vmem:[%s1 + $0x4] sm:$0xf]
  %v28 = vld [vmem:[%s1 + $0x8] sm:$0xf]
  %v29 = vld [vmem:[%s1 + $0xc] sm:$0xf]
  %v30 = vld [vmem:[%s1 + $0x10] sm:$0xf]
  %v31 = vld [vmem:[%s1 + $0x14] sm:$0xf]
  %v32 = vld [vmem:[%s1 + $0x18] sm:$0xf]
  %v33 = vld [vmem:[%s1 + $0x1c] sm:$0xf]
  %v34 = vld [vmem:[%s2] sm:$0x1]
  %v36 = vlaneseq
  %v37 = vshrl.u32 %v36, 7
  %v38 = vsub.s32 0, %v37
  %v39 = vrot.slane %v34, %v38
  %v49 = vunpack.c.l.b16 %v26
  %v50 = vunpack.c.l.b16 %v27
  %v51 = vunpack.c.l.b16 %v28
  %v52 = vunpack.c.l.b16 %v29
  %v53 = vunpack.c.l.b16 %v30
  %v54 = vunpack.c.l.b16 %v31
  %v55 = vunpack.c.l.b16 %v32
  %v56 = vunpack.c.l.b16 %v33
  %v57 = vpack.c.b16 %v50, %v49
  %v58 = vpack.c.b16 %v52, %v51
  %v59 = vpack.c.b16 %v54, %v53
  %v60 = vpack.c.b16 %v56, %v55
  %vm65 = vcmask 523264
  %v67 = vsel %vm65, %v24, 0
  %v70 = vsel %vm65, %v25, 0
  %72 = vmatprep.subr.bf16.mxu0 0
  %73 = vmatpush1.bf16.msra.mxu0 %v57
  %74 = vmatprep.subr.bf16.mxu0 0
  %75 = vmatpush1.bf16.msra.mxu0 %v58
  %76 = vmatprep.subr.bf16.mxu0 0
  %77 = vmatpush1.bf16.msra.mxu0 %v59
  %78 = vmatprep.subr.bf16.mxu0 0
  %79 = vmatpush1.bf16.msra.mxu0 %v60
  %80 = vmatprep.subr.bf16.mxu0 0
  %81 = vmatpush1.bf16.msra.mxu0 0
  %82 = vmatprep.subr.bf16.mxu0 0
  %83 = vmatpush1.bf16.msra.mxu0 0
  %84 = vmatprep.subr.bf16.mxu0 0
  %85 = vmatpush1.bf16.msra.mxu0 0
  %86 = vmatprep.subr.bf16.mxu0 0
  %87 = vmatpush1.bf16.msra.mxu0 0
  %88 = vmatprep.subr.bf16.mxu0 0
  %89 = vmatpush1.bf16.msra.mxu0 0
  %90 = vmatprep.subr.bf16.mxu0 0
  %91 = vmatpush1.bf16.msra.mxu0 0
  %92 = vmatprep.subr.bf16.mxu0 0
  %93 = vmatpush1.bf16.msra.mxu0 0
  %94 = vmatprep.subr.bf16.mxu0 0
  %95 = vmatpush1.bf16.msra.mxu0 0
  %96 = vmatprep.subr.bf16.mxu0 0
  %97 = vmatpush1.bf16.msra.mxu0 0
  %98 = vmatprep.subr.bf16.mxu0 0
  %99 = vmatpush1.bf16.msra.mxu0 0
  %100 = vmatprep.subr.bf16.mxu0 0
  %101 = vmatpush1.bf16.msra.mxu0 0
  %102 = vmatprep.subr.bf16.mxu0 0
  %103 = vmatpush1.bf16.msra.mxu0 0
  %104 = vmatprep.mubr.bf16.mxu0 0
  %105 = vmatmul.mubr.bf16.gmra.mrb[0].mxu0 %v67
  %v106 = vpop.f32.mrb[0].mxu0
  %v107 = vadd.f32 %v39, %v106
  %v108 = vpop.f32.mrb[0].mxu0
  %v109 = vpop.f32.mrb[0].mxu0
  %v110 = vadd.f32 %v39, %v109
  %v111 = vpop.f32.mrb[0].mxu0
  %112 = vmatprep.mubr.bf16.mxu0 0
  %113 = vmatmul.mubr.bf16.gmra.mrb[0].mxu0 %v70
  %v114 = vpop.f32.mrb[0].mxu0
  %v115 = vadd.f32 %v39, %v114
  %v116 = vpop.f32.mrb[0].mxu0
  %v117 = vpop.f32.mrb[0].mxu0
  %v118 = vpop.f32.mrb[0].mxu0
  %119 = vdwg.mxu0
  %v120 = vmax.f32 %v107, 0.0
  %v121 = vmax.f32 %v110, 0.0
  %v122 = vmax.f32 %v115, 0.0
  %v123 = vpack.c.bf16 %v121, %v120
  %v124 = vpack.c.bf16 %v122, %v122
  %v125 = vld [vmem:[%s3] sm:$0xf]
  %v126 = vld [vmem:[%s3 + $0x4] sm:$0xf]
  %v127 = vld [vmem:[%s3 + $0x8] sm:$0xf]
  %v128 = vld [vmem:[%s3 + $0xc] sm:$0xf]
  %v129 = vld [vmem:[%s3 + $0x10] sm:$0xf]
  %v130 = vld [vmem:[%s3 + $0x14] sm:$0xf]
  %v131 = vld [vmem:[%s3 + $0x18] sm:$0xf]
  %v132 = vld [vmem:[%s3 + $0x1c] sm:$0xf]
  %v133 = vld [vmem:[%s4] sm:$0x1]
  %v135 = vlaneseq
  %v136 = vshrl.u32 %v135, 7
  %v137 = vsub.s32 0, %v136
  %v138 = vrot.slane %v133, %v137
  %v148 = vunpack.c.l.b16 %v125
  %v149 = vunpack.c.l.b16 %v126
  %v150 = vunpack.c.l.b16 %v127
  %v151 = vunpack.c.l.b16 %v128
  %v152 = vunpack.c.l.b16 %v129
  %v153 = vunpack.c.l.b16 %v130
  %v154 = vunpack.c.l.b16 %v131
  %v155 = vunpack.c.l.b16 %v132
  %v156 = vpack.c.b16 %v149, %v148
  %v157 = vpack.c.b16 %v151, %v150
  %v158 = vpack.c.b16 %v153, %v152
  %v159 = vpack.c.b16 %v155, %v154
  %v165 = vsel %vm65, %v123, 0
  %v168 = vsel %vm65, %v124, 0
  %170 = vmatprep.subr.bf16.mxu0 0
  %171 = vmatpush1.bf16.msra.mxu0 %v156
  %172 = vmatprep.subr.bf16.mxu0 0
  %173 = vmatpush1.bf16.msra.mxu0 %v157
  %174 = vmatprep.subr.bf16.mxu0 0
  %175 = vmatpush1.bf16.msra.mxu0 %v158
  %176 = vmatprep.subr.bf16.mxu0 0
  %177 = vmatpush1.bf16.msra.mxu0 %v159
  %178 = vmatprep.subr.bf16.mxu0 0
  %179 = vmatpush1.bf16.msra.mxu0 0
  %180 = vmatprep.subr.bf16.mxu0 0
  %181 = vmatpush1.bf16.msra.mxu0 0
  %182 = vmatprep.subr.bf16.mxu0 0
  %183 = vmatpush1.bf16.msra.mxu0 0
  %184 = vmatprep.subr.bf16.mxu0 0
  %185 = vmatpush1.bf16.msra.mxu0 0
  %186 = vmatprep.subr.bf16.mxu0 0
  %187 = vmatpush1.bf16.msra.mxu0 0
  %188 = vmatprep.subr.bf16.mxu0 0
  %189 = vmatpush1.bf16.msra.mxu0 0
  %190 = vmatprep.subr.bf16.mxu0 0
  %191 = vmatpush1.bf16.msra.mxu0 0
  %192 = vmatprep.subr.bf16.mxu0 0
  %193 = vmatpush1.bf16.msra.mxu0 0
  %194 = vmatprep.subr.bf16.mxu0 0
  %195 = vmatpush1.bf16.msra.mxu0 0
  %196 = vmatprep.subr.bf16.mxu0 0
  %197 = vmatpush1.bf16.msra.mxu0 0
  %198 = vmatprep.subr.bf16.mxu0 0
  %199 = vmatpush1.bf16.msra.mxu0 0
  %200 = vmatprep.subr.bf16.mxu0 0
  %201 = vmatpush1.bf16.msra.mxu0 0
  %202 = vmatprep.mubr.bf16.mxu0 0
  %203 = vmatmul.mubr.bf16.gmra.mrb[0].mxu0 %v165
  %v204 = vpop.f32.mrb[0].mxu0
  %v205 = vadd.f32 %v138, %v204
  %v206 = vpop.f32.mrb[0].mxu0
  %v207 = vpop.f32.mrb[0].mxu0
  %v208 = vadd.f32 %v138, %v207
  %v209 = vpop.f32.mrb[0].mxu0
  %210 = vmatprep.mubr.bf16.mxu0 0
  %211 = vmatmul.mubr.bf16.gmra.mrb[0].mxu0 %v168
  %v212 = vpop.f32.mrb[0].mxu0
  %v213 = vadd.f32 %v138, %v212
  %v214 = vpop.f32.mrb[0].mxu0
  %v215 = vpop.f32.mrb[0].mxu0
  %v216 = vpop.f32.mrb[0].mxu0
  %217 = vdwg.mxu0
  %v218 = vmax.f32 %v205, 0.0
  %v219 = vmax.f32 %v208, 0.0
  %v220 = vmax.f32 %v213, 0.0
  %221 = vst [vmem:[%s5] sm:$0xff] %v218
  %222 = vst [vmem:[%s5 + $0x8] sm:$0xff] %v219
  %223 = vst [vmem:[%s5 + $0x10] sm:$0xff] %v220
  // Predicated region
  $region22: #{x_vector_forward.9} parent=0 // pred_check
    _
  $region23: #{x_vector_forward.9} parent=0 // pred_check_branch
    %225 = sbr.rel (0) target = $region25
  $region24: #{x_vector_forward.9} parent=0 // pred_region
    _
  $region25: #{x_vector_forward.9} parent=0 // pred_fallthru
    _
  // Predicated region
  $region26: #{x_vector_forward.9} parent=0 // pred_check
    _
  $region27: #{x_vector_forward.9} parent=0 // pred_check_branch
    %227 = sbr.rel (0) target = $region29
  $region28: #{x_vector_forward.9} parent=0 // pred_region
    _
  $region29: #{x_vector_forward.9} parent=0 // pred_fallthru
    _

// kernel: x_vector_forward.8
$region0: #{x_vector_forward.8}
  #allocation0 [shape = 'u32[]', space=smem, size = 0x4, offset = 0x4, fixed_abs, tag = 'smem constant byte address 0x4 - core index']
  #allocation1 [shape = 'u32[144,128]{1,0:T(1,128)}', space=vmem, size = 0x12000, scoped, tag = 'internal scratch']
  %s0 = inlined_call_operand.vmem [shape: f32[2,24,64], index: 0, kind: input, shape index: {}]
  %s1 = inlined_call_operand.vmem [shape: bf16[7,64,64], index: 1, kind: input, shape index: {}]
  %s2 = inlined_call_operand.vmem [shape: f32[1,64], index: 2, kind: input, shape index: {}]
  %s3 = inlined_call_operand.vmem [shape: f32[1,64], index: 3, kind: input, shape index: {}]
  %s4 = inlined_call_operand.vmem [shape: f32[2,12,64], index: 4, kind: output, shape index: {}]
  %s5 = sld [smem:[#allocation0]]
  $region49: #{x_vector_forward.8} parent=0
    _
  %s7 = ssub.s32 1, %s5
  %s8 = scalar_select 0, %s7, %s5
  loop: start=0, step=1, limit=4
  $region2: #{x_vector_forward.8} parent=0 // loop_pre_header
    _
  $region3: #{x_vector_forward.8} parent=0 // loop_header
    %s10 = sphi 0, %s14
    %p11 = scmp.ge.s32.totalorder %s10, 4
    %s20 = sphi 0, %s22
    %s23 = sphi 0, %s20
    %s24 = sphi 0, %s23
    %s40 = sphi 0, %s24
    %s44 = sphi 0, %s44
    %s46 = sphi 0, %s44
    %s47 = sphi 0, %s46
    %s61 = sphi 0, %s47
    %s65 = sphi 0, %s65
    %s67 = sphi 0, %s65
    %s68 = sphi 0, %s67
    %s82 = sphi 0, %s68
    %s86 = sphi 0, %s86
    %s88 = sphi 0, %s86
    %s89 = sphi 0, %s88
    %s103 = sphi 0, %s89
    %s109 = sphi 0, %s111
    %s112 = sphi 0, %s109
    %s113 = sphi 0, %s112
    %s129 = sphi 0, %s113
  $region4: #{x_vector_forward.8} parent=0 // loop_header_branch
    %13 = sbr.rel (%p11) target = $region8
  $region5: #{x_vector_forward.8} parent=0 // loop_body
    %s15 = ssub.s32 %s10, 1
    %s16 = ssub.s32 %s10, 2
    %s17 = sadd.s32 %s10, 1
    %s18 = ssub.s32 %s10, %s17
    %p19 = scmp.eq.s32.totalorder %s18, 0
    %s21 = sadd.s32 %s20, 1
    %s22 = scalar_select %p19, %s20, %s21
    %p25 = pneg %p19
    %p26 = scmp.eq.s32.totalorder %s10, 1
    %p27 = por %p25, %p26
    %p28 = scmp.ne.s32.totalorder %s20, %s23
    %p29 = scmp.eq.s32.totalorder %s10, 0
    %p30 = por %p28, %p29
    %p31 = scmp.ne.s32.totalorder %s20, %s23
    %p32 = scmp.eq.s32.totalorder %s15, 1
    %p33 = por %p31, %p32
    %p34 = scmp.ne.s32.totalorder %s23, %s24
    %p35 = scmp.eq.s32.totalorder %s15, 0
    %p36 = por %p34, %p35
    %p37 = scmp.ne.s32.totalorder %s23, %s24
    %p38 = scmp.eq.s32.totalorder %s16, 1
    %p39 = por %p37, %p38
    %p41 = scmp.ne.s32.totalorder %s24, %s40
    %p42 = scmp.eq.s32.totalorder %s16, 0
    %p43 = por %p41, %p42
    %s45 = sadd.s32 %s44, 1
    %p48 = scmp.eq.s32.totalorder %s10, 1
    %p49 = scmp.ne.s32.totalorder %s44, %s46
    %p50 = scmp.eq.s32.totalorder %s10, 0
    %p51 = por %p49, %p50
    %p52 = scmp.ne.s32.totalorder %s44, %s46
    %p53 = scmp.eq.s32.totalorder %s15, 1
    %p54 = por %p52, %p53
    %p55 = scmp.ne.s32.totalorder %s46, %s47
    %p56 = scmp.eq.s32.totalorder %s15, 0
    %p57 = por %p55, %p56
    %p58 = scmp.ne.s32.totalorder %s46, %s47
    %p59 = scmp.eq.s32.totalorder %s16, 1
    %p60 = por %p58, %p59
    %p62 = scmp.ne.s32.totalorder %s47, %s61
    %p63 = scmp.eq.s32.totalorder %s16, 0
    %p64 = por %p62, %p63
    %s66 = sadd.s32 %s65, 1
    %p69 = scmp.eq.s32.totalorder %s10, 1
    %p70 = scmp.ne.s32.totalorder %s65, %s67
    %p71 = scmp.eq.s32.totalorder %s10, 0
    %p72 = por %p70, %p71
    %p73 = scmp.ne.s32.totalorder %s65, %s67
    %p74 = scmp.eq.s32.totalorder %s15, 1
    %p75 = por %p73, %p74
    %p76 = scmp.ne.s32.totalorder %s67, %s68
    %p77 = scmp.eq.s32.totalorder %s15, 0
    %p78 = por %p76, %p77
    %p79 = scmp.ne.s32.totalorder %s67, %s68
    %p80 = scmp.eq.s32.totalorder %s16, 1
    %p81 = por %p79, %p80
    %p83 = scmp.ne.s32.totalorder %s68, %s82
    %p84 = scmp.eq.s32.totalorder %s16, 0
    %p85 = por %p83, %p84
    %s87 = sadd.s32 %s86, 1
    %p90 = scmp.eq.s32.totalorder %s10, 1
    %p91 = scmp.ne.s32.totalorder %s86, %s88
    %p92 = scmp.eq.s32.totalorder %s10, 0
    %p93 = por %p91, %p92
    %p94 = scmp.ne.s32.totalorder %s86, %s88
    %p95 = scmp.eq.s32.totalorder %s15, 1
    %p96 = por %p94, %p95
    %p97 = scmp.ne.s32.totalorder %s88, %s89
    %p98 = scmp.eq.s32.totalorder %s15, 0
    %p99 = por %p97, %p98
    %p100 = scmp.ne.s32.totalorder %s88, %s89
    %p101 = scmp.eq.s32.totalorder %s16, 1
    %p102 = por %p100, %p101
    %p104 = scmp.ne.s32.totalorder %s89, %s103
    %p105 = scmp.eq.s32.totalorder %s16, 0
    %p106 = por %p104, %p105
    %s107 = ssub.s32 %s10, %s17
    %p108 = scmp.eq.s32.totalorder %s107, 0
    %s110 = sadd.s32 %s109, 1
    %s111 = scalar_select %p108, %s109, %s110
    %p114 = pneg %p108
    %p115 = scmp.eq.s32.totalorder %s10, 1
    %p116 = por %p114, %p115
    %p117 = scmp.ne.s32.totalorder %s109, %s112
    %p118 = scmp.eq.s32.totalorder %s10, 0
    %p119 = por %p117, %p118
    %p120 = scmp.ne.s32.totalorder %s109, %s112
    %p121 = scmp.eq.s32.totalorder %s15, 1
    %p122 = por %p120, %p121
    %p123 = scmp.ne.s32.totalorder %s112, %s113
    %p124 = scmp.eq.s32.totalorder %s15, 0
    %p125 = por %p123, %p124
    %p126 = scmp.ne.s32.totalorder %s112, %s113
    %p127 = scmp.eq.s32.totalorder %s16, 1
    %p128 = por %p126, %p127
    %p130 = scmp.ne.s32.totalorder %s113, %s129
    %p131 = scmp.eq.s32.totalorder %s16, 0
    %p132 = por %p130, %p131
    %p133 = scmp.le.s32.totalorder 1, %s10
    %p134 = scmp.lt.s32.totalorder %s10, 3
    %p135 = pnand %p133, %p134
    %p136 = pneg %p135
    // Predicated region
    $region9: #{x_vector_forward.8} parent=5 // pred_check
      _
    $region10: #{x_vector_forward.8} parent=5 // pred_check_branch
      %138 = sbr.rel (%p135) target = $region12
    $region11: #{x_vector_forward.8} parent=5 // pred_region
      %s139 = ssub.s32 %s10, 1
      // Predicated region
      $region13: #{x_vector_forward.8} parent=11 // pred_check
        %p140 = pneg %p57
      $region14: #{x_vector_forward.8} parent=11 // pred_check_branch
        %142 = sbr.rel (%p140) target = $region16
      $region15: #{x_vector_forward.8} parent=11 // pred_region
        _
      $region16: #{x_vector_forward.8} parent=11 // pred_fallthru
        _
      // Predicated region
      $region17: #{x_vector_forward.8} parent=11 // pred_check
        %p143 = pneg %p78
      $region18: #{x_vector_forward.8} parent=11 // pred_check_branch
        %145 = sbr.rel (%p143) target = $region20
      $region19: #{x_vector_forward.8} parent=11 // pred_region
        _
      $region20: #{x_vector_forward.8} parent=11 // pred_fallthru
        _
      // Predicated region
      $region21: #{x_vector_forward.8} parent=11 // pred_check
        %p146 = pneg %p99
      $region22: #{x_vector_forward.8} parent=11 // pred_check_branch
        %148 = sbr.rel (%p146) target = $region24
      $region23: #{x_vector_forward.8} parent=11 // pred_region
        _
      $region24: #{x_vector_forward.8} parent=11 // pred_fallthru
        _
    $region12: #{x_vector_forward.8} parent=5 // pred_fallthru
      _
    %p149 = scmp.lt.s32.totalorder %s10, 2
    // Predicated region
    $region25: #{x_vector_forward.8} parent=5 // pred_check
      %p150 = pneg %p149
    $region26: #{x_vector_forward.8} parent=5 // pred_check_branch
      %152 = sbr.rel (%p150) target = $region28
    $region27: #{x_vector_forward.8} parent=5 // pred_region
      // Predicated region
      $region29: #{x_vector_forward.8} parent=27 // pred_check
        %p153 = pneg %p30
      $region30: #{x_vector_forward.8} parent=27 // pred_check_branch
        %155 = sbr.rel (%p153) target = $region32
      $region31: #{x_vector_forward.8} parent=27 // pred_region
        %p156 = scmp.lt.s32.totalorder %s10, 1
        %s157 = scalar_select %p156, %s10, 1
        %s158 = smul.addr %s157, 3
        %s159 = smul.addr %s158, 8
        %s160 = scalar_lea.vmem %s0, %s159
      $region32: #{x_vector_forward.8} parent=27 // pred_fallthru
        _
    $region28: #{x_vector_forward.8} parent=5 // pred_fallthru
      _
    %p161 = scmp.le.s32.totalorder 1, %s10
    %p162 = scmp.lt.s32.totalorder %s10, 3
    %p163 = pnand %p161, %p162
    %p164 = pneg %p163
    // Predicated region
    $region33: #{x_vector_forward.8} parent=5 // pred_check
      _
    $region34: #{x_vector_forward.8} parent=5 // pred_check_branch
      %166 = sbr.rel (%p163) target = $region36
    $region35: #{x_vector_forward.8} parent=5 // pred_region
      %s167 = ssub.s32 %s10, 1
      %p168 = scmp.lt.s32.totalorder %s15, 1
      %s169 = scalar_select %p168, %s15, 1
      %s170 = smul.addr %s169, 3
      %s171 = smul.addr %s170, 8
      %s172 = scalar_lea.vmem %s0, %s171
      %p173 = pneg %p36
      %p174 = pneg %p33
      %p175 = pneg %p57
      %p176 = pneg %p54
      %p177 = pneg %p78
      %p178 = pneg %p75
      %p179 = pneg %p99
      %p180 = pneg %p96
      %p181 = pneg %p125
      %p182 = pneg %p122
      %p183 = scmp.lt.s32.totalorder %s15, 1
      %s184 = scalar_select %p183, %s15, 1
      %s185 = smul.addr %s184, 2
      %s186 = smul.addr %s185, 8
      %s187 = scalar_lea.vmem %s4, %s186
      %p188 = scmp.lt.s32.totalorder %s15, 1
      %s189 = scalar_select %p188, %s15, 1
      %s190 = smul.addr %s189, 3
      %s191 = smul.addr %s190, 8
      %s192 = scalar_lea.vmem %s0, %s191
      %p193 = scmp.lt.s32.totalorder %s15, 1
      %s194 = scalar_select %p193, %s15, 1
      %s195 = smul.addr %s194, 2
      %s196 = smul.addr %s195, 8
      %s197 = scalar_lea.vmem %s4, %s196
      %v199 = vld [vmem:[%s192] sm:$0xff]
      %v200 = vld [vmem:[%s192 + $0x8] sm:$0xff]
      %v201 = vld [vmem:[%s192 + $0x10] sm:$0xff]
      %v202 = vpack.c.bf16 %v200, %v199
      %v203 = vpack.c.bf16 %v201, %v201
      %v204 = vld [vmem:[%s1] sm:$0xf]
      %v205 = vld [vmem:[%s1 + $0x4] sm:$0xf]
      %v206 = vld [vmem:[%s1 + $0x8] sm:$0xf]
      %v207 = vld [vmem:[%s1 + $0xc] sm:$0xf]
      %v208 = vld [vmem:[%s1 + $0x10] sm:$0xf]
      %v209 = vld [vmem:[%s1 + $0x14] sm:$0xf]
      %v210 = vld [vmem:[%s1 + $0x18] sm:$0xf]
      %v211 = vld [vmem:[%s1 + $0x1c] sm:$0xf]
      %s212 = scalar_lea.vmem %s1, 32
      %v213 = vld [vmem:[%s212] sm:$0xf]
      %v214 = vld [vmem:[%s212 + $0x4] sm:$0xf]
      %v215 = vld [vmem:[%s212 + $0x8] sm:$0xf]
      %v216 = vld [vmem:[%s212 + $0xc] sm:$0xf]
      %v217 = vld [vmem:[%s212 + $0x10] sm:$0xf]
      %v218 = vld [vmem:[%s212 + $0x14] sm:$0xf]
      %v219 = vld [vmem:[%s212 + $0x18] sm:$0xf]
      %v220 = vld [vmem:[%s212 + $0x1c] sm:$0xf]
      %v222 = vrot.slane %v202, 1
      %v231 = vunpack.c.l.b16 %v213
      %v232 = vunpack.c.l.b16 %v214
      %v233 = vunpack.c.l.b16 %v215
      %v234 = vunpack.c.l.b16 %v216
      %v235 = vunpack.c.l.b16 %v217
      %v236 = vunpack.c.l.b16 %v218
      %v237 = vunpack.c.l.b16 %v219
      %v238 = vunpack.c.l.b16 %v220
      %v239 = vpack.c.b16 %v232, %v231
      %v240 = vpack.c.b16 %v234, %v233
      %v241 = vpack.c.b16 %v236, %v235
      %v242 = vpack.c.b16 %v238, %v237
      %vm247 = vcmask 523264
      %v249 = vsel %vm247, %v222, 0
      %251 = vmatprep.subr.bf16.mxu0 0
      %252 = vmatpush1.bf16.msra.mxu0 %v239
      %253 = vmatprep.subr.bf16.mxu0 0
      %254 = vmatpush1.bf16.msra.mxu0 %v240
      %255 = vmatprep.subr.bf16.mxu0 0
      %256 = vmatpush1.bf16.msra.mxu0 %v241
      %257 = vmatprep.subr.bf16.mxu0 0
      %258 = vmatpush1.bf16.msra.mxu0 %v242
      %259 = vmatprep.subr.bf16.mxu0 0
      %260 = vmatpush1.bf16.msra.mxu0 0
      %261 = vmatprep.subr.bf16.mxu0 0
      %262 = vmatpush1.bf16.msra.mxu0 0
      %263 = vmatprep.subr.bf16.mxu0 0
      %264 = vmatpush1.bf16.msra.mxu0 0
      %265 = vmatprep.subr.bf16.mxu0 0
      %266 = vmatpush1.bf16.msra.mxu0 0
      %267 = vmatprep.subr.bf16.mxu0 0
      %268 = vmatpush1.bf16.msra.mxu0 0
      %269 = vmatprep.subr.bf16.mxu0 0
      %270 = vmatpush1.bf16.msra.mxu0 0
      %271 = vmatprep.subr.bf16.mxu0 0
      %272 = vmatpush1.bf16.msra.mxu0 0
      %273 = vmatprep.subr.bf16.mxu0 0
      %274 = vmatpush1.bf16.msra.mxu0 0
      %275 = vmatprep.subr.bf16.mxu0 0
      %276 = vmatpush1.bf16.msra.mxu0 0
      %277 = vmatprep.subr.bf16.mxu0 0
      %278 = vmatpush1.bf16.msra.mxu0 0
      %279 = vmatprep.subr.bf16.mxu0 0
      %280 = vmatpush1.bf16.msra.mxu0 0
      %281 = vmatprep.subr.bf16.mxu0 0
      %282 = vmatpush1.bf16.msra.mxu0 0
      %283 = vmatprep.mubr.bf16.mxu0 0
      %284 = vmatmul.mubr.bf16.gmra.mrb[0].mxu0 %v249
      %v285 = vpop.f32.mrb[0].mxu0
      %v286 = vadd.f32 0.0, %v285
      %v287 = vpop.f32.mrb[0].mxu0
      %v288 = vpop.f32.mrb[0].mxu0
      %v289 = vadd.f32 0.0, %v288
      %v290 = vpop.f32.mrb[0].mxu0
      %291 = vdwg.mxu0
      %v300 = vunpack.c.l.b16 %v204
      %v301 = vunpack.c.l.b16 %v205
      %v302 = vunpack.c.l.b16 %v206
      %v303 = vunpack.c.l.b16 %v207
      %v304 = vunpack.c.l.b16 %v208
      %v305 = vunpack.c.l.b16 %v209
      %v306 = vunpack.c.l.b16 %v210
      %v307 = vunpack.c.l.b16 %v211
      %v308 = vpack.c.b16 %v301, %v300
      %v309 = vpack.c.b16 %v303, %v302
      %v310 = vpack.c.b16 %v305, %v304
      %v311 = vpack.c.b16 %v307, %v306
      %v317 = vsel %vm247, %v202, 0
      %319 = vmatprep.subr.bf16.mxu0 0
      %320 = vmatpush1.bf16.msra.mxu0 %v308
      %321 = vmatprep.subr.bf16.mxu0 0
      %322 = vmatpush1.bf16.msra.mxu0 %v309
      %323 = vmatprep.subr.bf16.mxu0 0
      %324 = vmatpush1.bf16.msra.mxu0 %v310
      %325 = vmatprep.subr.bf16.mxu0 0
      %326 = vmatpush1.bf16.msra.mxu0 %v311
      %327 = vmatprep.subr.bf16.mxu0 0
      %328 = vmatpush1.bf16.msra.mxu0 0
      %329 = vmatprep.subr.bf16.mxu0 0
      %330 = vmatpush1.bf16.msra.mxu0 0
      %331 = vmatprep.subr.bf16.mxu0 0
      %332 = vmatpush1.bf16.msra.mxu0 0
      %333 = vmatprep.subr.bf16.mxu0 0
      %334 = vmatpush1.bf16.msra.mxu0 0
      %335 = vmatprep.subr.bf16.mxu0 0
      %336 = vmatpush1.bf16.msra.mxu0 0
      %337 = vmatprep.subr.bf16.mxu0 0
      %338 = vmatpush1.bf16.msra.mxu0 0
      %339 = vmatprep.subr.bf16.mxu0 0
      %340 = vmatpush1.bf16.msra.mxu0 0
      %341 = vmatprep.subr.bf16.mxu0 0
      %342 = vmatpush1.bf16.msra.mxu0 0
      %343 = vmatprep.subr.bf16.mxu0 0
      %344 = vmatpush1.bf16.msra.mxu0 0
      %345 = vmatprep.subr.bf16.mxu0 0
      %346 = vmatpush1.bf16.msra.mxu0 0
      %347 = vmatprep.subr.bf16.mxu0 0
      %348 = vmatpush1.bf16.msra.mxu0 0
      %349 = vmatprep.subr.bf16.mxu0 0
      %350 = vmatpush1.bf16.msra.mxu0 0
      %351 = vmatprep.mubr.bf16.mxu0 0
      %352 = vmatmul.mubr.bf16.gmra.mrb[0].mxu0 %v317
      %v353 = vpop.f32.mrb[0].mxu0
      %v354 = vadd.f32 %v286, %v353
      %v355 = vpop.f32.mrb[0].mxu0
      %v356 = vpop.f32.mrb[0].mxu0
      %v357 = vadd.f32 %v289, %v356
      %v358 = vpop.f32.mrb[0].mxu0
      %359 = vdwg.mxu0
      %s360 = scalar_lea.vmem %s1, 64
      %v361 = vld [vmem:[%s360] sm:$0xf]
      %v362 = vld [vmem:[%s360 + $0x4] sm:$0xf]
      %v363 = vld [vmem:[%s360 + $0x8] sm:$0xf]
      %v364 = vld [vmem:[%s360 + $0xc] sm:$0xf]
      %v365 = vld [vmem:[%s360 + $0x10] sm:$0xf]
      %v366 = vld [vmem:[%s360 + $0x14] sm:$0xf]
      %v367 = vld [vmem:[%s360 + $0x18] sm:$0xf]
      %v368 = vld [vmem:[%s360 + $0x1c] sm:$0xf]
      %v369 = vrot.slane %v202, 2
      %v378 = vunpack.c.l.b16 %v361
      %v379 = vunpack.c.l.b16 %v362
      %v380 = vunpack.c.l.b16 %v363
      %v381 = vunpack.c.l.b16 %v364
      %v382 = vunpack.c.l.b16 %v365
      %v383 = vunpack.c.l.b16 %v366
      %v384 = vunpack.c.l.b16 %v367
      %v385 = vunpack.c.l.b16 %v368
      %v386 = vpack.c.b16 %v379, %v378
      %v387 = vpack.c.b16 %v381, %v380
      %v388 = vpack.c.b16 %v383, %v382
      %v389 = vpack.c.b16 %v385, %v384
      %v395 = vsel %vm247, %v369, 0
      %397 = vmatprep.subr.bf16.mxu0 0
      %398 = vmatpush1.bf16.msra.mxu0 %v386
      %399 = vmatprep.subr.bf16.mxu0 0
      %400 = vmatpush1.bf16.msra.mxu0 %v387
      %401 = vmatprep.subr.bf16.mxu0 0
      %402 = vmatpush1.bf16.msra.mxu0 %v388
      %403 = vmatprep.subr.bf16.mxu0 0
      %404 = vmatpush1.bf16.msra.mxu0 %v389
      %405 = vmatprep.subr.bf16.mxu0 0
      %406 = vmatpush1.bf16.msra.mxu0 0
      %407 = vmatprep.subr.bf16.mxu0 0
      %408 = vmatpush1.bf16.msra.mxu0 0
      %409 = vmatprep.subr.bf16.mxu0 0
      %410 = vmatpush1.bf16.msra.mxu0 0
      %411 = vmatprep.subr.bf16.mxu0 0
      %412 = vmatpush1.bf16.msra.mxu0 0
      %413 = vmatprep.subr.bf16.mxu0 0
      %414 = vmatpush1.bf16.msra.mxu0 0
      %415 = vmatprep.subr.bf16.mxu0 0
      %416 = vmatpush1.bf16.msra.mxu0 0
      %417 = vmatprep.subr.bf16.mxu0 0
      %418 = vmatpush1.bf16.msra.mxu0 0
      %419 = vmatprep.subr.bf16.mxu0 0
      %420 = vmatpush1.bf16.msra.mxu0 0
      %421 = vmatprep.subr.bf16.mxu0 0
      %422 = vmatpush1.bf16.msra.mxu0 0
      %423 = vmatprep.subr.bf16.mxu0 0
      %424 = vmatpush1.bf16.msra.mxu0 0
      %425 = vmatprep.subr.bf16.mxu0 0
      %426 = vmatpush1.bf16.msra.mxu0 0
      %427 = vmatprep.subr.bf16.mxu0 0
      %428 = vmatpush1.bf16.msra.mxu0 0
      %429 = vmatprep.mubr.bf16.mxu0 0
      %430 = vmatmul.mubr.bf16.gmra.mrb[0].mxu0 %v395
      %v431 = vpop.f32.mrb[0].mxu0
      %v432 = vadd.f32 0.0, %v431
      %v433 = vpop.f32.mrb[0].mxu0
      %v434 = vpop.f32.mrb[0].mxu0
      %v435 = vadd.f32 0.0, %v434
      %v436 = vpop.f32.mrb[0].mxu0
      %437 = vdwg.mxu0
      %v438 = vadd.f32 %v354, %v432
      %v439 = vadd.f32 %v357, %v435
      %s440 = scalar_lea.vmem %s1, 96
      %v441 = vld [vmem:[%s440] sm:$0xf]
      %v442 = vld [vmem:[%s440 + $0x4] sm:$0xf]
      %v443 = vld [vmem:[%s440 + $0x8] sm:$0xf]
      %v444 = vld [vmem:[%s440 + $0xc] sm:$0xf]
      %v445 = vld [vmem:[%s440 + $0x10] sm:$0xf]
      %v446 = vld [vmem:[%s440 + $0x14] sm:$0xf]
      %v447 = vld [vmem:[%s440 + $0x18] sm:$0xf]
      %v448 = vld [vmem:[%s440 + $0x1c] sm:$0xf]
      %vm450 = vcmask 1044480
      %v451 = vrot.slane %v202, 3
      %v452 = vrot.slane %v203, 3
      %v453 = vsel %vm450, %v451, %v452
      %v462 = vunpack.c.l.b16 %v441
      %v463 = vunpack.c.l.b16 %v442
      %v464 = vunpack.c.l.b16 %v443
      %v465 = vunpack.c.l.b16 %v444
      %v466 = vunpack.c.l.b16 %v445
      %v467 = vunpack.c.l.b16 %v446
      %v468 = vunpack.c.l.b16 %v447
      %v469 = vunpack.c.l.b16 %v448
      %v470 = vpack.c.b16 %v463, %v462
      %v471 = vpack.c.b16 %v465, %v464
      %v472 = vpack.c.b16 %v467, %v466
      %v473 = vpack.c.b16 %v469, %v468
      %v479 = vsel %vm247, %v453, 0
      %481 = vmatprep.subr.bf16.mxu0 0
      %482 = vmatpush1.bf16.msra.mxu0 %v470
      %483 = vmatprep.subr.bf16.mxu0 0
      %484 = vmatpush1.bf16.msra.mxu0 %v471
      %485 = vmatprep.subr.bf16.mxu0 0
      %486 = vmatpush1.bf16.msra.mxu0 %v472
      %487 = vmatprep.subr.bf16.mxu0 0
      %488 = vmatpush1.bf16.msra.mxu0 %v473
      %489 = vmatprep.subr.bf16.mxu0 0
      %490 = vmatpush1.bf16.msra.mxu0 0
      %491 = vmatprep.subr.bf16.mxu0 0
      %492 = vmatpush1.bf16.msra.mxu0 0
      %493 = vmatprep.subr.bf16.mxu0 0
      %494 = vmatpush1.bf16.msra.mxu0 0
      %495 = vmatprep.subr.bf16.mxu0 0
      %496 = vmatpush1.bf16.msra.mxu0 0
      %497 = vmatprep.subr.bf16.mxu0 0
      %498 = vmatpush1.bf16.msra.mxu0 0
      %499 = vmatprep.subr.bf16.mxu0 0
      %500 = vmatpush1.bf16.msra.mxu0 0
      %501 = vmatprep.subr.bf16.mxu0 0
      %502 = vmatpush1.bf16.msra.mxu0 0
      %503 = vmatprep.subr.bf16.mxu0 0
      %504 = vmatpush1.bf16.msra.mxu0 0
      %505 = vmatprep.subr.bf16.mxu0 0
      %506 = vmatpush1.bf16.msra.mxu0 0
      %507 = vmatprep.subr.bf16.mxu0 0
      %508 = vmatpush1.bf16.msra.mxu0 0
      %509 = vmatprep.subr.bf16.mxu0 0
      %510 = vmatpush1.bf16.msra.mxu0 0
      %511 = vmatprep.subr.bf16.mxu0 0
      %512 = vmatpush1.bf16.msra.mxu0 0
      %513 = vmatprep.mubr.bf16.mxu0 0
      %514 = vmatmul.mubr.bf16.gmra.mrb[0].mxu0 %v479
      %v515 = vpop.f32.mrb[0].mxu0
      %v516 = vadd.f32 0.0, %v515
      %v517 = vpop.f32.mrb[0].mxu0
      %v518 = vpop.f32.mrb[0].mxu0
      %v519 = vadd.f32 0.0, %v518
      %v520 = vpop.f32.mrb[0].mxu0
      %521 = vdwg.mxu0
      %v522 = vadd.f32 %v438, %v516
      %v523 = vadd.f32 %v439, %v519
      %s524 = scalar_lea.vmem %s1, 128
      %v525 = vld [vmem:[%s524] sm:$0xf]
      %v526 = vld [vmem:[%s524 + $0x4] sm:$0xf]
      %v527 = vld [vmem:[%s524 + $0x8] sm:$0xf]
      %v528 = vld [vmem:[%s524 + $0xc] sm:$0xf]
      %v529 = vld [vmem:[%s524 + $0x10] sm:$0xf]
      %v530 = vld [vmem:[%s524 + $0x14] sm:$0xf]
      %v531 = vld [vmem:[%s524 + $0x18] sm:$0xf]
      %v532 = vld [vmem:[%s524 + $0x1c] sm:$0xf]
      %vm533 = vcmask 1043456
      %v534 = vrot.slane %v202, 4
      %v535 = vrot.slane %v203, 4
      %v536 = vsel %vm533, %v534, %v535
      %v545 = vunpack.c.l.b16 %v525
      %v546 = vunpack.c.l.b16 %v526
      %v547 = vunpack.c.l.b16 %v527
      %v548 = vunpack.c.l.b16 %v528
      %v549 = vunpack.c.l.b16 %v529
      %v550 = vunpack.c.l.b16 %v530
      %v551 = vunpack.c.l.b16 %v531
      %v552 = vunpack.c.l.b16 %v532
      %v553 = vpack.c.b16 %v546, %v545
      %v554 = vpack.c.b16 %v548, %v547
      %v555 = vpack.c.b16 %v550, %v549
      %v556 = vpack.c.b16 %v552, %v551
      %v562 = vsel %vm247, %v536, 0
      %564 = vmatprep.subr.bf16.mxu0 0
      %565 = vmatpush1.bf16.msra.mxu0 %v553
      %566 = vmatprep.subr.bf16.mxu0 0
      %567 = vmatpush1.bf16.msra.mxu0 %v554
      %568 = vmatprep.subr.bf16.mxu0 0
      %569 = vmatpush1.bf16.msra.mxu0 %v555
      %570 = vmatprep.subr.bf16.mxu0 0
      %571 = vmatpush1.bf16.msra.mxu0 %v556
      %572 = vmatprep.subr.bf16.mxu0 0
      %573 = vmatpush1.bf16.msra.mxu0 0
      %574 = vmatprep.subr.bf16.mxu0 0
      %575 = vmatpush1.bf16.msra.mxu0 0
      %576 = vmatprep.subr.bf16.mxu0 0
      %577 = vmatpush1.bf16.msra.mxu0 0
      %578 = vmatprep.subr.bf16.mxu0 0
      %579 = vmatpush1.bf16.msra.mxu0 0
      %580 = vmatprep.subr.bf16.mxu0 0
      %581 = vmatpush1.bf16.msra.mxu0 0
      %582 = vmatprep.subr.bf16.mxu0 0
      %583 = vmatpush1.bf16.msra.mxu0 0
      %584 = vmatprep.subr.bf16.mxu0 0
      %585 = vmatpush1.bf16.msra.mxu0 0
      %586 = vmatprep.subr.bf16.mxu0 0
      %587 = vmatpush1.bf16.msra.mxu0 0
      %588 = vmatprep.subr.bf16.mxu0 0
      %589 = vmatpush1.bf16.msra.mxu0 0
      %590 = vmatprep.subr.bf16.mxu0 0
      %591 = vmatpush1.bf16.msra.mxu0 0
      %592 = vmatprep.subr.bf16.mxu0 0
      %593 = vmatpush1.bf16.msra.mxu0 0
      %594 = vmatprep.subr.bf16.mxu0 0
      %595 = vmatpush1.bf16.msra.mxu0 0
      %596 = vmatprep.mubr.bf16.mxu0 0
      %597 = vmatmul.mubr.bf16.gmra.mrb[0].mxu0 %v562
      %v598 = vpop.f32.mrb[0].mxu0
      %v599 = vadd.f32 0.0, %v598
      %v600 = vpop.f32.mrb[0].mxu0
      %v601 = vpop.f32.mrb[0].mxu0
      %v602 = vadd.f32 0.0, %v601
      %v603 = vpop.f32.mrb[0].mxu0
      %604 = vdwg.mxu0
      %v605 = vadd.f32 %v522, %v599
      %v606 = vadd.f32 %v523, %v602
      %s607 = scalar_lea.vmem %s1, 160
      %v608 = vld [vmem:[%s607] sm:$0xf]
      %v609 = vld [vmem:[%s607 + $0x4] sm:$0xf]
      %v610 = vld [vmem:[%s607 + $0x8] sm:$0xf]
      %v611 = vld [vmem:[%s607 + $0xc] sm:$0xf]
      %v612 = vld [vmem:[%s607 + $0x10] sm:$0xf]
      %v613 = vld [vmem:[%s607 + $0x14] sm:$0xf]
      %v614 = vld [vmem:[%s607 + $0x18] sm:$0xf]
      %v615 = vld [vmem:[%s607 + $0x1c] sm:$0xf]
      %vm616 = vcmask 1042432
      %v617 = vrot.slane %v202, 5
      %v618 = vrot.slane %v203, 5
      %v619 = vsel %vm616, %v617, %v618
      %v628 = vunpack.c.l.b16 %v608
      %v629 = vunpack.c.l.b16 %v609
      %v630 = vunpack.c.l.b16 %v610
      %v631 = vunpack.c.l.b16 %v611
      %v632 = vunpack.c.l.b16 %v612
      %v633 = vunpack.c.l.b16 %v613
      %v634 = vunpack.c.l.b16 %v614
      %v635 = vunpack.c.l.b16 %v615
      %v636 = vpack.c.b16 %v629, %v628
      %v637 = vpack.c.b16 %v631, %v630
      %v638 = vpack.c.b16 %v633, %v632
      %v639 = vpack.c.b16 %v635, %v634
      %v645 = vsel %vm247, %v619, 0
      %647 = vmatprep.subr.bf16.mxu0 0
      %648 = vmatpush1.bf16.msra.mxu0 %v636
      %649 = vmatprep.subr.bf16.mxu0 0
      %650 = vmatpush1.bf16.msra.mxu0 %v637
      %651 = vmatprep.subr.bf16.mxu0 0
      %652 = vmatpush1.bf16.msra.mxu0 %v638
      %653 = vmatprep.subr.bf16.mxu0 0
      %654 = vmatpush1.bf16.msra.mxu0 %v639
      %655 = vmatprep.subr.bf16.mxu0 0
      %656 = vmatpush1.bf16.msra.mxu0 0
      %657 = vmatprep.subr.bf16.mxu0 0
      %658 = vmatpush1.bf16.msra.mxu0 0
      %659 = vmatprep.subr.bf16.mxu0 0
      %660 = vmatpush1.bf16.msra.mxu0 0
      %661 = vmatprep.subr.bf16.mxu0 0
      %662 = vmatpush1.bf16.msra.mxu0 0
      %663 = vmatprep.subr.bf16.mxu0 0
      %664 = vmatpush1.bf16.msra.mxu0 0
      %665 = vmatprep.subr.bf16.mxu0 0
      %666 = vmatpush1.bf16.msra.mxu0 0
      %667 = vmatprep.subr.bf16.mxu0 0
      %668 = vmatpush1.bf16.msra.mxu0 0
      %669 = vmatprep.subr.bf16.mxu0 0
      %670 = vmatpush1.bf16.msra.mxu0 0
      %671 = vmatprep.subr.bf16.mxu0 0
      %672 = vmatpush1.bf16.msra.mxu0 0
      %673 = vmatprep.subr.bf16.mxu0 0
      %674 = vmatpush1.bf16.msra.mxu0 0
      %675 = vmatprep.subr.bf16.mxu0 0
      %676 = vmatpush1.bf16.msra.mxu0 0
      %677 = vmatprep.subr.bf16.mxu0 0
      %678 = vmatpush1.bf16.msra.mxu0 0
      %679 = vmatprep.mubr.bf16.mxu0 0
      %680 = vmatmul.mubr.bf16.gmra.mrb[0].mxu0 %v645
      %v681 = vpop.f32.mrb[0].mxu0
      %v682 = vadd.f32 0.0, %v681
      %v683 = vpop.f32.mrb[0].mxu0
      %v684 = vpop.f32.mrb[0].mxu0
      %v685 = vadd.f32 0.0, %v684
      %v686 = vpop.f32.mrb[0].mxu0
      %687 = vdwg.mxu0
      %v688 = vadd.f32 %v605, %v682
      %v689 = vadd.f32 %v606, %v685
      %s690 = scalar_lea.vmem %s1, 192
      %v691 = vld [vmem:[%s690] sm:$0xf]
      %v692 = vld [vmem:[%s690 + $0x4] sm:$0xf]
      %v693 = vld [vmem:[%s690 + $0x8] sm:$0xf]
      %v694 = vld [vmem:[%s690 + $0xc] sm:$0xf]
      %v695 = vld [vmem:[%s690 + $0x10] sm:$0xf]
      %v696 = vld [vmem:[%s690 + $0x14] sm:$0xf]
      %v697 = vld [vmem:[%s690 + $0x18] sm:$0xf]
      %v698 = vld [vmem:[%s690 + $0x1c] sm:$0xf]
      %vm699 = vcmask 1041408
      %v700 = vrot.slane %v202, 6
      %v701 = vrot.slane %v203, 6
      %v702 = vsel %vm699, %v700, %v701
      %v711 = vunpack.c.l.b16 %v691
      %v712 = vunpack.c.l.b16 %v692
      %v713 = vunpack.c.l.b16 %v693
      %v714 = vunpack.c.l.b16 %v694
      %v715 = vunpack.c.l.b16 %v695
      %v716 = vunpack.c.l.b16 %v696
      %v717 = vunpack.c.l.b16 %v697
      %v718 = vunpack.c.l.b16 %v698
      %v719 = vpack.c.b16 %v712, %v711
      %v720 = vpack.c.b16 %v714, %v713
      %v721 = vpack.c.b16 %v716, %v715
      %v722 = vpack.c.b16 %v718, %v717
      %v728 = vsel %vm247, %v702, 0
      %730 = vmatprep.subr.bf16.mxu0 0
      %731 = vmatpush1.bf16.msra.mxu0 %v719
      %732 = vmatprep.subr.bf16.mxu0 0
      %733 = vmatpush1.bf16.msra.mxu0 %v720
      %734 = vmatprep.subr.bf16.mxu0 0
      %735 = vmatpush1.bf16.msra.mxu0 %v721
      %736 = vmatprep.subr.bf16.mxu0 0
      %737 = vmatpush1.bf16.msra.mxu0 %v722
      %738 = vmatprep.subr.bf16.mxu0 0
      %739 = vmatpush1.bf16.msra.mxu0 0
      %740 = vmatprep.subr.bf16.mxu0 0
      %741 = vmatpush1.bf16.msra.mxu0 0
      %742 = vmatprep.subr.bf16.mxu0 0
      %743 = vmatpush1.bf16.msra.mxu0 0
      %744 = vmatprep.subr.bf16.mxu0 0
      %745 = vmatpush1.bf16.msra.mxu0 0
      %746 = vmatprep.subr.bf16.mxu0 0
      %747 = vmatpush1.bf16.msra.mxu0 0
      %748 = vmatprep.subr.bf16.mxu0 0
      %749 = vmatpush1.bf16.msra.mxu0 0
      %750 = vmatprep.subr.bf16.mxu0 0
      %751 = vmatpush1.bf16.msra.mxu0 0
      %752 = vmatprep.subr.bf16.mxu0 0
      %753 = vmatpush1.bf16.msra.mxu0 0
      %754 = vmatprep.subr.bf16.mxu0 0
      %755 = vmatpush1.bf16.msra.mxu0 0
      %756 = vmatprep.subr.bf16.mxu0 0
      %757 = vmatpush1.bf16.msra.mxu0 0
      %758 = vmatprep.subr.bf16.mxu0 0
      %759 = vmatpush1.bf16.msra.mxu0 0
      %760 = vmatprep.subr.bf16.mxu0 0
      %761 = vmatpush1.bf16.msra.mxu0 0
      %762 = vmatprep.mubr.bf16.mxu0 0
      %763 = vmatmul.mubr.bf16.gmra.mrb[0].mxu0 %v728
      %v764 = vpop.f32.mrb[0].mxu0
      %v765 = vadd.f32 0.0, %v764
      %v766 = vpop.f32.mrb[0].mxu0
      %v767 = vpop.f32.mrb[0].mxu0
      %v768 = vadd.f32 0.0, %v767
      %v769 = vpop.f32.mrb[0].mxu0
      %770 = vdwg.mxu0
      %v771 = vadd.f32 %v688, %v765
      %v772 = vadd.f32 %v689, %v768
      %v773 = vld [vmem:[%s2] sm:$0x1]
      %v775 = vlaneseq
      %v776 = vshrl.u32 %v775, 7
      %v777 = vsub.s32 0, %v776
      %v778 = vrot.slane %v773, %v777
      %v780 = vadd.f32 %v771, %v778
      %v781 = vadd.f32 %v772, %v778
      %v782 = vmax.f32 %v780, 0.0
      %v783 = vmax.f32 %v781, 0.0
      %v784 = vld [vmem:[%s3] sm:$0x1]
      %v786 = vlaneseq
      %v787 = vshrl.u32 %v786, 7
      %v788 = vsub.s32 0, %v787
      %v789 = vrot.slane %v784, %v788
      %v791 = vadd.f32 %v782, %v789
      %v792 = vadd.f32 %v783, %v789
      %793 = vst.msk [vmem:[%s197] sm:$0xff] %vm247, %v791
      %vm794 = vcmask 519168
      %795 = vst.msk [vmem:[%s197 + $0x8] sm:$0xf] %vm794, %v792
      %p796 = scmp.lt.s32.totalorder %s15, 1
      %s797 = scalar_select %p796, %s15, 1
      %s798 = smul.addr %s797, 2
      %s799 = smul.addr %s798, 8
      %s800 = scalar_lea.vmem %s4, %s799
      // Predicated region
      $region37: #{x_vector_forward.8} parent=35 // pred_check
        %p801 = pneg %p122
      $region38: #{x_vector_forward.8} parent=35 // pred_check_branch
        %803 = sbr.rel (%p801) target = $region40
      $region39: #{x_vector_forward.8} parent=35 // pred_region
        _
      $region40: #{x_vector_forward.8} parent=35 // pred_fallthru
        _
    $region36: #{x_vector_forward.8} parent=5 // pred_fallthru
      _
    %p804 = scmp.le.s32.totalorder 2, %s10
    // Predicated region
    $region41: #{x_vector_forward.8} parent=5 // pred_check
      %p805 = pneg %p804
    $region42: #{x_vector_forward.8} parent=5 // pred_check_branch
      %807 = sbr.rel (%p805) target = $region44
    $region43: #{x_vector_forward.8} parent=5 // pred_region
      %s808 = ssub.s32 %s10, 2
      // Predicated region
      $region45: #{x_vector_forward.8} parent=43 // pred_check
        %p809 = pneg %p128
      $region46: #{x_vector_forward.8} parent=43 // pred_check_branch
        %811 = sbr.rel (%p809) target = $region48
      $region47: #{x_vector_forward.8} parent=43 // pred_region
        %p812 = scmp.lt.s32.totalorder %s16, 1
        %s813 = scalar_select %p812, %s16, 1
        %s814 = smul.addr %s813, 2
        %s815 = smul.addr %s814, 8
        %s816 = scalar_lea.vmem %s4, %s815
      $region48: #{x_vector_forward.8} parent=43 // pred_fallthru
        _
    $region44: #{x_vector_forward.8} parent=5 // pred_fallthru
      _
  $region6: #{x_vector_forward.8} parent=0 // loop_footer
    %s14 = sadd.s32 1, %s10
  $region7: #{x_vector_forward.8} parent=0 // loop_footer_branch
    %9 = sbr.rel target = $region3
  $region8: #{x_vector_forward.8} parent=0 // loop_exit
    _

// kernel: x_vector_forward.10
$region0: #{x_vector_forward.10}
  #allocation0 [shape = 'u32[]', space=smem, size = 0x4, offset = 0x4, fixed_abs, tag = 'smem constant byte address 0x4 - core index']
  #allocation1 [shape = 'u32[144,128]{1,0:T(1,128)}', space=vmem, size = 0x12000, scoped, tag = 'internal scratch']
  %s0 = inlined_call_operand.vmem [shape: f32[2,12,128], index: 0, kind: input, shape index: {}]
  %s1 = inlined_call_operand.vmem [shape: bf16[128,32], index: 1, kind: input, shape index: {}]
  %s2 = inlined_call_operand.vmem [shape: f32[1,32], index: 2, kind: input, shape index: {}]
  %s3 = inlined_call_operand.vmem [shape: f32[1,32], index: 3, kind: input, shape index: {}]
  %s4 = inlined_call_operand.vmem [shape: bf16[32,128], index: 4, kind: input, shape index: {}]
  %s5 = inlined_call_operand.vmem [shape: f32[1,128], index: 5, kind: input, shape index: {}]
  %s6 = inlined_call_operand.vmem [shape: f32[2,1,128], index: 6, kind: output, shape index: {}]
  %s7 = sld [smem:[#allocation0]]
  $region57: #{x_vector_forward.10} parent=0
    _
  %s9 = ssub.s32 1, %s7
  %s10 = scalar_select 0, %s9, %s7
  loop: start=0, step=1, limit=4
  $region2: #{x_vector_forward.10} parent=0 // loop_pre_header
    _
  $region3: #{x_vector_forward.10} parent=0 // loop_header
    %s12 = sphi 0, %s16
    %p13 = scmp.ge.s32.totalorder %s12, 4
    %s22 = sphi 0, %s24
    %s25 = sphi 0, %s22
    %s26 = sphi 0, %s25
    %s42 = sphi 0, %s26
    %s46 = sphi 0, %s46
    %s48 = sphi 0, %s46
    %s49 = sphi 0, %s48
    %s63 = sphi 0, %s49
    %s67 = sphi 0, %s67
    %s69 = sphi 0, %s67
    %s70 = sphi 0, %s69
    %s84 = sphi 0, %s70
    %s88 = sphi 0, %s88
    %s90 = sphi 0, %s88
    %s91 = sphi 0, %s90
    %s105 = sphi 0, %s91
    %s109 = sphi 0, %s109
    %s111 = sphi 0, %s109
    %s112 = sphi 0, %s111
    %s126 = sphi 0, %s112
    %s130 = sphi 0, %s130
    %s132 = sphi 0, %s130
    %s133 = sphi 0, %s132
    %s147 = sphi 0, %s133
    %s153 = sphi 0, %s155
    %s156 = sphi 0, %s153
    %s157 = sphi 0, %s156
    %s173 = sphi 0, %s157
  $region4: #{x_vector_forward.10} parent=0 // loop_header_branch
    %15 = sbr.rel (%p13) target = $region8
  $region5: #{x_vector_forward.10} parent=0 // loop_body
    %s17 = ssub.s32 %s12, 1
    %s18 = ssub.s32 %s12, 2
    %s19 = sadd.s32 %s12, 1
    %s20 = ssub.s32 %s12, %s19
    %p21 = scmp.eq.s32.totalorder %s20, 0
    %s23 = sadd.s32 %s22, 1
    %s24 = scalar_select %p21, %s22, %s23
    %p27 = pneg %p21
    %p28 = scmp.eq.s32.totalorder %s12, 1
    %p29 = por %p27, %p28
    %p30 = scmp.ne.s32.totalorder %s22, %s25
    %p31 = scmp.eq.s32.totalorder %s12, 0
    %p32 = por %p30, %p31
    %p33 = scmp.ne.s32.totalorder %s22, %s25
    %p34 = scmp.eq.s32.totalorder %s17, 1
    %p35 = por %p33, %p34
    %p36 = scmp.ne.s32.totalorder %s25, %s26
    %p37 = scmp.eq.s32.totalorder %s17, 0
    %p38 = por %p36, %p37
    %p39 = scmp.ne.s32.totalorder %s25, %s26
    %p40 = scmp.eq.s32.totalorder %s18, 1
    %p41 = por %p39, %p40
    %p43 = scmp.ne.s32.totalorder %s26, %s42
    %p44 = scmp.eq.s32.totalorder %s18, 0
    %p45 = por %p43, %p44
    %s47 = sadd.s32 %s46, 1
    %p50 = scmp.eq.s32.totalorder %s12, 1
    %p51 = scmp.ne.s32.totalorder %s46, %s48
    %p52 = scmp.eq.s32.totalorder %s12, 0
    %p53 = por %p51, %p52
    %p54 = scmp.ne.s32.totalorder %s46, %s48
    %p55 = scmp.eq.s32.totalorder %s17, 1
    %p56 = por %p54, %p55
    %p57 = scmp.ne.s32.totalorder %s48, %s49
    %p58 = scmp.eq.s32.totalorder %s17, 0
    %p59 = por %p57, %p58
    %p60 = scmp.ne.s32.totalorder %s48, %s49
    %p61 = scmp.eq.s32.totalorder %s18, 1
    %p62 = por %p60, %p61
    %p64 = scmp.ne.s32.totalorder %s49, %s63
    %p65 = scmp.eq.s32.totalorder %s18, 0
    %p66 = por %p64, %p65
    %s68 = sadd.s32 %s67, 1
    %p71 = scmp.eq.s32.totalorder %s12, 1
    %p72 = scmp.ne.s32.totalorder %s67, %s69
    %p73 = scmp.eq.s32.totalorder %s12, 0
    %p74 = por %p72, %p73
    %p75 = scmp.ne.s32.totalorder %s67, %s69
    %p76 = scmp.eq.s32.totalorder %s17, 1
    %p77 = por %p75, %p76
    %p78 = scmp.ne.s32.totalorder %s69, %s70
    %p79 = scmp.eq.s32.totalorder %s17, 0
    %p80 = por %p78, %p79
    %p81 = scmp.ne.s32.totalorder %s69, %s70
    %p82 = scmp.eq.s32.totalorder %s18, 1
    %p83 = por %p81, %p82
    %p85 = scmp.ne.s32.totalorder %s70, %s84
    %p86 = scmp.eq.s32.totalorder %s18, 0
    %p87 = por %p85, %p86
    %s89 = sadd.s32 %s88, 1
    %p92 = scmp.eq.s32.totalorder %s12, 1
    %p93 = scmp.ne.s32.totalorder %s88, %s90
    %p94 = scmp.eq.s32.totalorder %s12, 0
    %p95 = por %p93, %p94
    %p96 = scmp.ne.s32.totalorder %s88, %s90
    %p97 = scmp.eq.s32.totalorder %s17, 1
    %p98 = por %p96, %p97
    %p99 = scmp.ne.s32.totalorder %s90, %s91
    %p100 = scmp.eq.s32.totalorder %s17, 0
    %p101 = por %p99, %p100
    %p102 = scmp.ne.s32.totalorder %s90, %s91
    %p103 = scmp.eq.s32.totalorder %s18, 1
    %p104 = por %p102, %p103
    %p106 = scmp.ne.s32.totalorder %s91, %s105
    %p107 = scmp.eq.s32.totalorder %s18, 0
    %p108 = por %p106, %p107
    %s110 = sadd.s32 %s109, 1
    %p113 = scmp.eq.s32.totalorder %s12, 1
    %p114 = scmp.ne.s32.totalorder %s109, %s111
    %p115 = scmp.eq.s32.totalorder %s12, 0
    %p116 = por %p114, %p115
    %p117 = scmp.ne.s32.totalorder %s109, %s111
    %p118 = scmp.eq.s32.totalorder %s17, 1
    %p119 = por %p117, %p118
    %p120 = scmp.ne.s32.totalorder %s111, %s112
    %p121 = scmp.eq.s32.totalorder %s17, 0
    %p122 = por %p120, %p121
    %p123 = scmp.ne.s32.totalorder %s111, %s112
    %p124 = scmp.eq.s32.totalorder %s18, 1
    %p125 = por %p123, %p124
    %p127 = scmp.ne.s32.totalorder %s112, %s126
    %p128 = scmp.eq.s32.totalorder %s18, 0
    %p129 = por %p127, %p128
    %s131 = sadd.s32 %s130, 1
    %p134 = scmp.eq.s32.totalorder %s12, 1
    %p135 = scmp.ne.s32.totalorder %s130, %s132
    %p136 = scmp.eq.s32.totalorder %s12, 0
    %p137 = por %p135, %p136
    %p138 = scmp.ne.s32.totalorder %s130, %s132
    %p139 = scmp.eq.s32.totalorder %s17, 1
    %p140 = por %p138, %p139
    %p141 = scmp.ne.s32.totalorder %s132, %s133
    %p142 = scmp.eq.s32.totalorder %s17, 0
    %p143 = por %p141, %p142
    %p144 = scmp.ne.s32.totalorder %s132, %s133
    %p145 = scmp.eq.s32.totalorder %s18, 1
    %p146 = por %p144, %p145
    %p148 = scmp.ne.s32.totalorder %s133, %s147
    %p149 = scmp.eq.s32.totalorder %s18, 0
    %p150 = por %p148, %p149
    %s151 = ssub.s32 %s12, %s19
    %p152 = scmp.eq.s32.totalorder %s151, 0
    %s154 = sadd.s32 %s153, 1
    %s155 = scalar_select %p152, %s153, %s154
    %p158 = pneg %p152
    %p159 = scmp.eq.s32.totalorder %s12, 1
    %p160 = por %p158, %p159
    %p161 = scmp.ne.s32.totalorder %s153, %s156
    %p162 = scmp.eq.s32.totalorder %s12, 0
    %p163 = por %p161, %p162
    %p164 = scmp.ne.s32.totalorder %s153, %s156
    %p165 = scmp.eq.s32.totalorder %s17, 1
    %p166 = por %p164, %p165
    %p167 = scmp.ne.s32.totalorder %s156, %s157
    %p168 = scmp.eq.s32.totalorder %s17, 0
    %p169 = por %p167, %p168
    %p170 = scmp.ne.s32.totalorder %s156, %s157
    %p171 = scmp.eq.s32.totalorder %s18, 1
    %p172 = por %p170, %p171
    %p174 = scmp.ne.s32.totalorder %s157, %s173
    %p175 = scmp.eq.s32.totalorder %s18, 0
    %p176 = por %p174, %p175
    %p177 = scmp.le.s32.totalorder 1, %s12
    %p178 = scmp.lt.s32.totalorder %s12, 3
    %p179 = pnand %p177, %p178
    %p180 = pneg %p179
    // Predicated region
    $region9: #{x_vector_forward.10} parent=5 // pred_check
      _
    $region10: #{x_vector_forward.10} parent=5 // pred_check_branch
      %182 = sbr.rel (%p179) target = $region12
    $region11: #{x_vector_forward.10} parent=5 // pred_region
      %s183 = ssub.s32 %s12, 1
      // Predicated region
      $region13: #{x_vector_forward.10} parent=11 // pred_check
        %p184 = pneg %p59
      $region14: #{x_vector_forward.10} parent=11 // pred_check_branch
        %186 = sbr.rel (%p184) target = $region16
      $region15: #{x_vector_forward.10} parent=11 // pred_region
        _
      $region16: #{x_vector_forward.10} parent=11 // pred_fallthru
        _
      // Predicated region
      $region17: #{x_vector_forward.10} parent=11 // pred_check
        %p187 = pneg %p80
      $region18: #{x_vector_forward.10} parent=11 // pred_check_branch
        %189 = sbr.rel (%p187) target = $region20
      $region19: #{x_vector_forward.10} parent=11 // pred_region
        _
      $region20: #{x_vector_forward.10} parent=11 // pred_fallthru
        _
      // Predicated region
      $region21: #{x_vector_forward.10} parent=11 // pred_check
        %p190 = pneg %p101
      $region22: #{x_vector_forward.10} parent=11 // pred_check_branch
        %192 = sbr.rel (%p190) target = $region24
      $region23: #{x_vector_forward.10} parent=11 // pred_region
        _
      $region24: #{x_vector_forward.10} parent=11 // pred_fallthru
        _
      // Predicated region
      $region25: #{x_vector_forward.10} parent=11 // pred_check
        %p193 = pneg %p122
      $region26: #{x_vector_forward.10} parent=11 // pred_check_branch
        %195 = sbr.rel (%p193) target = $region28
      $region27: #{x_vector_forward.10} parent=11 // pred_region
        _
      $region28: #{x_vector_forward.10} parent=11 // pred_fallthru
        _
      // Predicated region
      $region29: #{x_vector_forward.10} parent=11 // pred_check
        %p196 = pneg %p143
      $region30: #{x_vector_forward.10} parent=11 // pred_check_branch
        %198 = sbr.rel (%p196) target = $region32
      $region31: #{x_vector_forward.10} parent=11 // pred_region
        _
      $region32: #{x_vector_forward.10} parent=11 // pred_fallthru
        _
    $region12: #{x_vector_forward.10} parent=5 // pred_fallthru
      _
    %p199 = scmp.lt.s32.totalorder %s12, 2
    // Predicated region
    $region33: #{x_vector_forward.10} parent=5 // pred_check
      %p200 = pneg %p199
    $region34: #{x_vector_forward.10} parent=5 // pred_check_branch
      %202 = sbr.rel (%p200) target = $region36
    $region35: #{x_vector_forward.10} parent=5 // pred_region
      // Predicated region
      $region37: #{x_vector_forward.10} parent=35 // pred_check
        %p203 = pneg %p32
      $region38: #{x_vector_forward.10} parent=35 // pred_check_branch
        %205 = sbr.rel (%p203) target = $region40
      $region39: #{x_vector_forward.10} parent=35 // pred_region
        %p206 = scmp.lt.s32.totalorder %s12, 1
        %s207 = scalar_select %p206, %s12, 1
        %s208 = smul.addr %s207, 2
        %s209 = smul.addr %s208, 8
        %s210 = scalar_lea.vmem %s0, %s209
      $region40: #{x_vector_forward.10} parent=35 // pred_fallthru
        _
    $region36: #{x_vector_forward.10} parent=5 // pred_fallthru
      _
    %p211 = scmp.le.s32.totalorder 1, %s12
    %p212 = scmp.lt.s32.totalorder %s12, 3
    %p213 = pnand %p211, %p212
    %p214 = pneg %p213
    // Predicated region
    $region41: #{x_vector_forward.10} parent=5 // pred_check
      _
    $region42: #{x_vector_forward.10} parent=5 // pred_check_branch
      %216 = sbr.rel (%p213) target = $region44
    $region43: #{x_vector_forward.10} parent=5 // pred_region
      %s217 = ssub.s32 %s12, 1
      %p218 = scmp.lt.s32.totalorder %s17, 1
      %s219 = scalar_select %p218, %s17, 1
      %s220 = smul.addr %s219, 2
      %s221 = smul.addr %s220, 8
      %s222 = scalar_lea.vmem %s0, %s221
      %p223 = pneg %p38
      %p224 = pneg %p35
      %p225 = pneg %p59
      %p226 = pneg %p56
      %p227 = pneg %p80
      %p228 = pneg %p77
      %p229 = pneg %p101
      %p230 = pneg %p98
      %p231 = pneg %p122
      %p232 = pneg %p119
      %p233 = pneg %p143
      %p234 = pneg %p140
      %p235 = pneg %p169
      %p236 = pneg %p166
      %p237 = scmp.lt.s32.totalorder %s17, 1
      %s238 = scalar_select %p237, %s17, 1
      %s239 = scalar_lea.vmem %s6, %s238
      %p240 = scmp.lt.s32.totalorder %s17, 1
      %s241 = scalar_select %p240, %s17, 1
      %s242 = smul.addr %s241, 2
      %s243 = smul.addr %s242, 8
      %s244 = scalar_lea.vmem %s0, %s243
      %p245 = scmp.lt.s32.totalorder %s17, 1
      %s246 = scalar_select %p245, %s17, 1
      %s247 = scalar_lea.vmem %s6, %s246
      %v249 = vld [vmem:[%s244] sm:$0xff]
      %v250 = vld [vmem:[%s244 + $0x8] sm:$0xf]
      %v251 = vpack.c.bf16 %v250, %v249
      %v252 = vld [vmem:[%s1] sm:$0xf]
      %v253 = vld [vmem:[%s1 + $0x4] sm:$0xf]
      %v254 = vld [vmem:[%s1 + $0x8] sm:$0xf]
      %v255 = vld [vmem:[%s1 + $0xc] sm:$0xf]
      %v256 = vld [vmem:[%s1 + $0x10] sm:$0xf]
      %v257 = vld [vmem:[%s1 + $0x14] sm:$0xf]
      %v258 = vld [vmem:[%s1 + $0x18] sm:$0xf]
      %v259 = vld [vmem:[%s1 + $0x1c] sm:$0xf]
      %v260 = vld [vmem:[%s1 + $0x20] sm:$0xf]
      %v261 = vld [vmem:[%s1 + $0x24] sm:$0xf]
      %v262 = vld [vmem:[%s1 + $0x28] sm:$0xf]
      %v263 = vld [vmem:[%s1 + $0x2c] sm:$0xf]
      %v264 = vld [vmem:[%s1 + $0x30] sm:$0xf]
      %v265 = vld [vmem:[%s1 + $0x34] sm:$0xf]
      %v266 = vld [vmem:[%s1 + $0x38] sm:$0xf]
      %v267 = vld [vmem:[%s1 + $0x3c] sm:$0xf]
      %v268 = vld [vmem:[%s2] sm:$0x1]
      %v270 = vlaneseq
      %v271 = vshrl.u32 %v270, 7
      %v272 = vsub.s32 0, %v271
      %v273 = vrot.slane %v268, %v272
      %v291 = vunpack.c.l.b16 %v252
      %v292 = vunpack.c.l.b16 %v253
      %v293 = vunpack.c.l.b16 %v254
      %v294 = vunpack.c.l.b16 %v255
      %v295 = vunpack.c.l.b16 %v256
      %v296 = vunpack.c.l.b16 %v257
      %v297 = vunpack.c.l.b16 %v258
      %v298 = vunpack.c.l.b16 %v259
      %v299 = vunpack.c.l.b16 %v260
      %v300 = vunpack.c.l.b16 %v261
      %v301 = vunpack.c.l.b16 %v262
      %v302 = vunpack.c.l.b16 %v263
      %v303 = vunpack.c.l.b16 %v264
      %v304 = vunpack.c.l.b16 %v265
      %v305 = vunpack.c.l.b16 %v266
      %v306 = vunpack.c.l.b16 %v267
      %v307 = vpack.c.b16 %v292, %v291
      %v308 = vpack.c.b16 %v294, %v293
      %v309 = vpack.c.b16 %v296, %v295
      %v310 = vpack.c.b16 %v298, %v297
      %v311 = vpack.c.b16 %v300, %v299
      %v312 = vpack.c.b16 %v302, %v301
      %v313 = vpack.c.b16 %v304, %v303
      %v314 = vpack.c.b16 %v306, %v305
      %323 = vmatprep.subr.bf16.mxu0 0
      %324 = vmatpush1.bf16.msra.mxu0 %v307
      %325 = vmatprep.subr.bf16.mxu0 0
      %326 = vmatpush1.bf16.msra.mxu0 %v308
      %327 = vmatprep.subr.bf16.mxu0 0
      %328 = vmatpush1.bf16.msra.mxu0 %v309
      %329 = vmatprep.subr.bf16.mxu0 0
      %330 = vmatpush1.bf16.msra.mxu0 %v310
      %331 = vmatprep.subr.bf16.mxu0 0
      %332 = vmatpush1.bf16.msra.mxu0 %v311
      %333 = vmatprep.subr.bf16.mxu0 0
      %334 = vmatpush1.bf16.msra.mxu0 %v312
      %335 = vmatprep.subr.bf16.mxu0 0
      %336 = vmatpush1.bf16.msra.mxu0 %v313
      %337 = vmatprep.subr.bf16.mxu0 0
      %338 = vmatpush1.bf16.msra.mxu0 %v314
      %339 = vmatprep.subr.bf16.mxu0 0
      %340 = vmatpush1.bf16.msra.mxu0 0
      %341 = vmatprep.subr.bf16.mxu0 0
      %342 = vmatpush1.bf16.msra.mxu0 0
      %343 = vmatprep.subr.bf16.mxu0 0
      %344 = vmatpush1.bf16.msra.mxu0 0
      %345 = vmatprep.subr.bf16.mxu0 0
      %346 = vmatpush1.bf16.msra.mxu0 0
      %347 = vmatprep.subr.bf16.mxu0 0
      %348 = vmatpush1.bf16.msra.mxu0 0
      %349 = vmatprep.subr.bf16.mxu0 0
      %350 = vmatpush1.bf16.msra.mxu0 0
      %351 = vmatprep.subr.bf16.mxu0 0
      %352 = vmatpush1.bf16.msra.mxu0 0
      %353 = vmatprep.subr.bf16.mxu0 0
      %354 = vmatpush1.bf16.msra.mxu0 0
      %355 = vmatprep.mubr.bf16.mxu0 0
      %356 = vmatmul.mubr.bf16.gmra.mrb[0].mxu0 %v251
      %v357 = vpop.f32.mrb[0].mxu0
      %v358 = vadd.f32 %v273, %v357
      %v359 = vpop.f32.mrb[0].mxu0
      %v360 = vpop.f32.mrb[0].mxu0
      %v361 = vadd.f32 %v273, %v360
      %v362 = vpop.f32.mrb[0].mxu0
      %363 = vdwg.mxu0
      %v364 = vmax.f32 %v358, 0.0
      %v365 = vmax.f32 %v361, 0.0
      %v366 = vld [vmem:[%s3] sm:$0x1]
      %v368 = vlaneseq
      %v369 = vshrl.u32 %v368, 7
      %v370 = vsub.s32 0, %v369
      %v371 = vrot.slane %v366, %v370
      %v373 = vadd.f32 %v364, %v371
      %v374 = vadd.f32 %v365, %v371
      %v375 = vpack.c.bf16 %v374, %v373
      %v376 = vld [vmem:[%s4] sm:$0xf]
      %v377 = vld [vmem:[%s4 + $0x4] sm:$0xf]
      %v378 = vld [vmem:[%s4 + $0x8] sm:$0xf]
      %v379 = vld [vmem:[%s4 + $0xc] sm:$0xf]
      %v380 = vld [vmem:[%s5] sm:$0x1]
      %v382 = vlaneseq
      %v383 = vshrl.u32 %v382, 7
      %v384 = vsub.s32 0, %v383
      %v385 = vrot.slane %v380, %v384
      %v391 = vunpack.c.l.b16 %v376
      %v392 = vunpack.c.l.b16 %v377
      %v393 = vunpack.c.l.b16 %v378
      %v394 = vunpack.c.l.b16 %v379
      %v395 = vpack.c.b16 %v392, %v391
      %v396 = vpack.c.b16 %v394, %v393
      %vm399 = vcmask 261120
      %v401 = vsel %vm399, %v375, 0
      %403 = vmatprep.subr.bf16.mxu0 0
      %404 = vmatpush1.bf16.msra.mxu0 %v395
      %405 = vmatprep.subr.bf16.mxu0 0
      %406 = vmatpush1.bf16.msra.mxu0 %v396
      %407 = vmatprep.subr.bf16.mxu0 0
      %408 = vmatpush1.bf16.msra.mxu0 0
      %409 = vmatprep.subr.bf16.mxu0 0
      %410 = vmatpush1.bf16.msra.mxu0 0
      %411 = vmatprep.subr.bf16.mxu0 0
      %412 = vmatpush1.bf16.msra.mxu0 0
      %413 = vmatprep.subr.bf16.mxu0 0
      %414 = vmatpush1.bf16.msra.mxu0 0
      %415 = vmatprep.subr.bf16.mxu0 0
      %416 = vmatpush1.bf16.msra.mxu0 0
      %417 = vmatprep.subr.bf16.mxu0 0
      %418 = vmatpush1.bf16.msra.mxu0 0
      %419 = vmatprep.subr.bf16.mxu0 0
      %420 = vmatpush1.bf16.msra.mxu0 0
      %421 = vmatprep.subr.bf16.mxu0 0
      %422 = vmatpush1.bf16.msra.mxu0 0
      %423 = vmatprep.subr.bf16.mxu0 0
      %424 = vmatpush1.bf16.msra.mxu0 0
      %425 = vmatprep.subr.bf16.mxu0 0
      %426 = vmatpush1.bf16.msra.mxu0 0
      %427 = vmatprep.subr.bf16.mxu0 0
      %428 = vmatpush1.bf16.msra.mxu0 0
      %429 = vmatprep.subr.bf16.mxu0 0
      %430 = vmatpush1.bf16.msra.mxu0 0
      %431 = vmatprep.subr.bf16.mxu0 0
      %432 = vmatpush1.bf16.msra.mxu0 0
      %433 = vmatprep.subr.bf16.mxu0 0
      %434 = vmatpush1.bf16.msra.mxu0 0
      %435 = vmatprep.mubr.bf16.mxu0 0
      %436 = vmatmul.mubr.bf16.gmra.mrb[0].mxu0 %v401
      %v437 = vpop.f32.mrb[0].mxu0
      %v438 = vadd.f32 %v385, %v437
      %v439 = vpop.f32.mrb[0].mxu0
      %v440 = vpop.f32.mrb[0].mxu0
      %v441 = vadd.f32 %v385, %v440
      %v442 = vpop.f32.mrb[0].mxu0
      %443 = vdwg.mxu0
      %vm444 = vcmask 1043456
      %v445 = vsel %vm444, %v441, -inf
      %v446 = vmax.f32 %v438, %v445
      %v447 = vrot.slane %v446, 4
      %v448 = vmax.f32 %v446, %v447
      %v449 = vrot.slane %v448, 2
      %v450 = vmax.f32 %v448, %v449
      %v451 = vrot.slane %v450, 1
      %v452 = vmax.f32 %v450, %v451
      %v453 = vsub.f32 %v438, %v452
      %v454 = vsub.f32 %v441, %v452
      %v455 = vmul.f32 %v453, 1.442695
      %v456 = vpow.pop %v455
      %v457 = vmul.f32 %v454, 1.442695
      %v458 = vpow.pop %v457
      %v459 = vsel %vm444, %v458, 0.0
      %v460 = vadd.f32 %v456, %v459
      %v461 = vrot.slane %v460, 4
      %v462 = vadd.f32 %v460, %v461
      %v463 = vrot.slane %v462, 2
      %v464 = vadd.f32 %v462, %v463
      %v465 = vrot.slane %v464, 1
      %v466 = vadd.f32 %v464, %v465
      %v467 = vrcp.pop %v466
      %v468 = vmul.f32 %v456, %v467
      %v469 = vmul.f32 %v458, %v467
      %v470 = vmul.f32 %v249, %v468
      %v471 = vmul.f32 %v250, %v469
      %v472 = vsel %vm444, %v471, 0.0
      %v473 = vadd.f32 %v470, %v472
      %v474 = vrot.slane %v473, 4
      %v475 = vadd.f32 %v473, %v474
      %v476 = vrot.slane %v475, 2
      %v477 = vadd.f32 %v475, %v476
      %v478 = vrot.slane %v477, 1
      %v479 = vadd.f32 %v477, %v478
      %480 = vst [vmem:[%s247] sm:$0x1] %v479
      %p481 = scmp.lt.s32.totalorder %s17, 1
      %s482 = scalar_select %p481, %s17, 1
      %s483 = scalar_lea.vmem %s6, %s482
      // Predicated region
      $region45: #{x_vector_forward.10} parent=43 // pred_check
        %p484 = pneg %p166
      $region46: #{x_vector_forward.10} parent=43 // pred_check_branch
        %486 = sbr.rel (%p484) target = $region48
      $region47: #{x_vector_forward.10} parent=43 // pred_region
        _
      $region48: #{x_vector_forward.10} parent=43 // pred_fallthru
        _
    $region44: #{x_vector_forward.10} parent=5 // pred_fallthru
      _
    %p487 = scmp.le.s32.totalorder 2, %s12
    // Predicated region
    $region49: #{x_vector_forward.10} parent=5 // pred_check
      %p488 = pneg %p487
    $region50: #{x_vector_forward.10} parent=5 // pred_check_branch
      %490 = sbr.rel (%p488) target = $region52
    $region51: #{x_vector_forward.10} parent=5 // pred_region
      %s491 = ssub.s32 %s12, 2
      // Predicated region
      $region53: #{x_vector_forward.10} parent=51 // pred_check
        %p492 = pneg %p172
      $region54: #{x_vector_forward.10} parent=51 // pred_check_branch
        %494 = sbr.rel (%p492) target = $region56
      $region55: #{x_vector_forward.10} parent=51 // pred_region
        %p495 = scmp.lt.s32.totalorder %s18, 1
        %s496 = scalar_select %p495, %s18, 1
        %s497 = scalar_lea.vmem %s6, %s496
      $region56: #{x_vector_forward.10} parent=51 // pred_fallthru
        _
    $region52: #{x_vector_forward.10} parent=5 // pred_fallthru
      _
  $region6: #{x_vector_forward.10} parent=0 // loop_footer
    %s16 = sadd.s32 1, %s12
  $region7: #{x_vector_forward.10} parent=0 // loop_footer_branch
    %11 = sbr.rel target = $region3
  $region8: #{x_vector_forward.10} parent=0 // loop_exit
    _

// kernel: x_vector_forward.11
$region0: #{x_vector_forward.11}
  #allocation0 [shape = 'u32[]', space=smem, size = 0x4, offset = 0x4, fixed_abs, tag = 'smem constant byte address 0x4 - core index']
  #allocation1 [shape = 'u32[144,128]{1,0:T(1,128)}', space=vmem, size = 0x12000, scoped, tag = 'internal scratch']
  %s0 = inlined_call_operand.vmem [shape: f32[2,128], index: 0, kind: input, shape index: {}]
  %s1 = inlined_call_operand.vmem [shape: bf16[128,64], index: 1, kind: input, shape index: {}]
  %s2 = inlined_call_operand.vmem [shape: f32[1,64], index: 2, kind: input, shape index: {}]
  %s3 = inlined_call_operand.vmem [shape: bf16[64,64], index: 3, kind: input, shape index: {}]
  %s4 = inlined_call_operand.vmem [shape: f32[1,64], index: 4, kind: input, shape index: {}]
  %s5 = inlined_call_operand.vmem [shape: bf16[64,10], index: 5, kind: input, shape index: {}]
  %s6 = inlined_call_operand.vmem [shape: f32[1,10], index: 6, kind: input, shape index: {}]
  %s7 = inlined_call_operand.hbm [shape: f32[2,10], index: 7, kind: output, shape index: {}]
  %s8 = sld [smem:[#allocation0]]
  $region38: #{x_vector_forward.11} parent=0
    _
  %s10 = ssub.s32 1, %s8
  %s11 = scalar_select 0, %s10, %s8
  $region1: #{x_vector_forward.11} parent=0
    #allocation2 [shape = 'u8[1024]{0}', space=vmem, size = 0x400, scoped, tag = 'output window, operand 0, single buffered']
    #allocation3 [shape = 's32[1]{0}', space=sflag, size = 0x4, scoped, tag = 'scoped memory for x_vector_forward.11']
    %12 = vsyncpa [#allocation3], 0
    // Predicated region
    $region2: #{x_vector_forward.11} parent=1 // pred_check
      _
    $region3: #{x_vector_forward.11} parent=1 // pred_check_branch
      %14 = sbr.rel (0) target = $region5
    $region4: #{x_vector_forward.11} parent=1 // pred_region
      _
    $region5: #{x_vector_forward.11} parent=1 // pred_fallthru
      _
    // Predicated region
    $region6: #{x_vector_forward.11} parent=1 // pred_check
      _
    $region7: #{x_vector_forward.11} parent=1 // pred_check_branch
      %16 = sbr.rel (0) target = $region9
    $region8: #{x_vector_forward.11} parent=1 // pred_region
      _
    $region9: #{x_vector_forward.11} parent=1 // pred_fallthru
      _
    // Predicated region
    $region10: #{x_vector_forward.11} parent=1 // pred_check
      _
    $region11: #{x_vector_forward.11} parent=1 // pred_check_branch
      %18 = sbr.rel (0) target = $region13
    $region12: #{x_vector_forward.11} parent=1 // pred_region
      _
    $region13: #{x_vector_forward.11} parent=1 // pred_fallthru
      _
    // Predicated region
    $region14: #{x_vector_forward.11} parent=1 // pred_check
      _
    $region15: #{x_vector_forward.11} parent=1 // pred_check_branch
      %20 = sbr.rel (0) target = $region17
    $region16: #{x_vector_forward.11} parent=1 // pred_region
      _
    $region17: #{x_vector_forward.11} parent=1 // pred_fallthru
      _
    // Predicated region
    $region18: #{x_vector_forward.11} parent=1 // pred_check
      _
    $region19: #{x_vector_forward.11} parent=1 // pred_check_branch
      %22 = sbr.rel (0) target = $region21
    $region20: #{x_vector_forward.11} parent=1 // pred_region
      _
    $region21: #{x_vector_forward.11} parent=1 // pred_fallthru
      _
    // Predicated region
    $region22: #{x_vector_forward.11} parent=1 // pred_check
      _
    $region23: #{x_vector_forward.11} parent=1 // pred_check_branch
      %24 = sbr.rel (0) target = $region25
    $region24: #{x_vector_forward.11} parent=1 // pred_region
      _
    $region25: #{x_vector_forward.11} parent=1 // pred_fallthru
      _
    // Predicated region
    $region26: #{x_vector_forward.11} parent=1 // pred_check
      _
    $region27: #{x_vector_forward.11} parent=1 // pred_check_branch
      %26 = sbr.rel (0) target = $region29
    $region28: #{x_vector_forward.11} parent=1 // pred_region
      _
    $region29: #{x_vector_forward.11} parent=1 // pred_fallthru
      _
    %v28 = vld [vmem:[%s0] sm:$0x3]
    %v29 = vpack.c.bf16 %v28, %v28
    %v30 = vld [vmem:[%s1] sm:$0xf]
    %v31 = vld [vmem:[%s1 + $0x4] sm:$0xf]
    %v32 = vld [vmem:[%s1 + $0x8] sm:$0xf]
    %v33 = vld [vmem:[%s1 + $0xc] sm:$0xf]
    %v34 = vld [vmem:[%s1 + $0x10] sm:$0xf]
    %v35 = vld [vmem:[%s1 + $0x14] sm:$0xf]
    %v36 = vld [vmem:[%s1 + $0x18] sm:$0xf]
    %v37 = vld [vmem:[%s1 + $0x1c] sm:$0xf]
    %v38 = vld [vmem:[%s1 + $0x20] sm:$0xf]
    %v39 = vld [vmem:[%s1 + $0x24] sm:$0xf]
    %v40 = vld [vmem:[%s1 + $0x28] sm:$0xf]
    %v41 = vld [vmem:[%s1 + $0x2c] sm:$0xf]
    %v42 = vld [vmem:[%s1 + $0x30] sm:$0xf]
    %v43 = vld [vmem:[%s1 + $0x34] sm:$0xf]
    %v44 = vld [vmem:[%s1 + $0x38] sm:$0xf]
    %v45 = vld [vmem:[%s1 + $0x3c] sm:$0xf]
    %v46 = vld [vmem:[%s2] sm:$0x1]
    %v48 = vlaneseq
    %v49 = vshrl.u32 %v48, 7
    %v50 = vsub.s32 0, %v49
    %v51 = vrot.slane %v46, %v50
    %v69 = vunpack.c.l.b16 %v30
    %v70 = vunpack.c.l.b16 %v31
    %v71 = vunpack.c.l.b16 %v32
    %v72 = vunpack.c.l.b16 %v33
    %v73 = vunpack.c.l.b16 %v34
    %v74 = vunpack.c.l.b16 %v35
    %v75 = vunpack.c.l.b16 %v36
    %v76 = vunpack.c.l.b16 %v37
    %v77 = vunpack.c.l.b16 %v38
    %v78 = vunpack.c.l.b16 %v39
    %v79 = vunpack.c.l.b16 %v40
    %v80 = vunpack.c.l.b16 %v41
    %v81 = vunpack.c.l.b16 %v42
    %v82 = vunpack.c.l.b16 %v43
    %v83 = vunpack.c.l.b16 %v44
    %v84 = vunpack.c.l.b16 %v45
    %v85 = vpack.c.b16 %v70, %v69
    %v86 = vpack.c.b16 %v72, %v71
    %v87 = vpack.c.b16 %v74, %v73
    %v88 = vpack.c.b16 %v76, %v75
    %v89 = vpack.c.b16 %v78, %v77
    %v90 = vpack.c.b16 %v80, %v79
    %v91 = vpack.c.b16 %v82, %v81
    %v92 = vpack.c.b16 %v84, %v83
    %101 = vmatprep.subr.bf16.mxu0 0
    %102 = vmatpush1.bf16.msra.mxu0 %v85
    %103 = vmatprep.subr.bf16.mxu0 0
    %104 = vmatpush1.bf16.msra.mxu0 %v86
    %105 = vmatprep.subr.bf16.mxu0 0
    %106 = vmatpush1.bf16.msra.mxu0 %v87
    %107 = vmatprep.subr.bf16.mxu0 0
    %108 = vmatpush1.bf16.msra.mxu0 %v88
    %109 = vmatprep.subr.bf16.mxu0 0
    %110 = vmatpush1.bf16.msra.mxu0 %v89
    %111 = vmatprep.subr.bf16.mxu0 0
    %112 = vmatpush1.bf16.msra.mxu0 %v90
    %113 = vmatprep.subr.bf16.mxu0 0
    %114 = vmatpush1.bf16.msra.mxu0 %v91
    %115 = vmatprep.subr.bf16.mxu0 0
    %116 = vmatpush1.bf16.msra.mxu0 %v92
    %117 = vmatprep.subr.bf16.mxu0 0
    %118 = vmatpush1.bf16.msra.mxu0 0
    %119 = vmatprep.subr.bf16.mxu0 0
    %120 = vmatpush1.bf16.msra.mxu0 0
    %121 = vmatprep.subr.bf16.mxu0 0
    %122 = vmatpush1.bf16.msra.mxu0 0
    %123 = vmatprep.subr.bf16.mxu0 0
    %124 = vmatpush1.bf16.msra.mxu0 0
    %125 = vmatprep.subr.bf16.mxu0 0
    %126 = vmatpush1.bf16.msra.mxu0 0
    %127 = vmatprep.subr.bf16.mxu0 0
    %128 = vmatpush1.bf16.msra.mxu0 0
    %129 = vmatprep.subr.bf16.mxu0 0
    %130 = vmatpush1.bf16.msra.mxu0 0
    %131 = vmatprep.subr.bf16.mxu0 0
    %132 = vmatpush1.bf16.msra.mxu0 0
    %133 = vmatprep.mubr.bf16.mxu0 0
    %134 = vmatmul.mubr.bf16.gmra.mrb[0].mxu0 %v29
    %v135 = vpop.f32.mrb[0].mxu0
    %v136 = vadd.f32 %v51, %v135
    %v137 = vpop.f32.mrb[0].mxu0
    %v138 = vpop.f32.mrb[0].mxu0
    %v139 = vpop.f32.mrb[0].mxu0
    %140 = vdwg.mxu0
    %v141 = vmax.f32 %v136, 0.0
    %v142 = vpack.c.bf16 %v141, %v141
    %v143 = vld [vmem:[%s3] sm:$0xf]
    %v144 = vld [vmem:[%s3 + $0x4] sm:$0xf]
    %v145 = vld [vmem:[%s3 + $0x8] sm:$0xf]
    %v146 = vld [vmem:[%s3 + $0xc] sm:$0xf]
    %v147 = vld [vmem:[%s3 + $0x10] sm:$0xf]
    %v148 = vld [vmem:[%s3 + $0x14] sm:$0xf]
    %v149 = vld [vmem:[%s3 + $0x18] sm:$0xf]
    %v150 = vld [vmem:[%s3 + $0x1c] sm:$0xf]
    %v151 = vld [vmem:[%s4] sm:$0x1]
    %v153 = vlaneseq
    %v154 = vshrl.u32 %v153, 7
    %v155 = vsub.s32 0, %v154
    %v156 = vrot.slane %v151, %v155
    %v166 = vunpack.c.l.b16 %v143
    %v167 = vunpack.c.l.b16 %v144
    %v168 = vunpack.c.l.b16 %v145
    %v169 = vunpack.c.l.b16 %v146
    %v170 = vunpack.c.l.b16 %v147
    %v171 = vunpack.c.l.b16 %v148
    %v172 = vunpack.c.l.b16 %v149
    %v173 = vunpack.c.l.b16 %v150
    %v174 = vpack.c.b16 %v167, %v166
    %v175 = vpack.c.b16 %v169, %v168
    %v176 = vpack.c.b16 %v171, %v170
    %v177 = vpack.c.b16 %v173, %v172
    %vm182 = vcmask 523264
    %v184 = vsel %vm182, %v142, 0
    %186 = vmatprep.subr.bf16.mxu0 0
    %187 = vmatpush1.bf16.msra.mxu0 %v174
    %188 = vmatprep.subr.bf16.mxu0 0
    %189 = vmatpush1.bf16.msra.mxu0 %v175
    %190 = vmatprep.subr.bf16.mxu0 0
    %191 = vmatpush1.bf16.msra.mxu0 %v176
    %192 = vmatprep.subr.bf16.mxu0 0
    %193 = vmatpush1.bf16.msra.mxu0 %v177
    %194 = vmatprep.subr.bf16.mxu0 0
    %195 = vmatpush1.bf16.msra.mxu0 0
    %196 = vmatprep.subr.bf16.mxu0 0
    %197 = vmatpush1.bf16.msra.mxu0 0
    %198 = vmatprep.subr.bf16.mxu0 0
    %199 = vmatpush1.bf16.msra.mxu0 0
    %200 = vmatprep.subr.bf16.mxu0 0
    %201 = vmatpush1.bf16.msra.mxu0 0
    %202 = vmatprep.subr.bf16.mxu0 0
    %203 = vmatpush1.bf16.msra.mxu0 0
    %204 = vmatprep.subr.bf16.mxu0 0
    %205 = vmatpush1.bf16.msra.mxu0 0
    %206 = vmatprep.subr.bf16.mxu0 0
    %207 = vmatpush1.bf16.msra.mxu0 0
    %208 = vmatprep.subr.bf16.mxu0 0
    %209 = vmatpush1.bf16.msra.mxu0 0
    %210 = vmatprep.subr.bf16.mxu0 0
    %211 = vmatpush1.bf16.msra.mxu0 0
    %212 = vmatprep.subr.bf16.mxu0 0
    %213 = vmatpush1.bf16.msra.mxu0 0
    %214 = vmatprep.subr.bf16.mxu0 0
    %215 = vmatpush1.bf16.msra.mxu0 0
    %216 = vmatprep.subr.bf16.mxu0 0
    %217 = vmatpush1.bf16.msra.mxu0 0
    %218 = vmatprep.mubr.bf16.mxu0 0
    %219 = vmatmul.mubr.bf16.gmra.mrb[0].mxu0 %v184
    %v220 = vpop.f32.mrb[0].mxu0
    %v221 = vadd.f32 %v156, %v220
    %v222 = vpop.f32.mrb[0].mxu0
    %v223 = vpop.f32.mrb[0].mxu0
    %v224 = vpop.f32.mrb[0].mxu0
    %225 = vdwg.mxu0
    %v226 = vmax.f32 %v221, 0.0
    %v227 = vpack.c.bf16 %v226, %v226
    %v228 = vld [vmem:[%s5] sm:$0xf]
    %v229 = vld [vmem:[%s5 + $0x4] sm:$0xf]
    %v230 = vld [vmem:[%s5 + $0x8] sm:$0xf]
    %v231 = vld [vmem:[%s5 + $0xc] sm:$0xf]
    %v232 = vld [vmem:[%s5 + $0x10] sm:$0xf]
    %v233 = vld [vmem:[%s5 + $0x14] sm:$0xf]
    %v234 = vld [vmem:[%s5 + $0x18] sm:$0xf]
    %v235 = vld [vmem:[%s5 + $0x1c] sm:$0xf]
    %v236 = vld [vmem:[%s6] sm:$0x1]
    %v238 = vlaneseq
    %v239 = vshrl.u32 %v238, 7
    %v240 = vsub.s32 0, %v239
    %v241 = vrot.slane %v236, %v240
    %v251 = vunpack.c.l.b16 %v228
    %v252 = vunpack.c.l.b16 %v229
    %v253 = vunpack.c.l.b16 %v230
    %v254 = vunpack.c.l.b16 %v231
    %v255 = vunpack.c.l.b16 %v232
    %v256 = vunpack.c.l.b16 %v233
    %v257 = vunpack.c.l.b16 %v234
    %v258 = vunpack.c.l.b16 %v235
    %v259 = vpack.c.b16 %v252, %v251
    %v260 = vpack.c.b16 %v254, %v253
    %v261 = vpack.c.b16 %v256, %v255
    %v262 = vpack.c.b16 %v258, %v257
    %v268 = vsel %vm182, %v227, 0
    %270 = vmatprep.subr.bf16.mxu0 0
    %271 = vmatpush1.bf16.msra.mxu0 %v259
    %272 = vmatprep.subr.bf16.mxu0 0
    %273 = vmatpush1.bf16.msra.mxu0 %v260
    %274 = vmatprep.subr.bf16.mxu0 0
    %275 = vmatpush1.bf16.msra.mxu0 %v261
    %276 = vmatprep.subr.bf16.mxu0 0
    %277 = vmatpush1.bf16.msra.mxu0 %v262
    %278 = vmatprep.subr.bf16.mxu0 0
    %279 = vmatpush1.bf16.msra.mxu0 0
    %280 = vmatprep.subr.bf16.mxu0 0
    %281 = vmatpush1.bf16.msra.mxu0 0
    %282 = vmatprep.subr.bf16.mxu0 0
    %283 = vmatpush1.bf16.msra.mxu0 0
    %284 = vmatprep.subr.bf16.mxu0 0
    %285 = vmatpush1.bf16.msra.mxu0 0
    %286 = vmatprep.subr.bf16.mxu0 0
    %287 = vmatpush1.bf16.msra.mxu0 0
    %288 = vmatprep.subr.bf16.mxu0 0
    %289 = vmatpush1.bf16.msra.mxu0 0
    %290 = vmatprep.subr.bf16.mxu0 0
    %291 = vmatpush1.bf16.msra.mxu0 0
    %292 = vmatprep.subr.bf16.mxu0 0
    %293 = vmatpush1.bf16.msra.mxu0 0
    %294 = vmatprep.subr.bf16.mxu0 0
    %295 = vmatpush1.bf16.msra.mxu0 0
    %296 = vmatprep.subr.bf16.mxu0 0
    %297 = vmatpush1.bf16.msra.mxu0 0
    %298 = vmatprep.subr.bf16.mxu0 0
    %299 = vmatpush1.bf16.msra.mxu0 0
    %300 = vmatprep.subr.bf16.mxu0 0
    %301 = vmatpush1.bf16.msra.mxu0 0
    %302 = vmatprep.mubr.bf16.mxu0 0
    %303 = vmatmul.mubr.bf16.gmra.mrb[0].mxu0 %v268
    %v304 = vpop.f32.mrb[0].mxu0
    %v305 = vadd.f32 %v241, %v304
    %v306 = vpop.f32.mrb[0].mxu0
    %v307 = vpop.f32.mrb[0].mxu0
    %v308 = vpop.f32.mrb[0].mxu0
    %309 = vdwg.mxu0
    %vm310 = vcmask 74752
    %311 = vst.msk [vmem:[#allocation2] sm:$0x3] %vm310, %v305
    // Predicated region
    $region30: #{x_vector_forward.11} parent=1 // pred_check
      _
    $region31: #{x_vector_forward.11} parent=1 // pred_check_branch
      %313 = sbr.rel (0) target = $region33
    $region32: #{x_vector_forward.11} parent=1 // pred_region
      %s315 = ssub.s32 32, 32
      %316 = vsyncadd [#allocation3], %s315
      %s318 = sshll.u32 [#allocation2], 4
      %s319 = int_to_ptr.vmem [resolvable:$true] %s318
      %321 = dma.vmem_to_hbm [thread:$0]  %s319, 32, %s7, [#allocation3]
    $region33: #{x_vector_forward.11} parent=1 // pred_fallthru
      _
    // Predicated region
    $region34: #{x_vector_forward.11} parent=1 // pred_check
      _
    $region35: #{x_vector_forward.11} parent=1 // pred_check_branch
      %323 = sbr.rel (0) target = $region37
    $region36: #{x_vector_forward.11} parent=1 // pred_region
      %324 = dma.done [#allocation3], 32
    $region37: #{x_vector_forward.11} parent=1 // pred_fallthru
      _
    %325 = vsyncpa [#allocation3], 1

</llo_original>
